<compile_context>
chip_gen: v6e
topology: v6e:2x2x1
jax: 0.10.0
libtpu: 0.0.40
codegen_flags: <defaults>
</compile_context>

<pallas_src>
import functools

import jax
import jax.numpy as jnp
from jax import lax
from jax.experimental import pallas as pl
from jax.experimental.pallas import tpu as pltpu


MXU_WEIGHT_DTYPE = jnp.bfloat16   # matmul-operand dtype; accumulation is always f32


# ----------------------------- in-kernel helpers -----------------------------

def _silu(x):
    # x * sigmoid(x); logistic lowers to the EUP slot.
    return x * jax.nn.sigmoid(x)


def _softplus(x):
    # matches torch.nn.Softplus(beta=1, threshold=20)
    return jnp.where(x > 20.0, x, jnp.log(1.0 + jnp.exp(jnp.minimum(x, 20.0))))


def _mxu(a, w):
    """MXU matmul: operands cast to the weight dtype, f32 accumulation."""
    return jnp.dot(a.astype(w.dtype), w, preferred_element_type=jnp.float32)


# --------------------------------- the kernel --------------------------------

def _vim_block_kernel(
    # inputs
    x_ref,
    gamma_ref, beta_ref, wl_ref, bl_ref, wzfb_ref, bzfb_ref,
    win_f_ref, cw_f_ref, cb_f_ref, wxp_f_ref, wdt_f_ref, bdt_f_ref,
    alog_f_ref, dp_f_ref, wo_f_ref,
    win_b_ref, cw_b_ref, cb_b_ref, wxp_b_ref, wdt_b_ref, bdt_b_ref,
    alog_b_ref, dp_b_ref, wo_b_ref,
    # output
    out_ref,
    # scratch
    dA_f, dA_b, dBx_f, dBx_b, hs_f, hs_b,
    *, d_inner, d_state, dt_rank, d_conv, scan_unroll):
    f32 = jnp.float32
    Bt, L, D = x_ref.shape
    M = Bt * L
    S = d_state
    N = d_inner

    # S x S identity (iota compare) used to move lane-resident (., S) vectors
    # onto sublanes via broadcast-multiply + lane reduce (VPU + XLU only).
    eye_s = (lax.broadcasted_iota(jnp.int32, (S, S), 0)
             == lax.broadcasted_iota(jnp.int32, (S, S), 1)).astype(f32)

    def lanes_to_sublanes(v):            # (M, S) -> (Bt, L, S, 1)
        v4 = v.reshape(Bt, L, 1, S)
        return jnp.sum(v4 * eye_s, axis=-1, keepdims=True)

    x = x_ref[...].astype(f32).reshape(M, D)   # fold batch block into matmul M
    skip = x

    # ---------------- LayerNorm (eps=1e-5, elementwise affine) ----------------
    mean = jnp.mean(x, axis=-1, keepdims=True)
    var = jnp.mean((x - mean) ** 2, axis=-1, keepdims=True)
    xn = (x - mean) * lax.rsqrt(var + 1e-5)
    xn = xn * gamma_ref[...] + beta_ref[...]

    # ---------------- x1 = linear(norm(x)); fused [z | conv_f | conv_b] -------
    x1 = _mxu(xn, wl_ref[...]) + bl_ref[...]
    zcc = _mxu(x1, wzfb_ref[...]) + bzfb_ref[...]
    z = _silu(zcc[:, 0 * D:1 * D])       # z = silu(linear(x1))   (same Linear, per spec)
    uf = _silu(zcc[:, 1 * D:2 * D])      # silu(forwardConv1d(x1))  (1x1 conv)
    ub = _silu(zcc[:, 2 * D:3 * D])      # silu(backwardConv1d(x1)) (1x1 conv)

    # --------------- per-branch Mamba pre-scan projections ---------------
    def prep(u, win_ref, cw_ref, cb_ref, wxp_ref, wdt_ref, bdt_ref, alog_ref,
             dA_scr, dBx_scr):
        # fused in_proj: [x | z] -> (M, 2*d_inner)
        xz = _mxu(u, win_ref[...])
        xm = xz[:, :N]
        zm = xz[:, N:]

        # causal depthwise conv1d: value-resident static shifts (no scratch)
        xm3 = xm.reshape(Bt, L, N)
        cw = cw_ref[...]
        acc = cw[d_conv - 1:d_conv, :] * xm3
        for k in range(1, d_conv):
            shifted = jnp.concatenate(
                [jnp.zeros((Bt, k, N), f32), xm3[:, :L - k, :]], axis=1)
            acc = acc + cw[d_conv - 1 - k:d_conv - k, :] * shifted
        xc = _silu(acc + cb_ref[...]).reshape(M, N)

        # fused x_proj: [dt | B | C], then dt_proj + softplus
        dtbc = _mxu(xc, wxp_ref[...])
        dt_in = dtbc[:, :dt_rank]
        Bm = dtbc[:, dt_rank:dt_rank + S]
        Cm = dtbc[:, dt_rank + S:]
        delta = _softplus(_mxu(dt_in, wdt_ref[...]) + bdt_ref[...])   # (M, N)

        # hoisted scan tensors for ALL tokens (EUP exp and B(x)(dt*x) off the
        # token-serial dependence chain), staged in VMEM scratch.
        A = -jnp.exp(alog_ref[...])                                   # (S, N)
        d4 = delta.reshape(Bt, L, 1, N)
        dA_scr[...] = jnp.exp(d4 * A).reshape(Bt, L * S, N)
        dx4 = (delta * xc).reshape(Bt, L, 1, N)
        b_col = lanes_to_sublanes(Bm)                                 # (Bt,L,S,1)
        dBx_scr[...] = (b_col * dx4).reshape(Bt, L * S, N)
        return xc, zm, Cm

    xc_f, zm_f, C_f = prep(uf, win_f_ref, cw_f_ref, cb_f_ref, wxp_f_ref,
                           wdt_f_ref, bdt_f_ref, alog_f_ref, dA_f, dBx_f)
    xc_b, zm_b, C_b = prep(ub, win_b_ref, cw_b_ref, cb_b_ref, wxp_b_ref,
                           wdt_b_ref, bdt_b_ref, alog_b_ref, dA_b, dBx_b)

    # ------------- token-serial recurrence only (both branches interleaved) ----
    #   h_t = dA_t * h_{t-1} + dBx_t     (pure VPU mul/add per step)
    def step(t, carry):
        h_f, h_b = carry
        off = pl.multiple_of(t * S, S)
        h_f = dA_f[:, pl.ds(off, S), :] * h_f + dBx_f[:, pl.ds(off, S), :]
        hs_f[:, pl.ds(off, S), :] = h_f
        h_b = dA_b[:, pl.ds(off, S), :] * h_b + dBx_b[:, pl.ds(off, S), :]
        hs_b[:, pl.ds(off, S), :] = h_b
        return (h_f, h_b)

    h0 = jnp.zeros((Bt, S, N), f32)
    lax.fori_loop(0, L, step, (h0, h0), unroll=scan_unroll)

    # ------------- vectorized epilogue: y = C.h, +D*x, z-gate, out_proj -------
    def tail(Cm, hs_scr, xc, zm, dp_ref, wo_ref):
        H = hs_scr[...].reshape(Bt, L, S, N)
        c_col = lanes_to_sublanes(Cm)                                 # (Bt,L,S,1)
        y = jnp.sum(c_col * H, axis=2).reshape(M, N)                  # VPU + XLU
        y = (y + dp_ref[...] * xc) * _silu(zm)
        return _mxu(y, wo_ref[...])

    ysum = (tail(C_f, hs_f, xc_f, zm_f, dp_f_ref, wo_f_ref)
            + tail(C_b, hs_b, xc_b, zm_b, dp_b_ref, wo_b_ref))

    out = ysum * z + skip
    out_ref[...] = out.reshape(Bt, L, D).astype(out_ref.dtype)


# --------------------------------- host glue ----------------------------------

def init_params(key, input_dim, state_dim, d_conv):
    """Deterministic synthetic parameters, host-fused for wide MXU matmuls."""
    D = input_dim
    d_inner = 2 * D                      # Mamba default expand = 2
    dt_rank = -(-D // 16)                # ceil(d_model / 16)
    keys = jax.random.split(key, 64)
    kit = iter(keys)

    def nrm(shape, scale=0.1):
        return (scale * jax.random.normal(next(kit), shape)).astype(jnp.float32)

    gamma = jnp.ones((1, D), jnp.float32)
    beta = jnp.zeros((1, D), jnp.float32)
    wl, bl = nrm((D, D)), nrm((1, D))
    wcf, bcf = nrm((D, D)), nrm((1, D))       # forwardConv1d (kernel_size=1)
    wcb, bcb = nrm((D, D)), nrm((1, D))       # backwardConv1d (kernel_size=1)

    # fused second-stage projection: [wl | wcf | wcb]  (z reuses the same Linear)
    w_zfb = jnp.concatenate([wl, wcf, wcb], axis=1)       # (D, 3D)
    b_zfb = jnp.concatenate([bl, bcf, bcb], axis=1)       # (1, 3D)

    def mamba_branch():
        wi_x, wi_z = nrm((D, d_inner)), nrm((D, d_inner))
        cw = nrm((d_conv, d_inner))                        # depthwise conv taps (k, ch)
        cb = nrm((1, d_inner))
        wx_dt = nrm((d_inner, dt_rank))
        wx_B = nrm((d_inner, state_dim))
        wx_C = nrm((d_inner, state_dim))
        wdt = nrm((dt_rank, d_inner))
        bdt = nrm((1, d_inner))
        alog_t = (jnp.log(jnp.arange(1, state_dim + 1, dtype=jnp.float32))[:, None]
                  * jnp.ones((1, d_inner), jnp.float32))   # A_log stored (d_state, d_inner)
        dp = jnp.ones((1, d_inner), jnp.float32)
        wo = nrm((d_inner, D))
        w_in = jnp.concatenate([wi_x, wi_z], axis=1)                 # (D, 2*d_inner)
        w_xp = jnp.concatenate([wx_dt, wx_B, wx_C], axis=1)          # (d_inner, r+2S)
        return [w_in.astype(MXU_WEIGHT_DTYPE), cw, cb,
                w_xp.astype(MXU_WEIGHT_DTYPE),
                wdt.astype(MXU_WEIGHT_DTYPE), bdt, alog_t, dp,
                wo.astype(MXU_WEIGHT_DTYPE)]

    params = [gamma, beta,
              wl.astype(MXU_WEIGHT_DTYPE), bl,
              w_zfb.astype(MXU_WEIGHT_DTYPE), b_zfb]
    params += mamba_branch()     # forward SSM
    params += mamba_branch()     # backward SSM (same token order as the PyTorch spec)
    return params


def _const_index_map(nd):
    return lambda b: (0,) * nd


def _pick_block_b(batch, seq_len):
    """Fatten matmul M (aim >=256 rows / step) but keep >=2 grid steps when possible."""
    bt = max(1, min(batch, 256 // max(seq_len, 1)))
    if batch >= 2:
        bt = max(1, min(bt, batch // 2))   # keep both v7x TensorCores busy
    while batch % bt != 0:
        bt -= 1
    return bt


def _cost_estimate(B, L, D, d_inner, d_state, dt_rank):
    m = B * L
    proj = 2 * m * (D * D + D * 3 * D) + 2 * 2 * m * (
        D * 2 * d_inner + d_inner * (dt_rank + 2 * d_state)
        + dt_rank * d_inner + d_inner * D)
    scan = 2 * 2 * m * d_state * d_inner * 4     # dA/dBx build + recurrence + C.h
    flops = proj + scan
    trans = (3 * m * D                           # silu(z / conv_f / conv_b)
             + 2 * m * d_inner * 3               # conv silu, softplus, gate silu
             + 2 * m * d_state * d_inner)        # exp(dt * A)
    pbytes = 4 * (2 * D + D * D + D + 3 * D * D + 3 * D) + 2 * 4 * (
        D * 2 * d_inner + 6 * d_inner + d_inner * (dt_rank + 2 * d_state)
        + dt_rank * d_inner + d_state * d_inner + d_inner * D)
    bytes_accessed = 4 * 2 * B * L * D + pbytes
    return pl.CostEstimate(flops=int(flops), transcendentals=int(trans),
                           bytes_accessed=int(bytes_accessed))


def vision_mamba_encoder_block(x, params, *, state_dim, d_conv, block_b=None):
    B, L, D = x.shape
    d_inner = 2 * D
    dt_rank = -(-D // 16)
    if block_b is None:
        block_b = _pick_block_b(B, L)
    assert B % block_b == 0
    scan_unroll = True if L <= 32 else 8

    kernel = functools.partial(
        _vim_block_kernel, d_inner=d_inner, d_state=state_dim,
        dt_rank=dt_rank, d_conv=d_conv, scan_unroll=scan_unroll)

    in_specs = [pl.BlockSpec((block_b, L, D), lambda b: (b, 0, 0))]
    in_specs += [pl.BlockSpec(p.shape, _const_index_map(p.ndim)) for p in params]
    out_spec = pl.BlockSpec((block_b, L, D), lambda b: (b, 0, 0))

    # dA_all / dBx_all / h history, per branch; read with aligned pl.ds rows.
    scan_buf = pltpu.VMEM((block_b, L * state_dim, d_inner), jnp.float32)
    scratch_shapes = [scan_buf] * 6

    return pl.pallas_call(
        kernel,
        out_shape=jax.ShapeDtypeStruct((B, L, D), x.dtype),
        grid_spec=pltpu.PrefetchScalarGridSpec(
            num_scalar_prefetch=0,
            grid=(B // block_b,),
            in_specs=in_specs,
            out_specs=out_spec,
            scratch_shapes=scratch_shapes,
        ),
        # batch blocks are independent -> shard across v7x's two TensorCores
        compiler_params=pltpu.CompilerParams(dimension_semantics=("parallel",)),
        cost_estimate=_cost_estimate(B, L, D, d_inner, state_dim, dt_rank),
    )(x, *params)


if __name__ == "__main__":
    B, L, D = 2, 8, 32           # batch, tokens, input_dim
    state_dim, d_conv = 16, 4

    key = jax.random.PRNGKey(0)
    kx, kp = jax.random.split(key)
    x = jax.random.normal(kx, (B, L, D), dtype=jnp.float32)
    params = init_params(kp, D, state_dim, d_conv)

    out = vision_mamba_encoder_block(x, params, state_dim=state_dim, d_conv=d_conv)
    out = jax.block_until_ready(out)

    assert out.shape == (B, L, D)
    assert bool(jnp.all(jnp.isfinite(out)))
    print("KERNEL_OK")
</pallas_src>

<mosaic_0001>
module attributes {stable_mosaic.version = 11 : i64} {
  func.func @_vim_block_kernel(%arg0: i32, %arg1: memref<1x8x32xf32, #tpu.memory_space<vmem>>, %arg2: memref<1x32xf32, #tpu.memory_space<vmem>>, %arg3: memref<1x32xf32, #tpu.memory_space<vmem>>, %arg4: memref<32x32xbf16, #tpu.memory_space<vmem>>, %arg5: memref<1x32xf32, #tpu.memory_space<vmem>>, %arg6: memref<32x96xbf16, #tpu.memory_space<vmem>>, %arg7: memref<1x96xf32, #tpu.memory_space<vmem>>, %arg8: memref<32x128xbf16, #tpu.memory_space<vmem>>, %arg9: memref<4x64xf32, #tpu.memory_space<vmem>>, %arg10: memref<1x64xf32, #tpu.memory_space<vmem>>, %arg11: memref<64x34xbf16, #tpu.memory_space<vmem>>, %arg12: memref<2x64xbf16, #tpu.memory_space<vmem>>, %arg13: memref<1x64xf32, #tpu.memory_space<vmem>>, %arg14: memref<16x64xf32, #tpu.memory_space<vmem>>, %arg15: memref<1x64xf32, #tpu.memory_space<vmem>>, %arg16: memref<64x32xbf16, #tpu.memory_space<vmem>>, %arg17: memref<32x128xbf16, #tpu.memory_space<vmem>>, %arg18: memref<4x64xf32, #tpu.memory_space<vmem>>, %arg19: memref<1x64xf32, #tpu.memory_space<vmem>>, %arg20: memref<64x34xbf16, #tpu.memory_space<vmem>>, %arg21: memref<2x64xbf16, #tpu.memory_space<vmem>>, %arg22: memref<1x64xf32, #tpu.memory_space<vmem>>, %arg23: memref<16x64xf32, #tpu.memory_space<vmem>>, %arg24: memref<1x64xf32, #tpu.memory_space<vmem>>, %arg25: memref<64x32xbf16, #tpu.memory_space<vmem>>, %arg26: memref<1x8x32xf32, #tpu.memory_space<vmem>>, %arg27: memref<1x128x64xf32, #tpu.memory_space<vmem>>, %arg28: memref<1x128x64xf32, #tpu.memory_space<vmem>>, %arg29: memref<1x128x64xf32, #tpu.memory_space<vmem>>, %arg30: memref<1x128x64xf32, #tpu.memory_space<vmem>>, %arg31: memref<1x128x64xf32, #tpu.memory_space<vmem>>, %arg32: memref<1x128x64xf32, #tpu.memory_space<vmem>>) attributes {dimension_semantics = [#tpu.dimension_semantics<parallel>], iteration_bounds = array<i64: 2>, scalar_prefetch = 0 : i64, scratch_operands = 6 : i64, tpu.core_type = #tpu.core_type<tc>, window_params = [{transform_indices = @transform_0, window_bounds = array<i64: 1, 8, 32>}, {pipeline_mode = #tpu.pipeline_mode<synchronous>, transform_indices = @transform_1, window_bounds = array<i64: 1, 32>}, {pipeline_mode = #tpu.pipeline_mode<synchronous>, transform_indices = @transform_2, window_bounds = array<i64: 1, 32>}, {pipeline_mode = #tpu.pipeline_mode<synchronous>, transform_indices = @transform_3, window_bounds = array<i64: 32, 32>}, {pipeline_mode = #tpu.pipeline_mode<synchronous>, transform_indices = @transform_4, window_bounds = array<i64: 1, 32>}, {pipeline_mode = #tpu.pipeline_mode<synchronous>, transform_indices = @transform_5, window_bounds = array<i64: 32, 96>}, {pipeline_mode = #tpu.pipeline_mode<synchronous>, transform_indices = @transform_6, window_bounds = array<i64: 1, 96>}, {pipeline_mode = #tpu.pipeline_mode<synchronous>, transform_indices = @transform_7, window_bounds = array<i64: 32, 128>}, {pipeline_mode = #tpu.pipeline_mode<synchronous>, transform_indices = @transform_8, window_bounds = array<i64: 4, 64>}, {pipeline_mode = #tpu.pipeline_mode<synchronous>, transform_indices = @transform_9, window_bounds = array<i64: 1, 64>}, {pipeline_mode = #tpu.pipeline_mode<synchronous>, transform_indices = @transform_10, window_bounds = array<i64: 64, 34>}, {pipeline_mode = #tpu.pipeline_mode<synchronous>, transform_indices = @transform_11, window_bounds = array<i64: 2, 64>}, {pipeline_mode = #tpu.pipeline_mode<synchronous>, transform_indices = @transform_12, window_bounds = array<i64: 1, 64>}, {pipeline_mode = #tpu.pipeline_mode<synchronous>, transform_indices = @transform_13, window_bounds = array<i64: 16, 64>}, {pipeline_mode = #tpu.pipeline_mode<synchronous>, transform_indices = @transform_14, window_bounds = array<i64: 1, 64>}, {pipeline_mode = #tpu.pipeline_mode<synchronous>, transform_indices = @transform_15, window_bounds = array<i64: 64, 32>}, {pipeline_mode = #tpu.pipeline_mode<synchronous>, transform_indices = @transform_16, window_bounds = array<i64: 32, 128>}, {pipeline_mode = #tpu.pipeline_mode<synchronous>, transform_indices = @transform_17, window_bounds = array<i64: 4, 64>}, {pipeline_mode = #tpu.pipeline_mode<synchronous>, transform_indices = @transform_18, window_bounds = array<i64: 1, 64>}, {pipeline_mode = #tpu.pipeline_mode<synchronous>, transform_indices = @transform_19, window_bounds = array<i64: 64, 34>}, {pipeline_mode = #tpu.pipeline_mode<synchronous>, transform_indices = @transform_20, window_bounds = array<i64: 2, 64>}, {pipeline_mode = #tpu.pipeline_mode<synchronous>, transform_indices = @transform_21, window_bounds = array<i64: 1, 64>}, {pipeline_mode = #tpu.pipeline_mode<synchronous>, transform_indices = @transform_22, window_bounds = array<i64: 16, 64>}, {pipeline_mode = #tpu.pipeline_mode<synchronous>, transform_indices = @transform_23, window_bounds = array<i64: 1, 64>}, {pipeline_mode = #tpu.pipeline_mode<synchronous>, transform_indices = @transform_24, window_bounds = array<i64: 64, 32>}, {transform_indices = @transform_25, window_bounds = array<i64: 1, 8, 32>}]} {
    %0 = tpu.iota {dimensions = array<i32: 0>} : vector<16x16xi32>
    %1 = tpu.iota {dimensions = array<i32: 1>} : vector<16x16xi32>
    %2 = arith.cmpi eq, %0, %1 : vector<16x16xi32>
    %3 = arith.extui %2 : vector<16x16xi1> to vector<16x16xi32>
    %4 = arith.sitofp %3 : vector<16x16xi32> to vector<16x16xf32>
    %c0 = arith.constant 0 : index
    %c0_0 = arith.constant 0 : index
    %c0_1 = arith.constant 0 : index
    %5 = vector.load %arg1[%c0, %c0_0, %c0_1] : memref<1x8x32xf32, #tpu.memory_space<vmem>>, vector<1x8x32xf32>
    %6 = vector.shape_cast %5 : vector<1x8x32xf32> to vector<8x32xf32>
    %cst = arith.constant dense<0.000000e+00> : vector<8xf32>
    %7 = vector.multi_reduction <add>, %6, %cst [1] : vector<8x32xf32> to vector<8xf32>
    %8 = vector.shape_cast %7 : vector<8xf32> to vector<8x1xf32>
    %cst_2 = arith.constant 3.200000e+01 : f32
    %9 = vector.broadcast %cst_2 : f32 to vector<8x1xf32>
    %10 = arith.divf %8, %9 : vector<8x1xf32>
    %11 = vector.broadcast %10 : vector<8x1xf32> to vector<8x32xf32>
    %12 = arith.subf %6, %11 : vector<8x32xf32>
    %13 = arith.mulf %12, %12 : vector<8x32xf32>
    %cst_3 = arith.constant dense<0.000000e+00> : vector<8xf32>
    %14 = vector.multi_reduction <add>, %13, %cst_3 [1] : vector<8x32xf32> to vector<8xf32>
    %15 = vector.shape_cast %14 : vector<8xf32> to vector<8x1xf32>
    %cst_4 = arith.constant 3.200000e+01 : f32
    %16 = vector.broadcast %cst_4 : f32 to vector<8x1xf32>
    %17 = arith.divf %15, %16 : vector<8x1xf32>
    %18 = vector.broadcast %10 : vector<8x1xf32> to vector<8x32xf32>
    %19 = arith.subf %6, %18 : vector<8x32xf32>
    %cst_5 = arith.constant 9.99999974E-6 : f32
    %20 = vector.broadcast %cst_5 : f32 to vector<8x1xf32>
    %21 = arith.addf %17, %20 : vector<8x1xf32>
    %22 = math.rsqrt %21 : vector<8x1xf32>
    %23 = vector.broadcast %22 : vector<8x1xf32> to vector<8x32xf32>
    %24 = arith.mulf %19, %23 : vector<8x32xf32>
    %c0_6 = arith.constant 0 : index
    %c0_7 = arith.constant 0 : index
    %25 = vector.load %arg2[%c0_6, %c0_7] : memref<1x32xf32, #tpu.memory_space<vmem>>, vector<1x32xf32>
    %26 = vector.broadcast %25 : vector<1x32xf32> to vector<8x32xf32>
    %27 = arith.mulf %24, %26 : vector<8x32xf32>
    %c0_8 = arith.constant 0 : index
    %c0_9 = arith.constant 0 : index
    %28 = vector.load %arg3[%c0_8, %c0_9] : memref<1x32xf32, #tpu.memory_space<vmem>>, vector<1x32xf32>
    %29 = vector.broadcast %28 : vector<1x32xf32> to vector<8x32xf32>
    %30 = arith.addf %27, %29 : vector<8x32xf32>
    %c0_10 = arith.constant 0 : index
    %c0_11 = arith.constant 0 : index
    %31 = vector.load %arg4[%c0_10, %c0_11] : memref<32x32xbf16, #tpu.memory_space<vmem>>, vector<32x32xbf16>
    %32 = arith.truncf %30 : vector<8x32xf32> to vector<8x32xbf16>
    %cst_12 = arith.constant dense<0.000000e+00> : vector<8x32xf32>
    %33 = tpu.matmul %32, %31, %cst_12 {dimension_numbers = #tpu.dot_dimension_numbers<[1], [0], [0], [1], [0, 0, 1, 1], [], []>} : vector<8x32xbf16>, vector<32x32xbf16>, vector<8x32xf32> -> vector<8x32xf32>
    %c0_13 = arith.constant 0 : index
    %c0_14 = arith.constant 0 : index
    %34 = vector.load %arg5[%c0_13, %c0_14] : memref<1x32xf32, #tpu.memory_space<vmem>>, vector<1x32xf32>
    %35 = vector.broadcast %34 : vector<1x32xf32> to vector<8x32xf32>
    %36 = arith.addf %33, %35 : vector<8x32xf32>
    %c0_15 = arith.constant 0 : index
    %c0_16 = arith.constant 0 : index
    %37 = vector.load %arg6[%c0_15, %c0_16] : memref<32x96xbf16, #tpu.memory_space<vmem>>, vector<32x96xbf16>
    %38 = arith.truncf %36 : vector<8x32xf32> to vector<8x32xbf16>
    %cst_17 = arith.constant dense<0.000000e+00> : vector<8x96xf32>
    %39 = tpu.matmul %38, %37, %cst_17 {dimension_numbers = #tpu.dot_dimension_numbers<[1], [0], [0], [1], [0, 0, 1, 1], [], []>} : vector<8x32xbf16>, vector<32x96xbf16>, vector<8x96xf32> -> vector<8x96xf32>
    %c0_18 = arith.constant 0 : index
    %c0_19 = arith.constant 0 : index
    %40 = vector.load %arg7[%c0_18, %c0_19] : memref<1x96xf32, #tpu.memory_space<vmem>>, vector<1x96xf32>
    %41 = vector.broadcast %40 : vector<1x96xf32> to vector<8x96xf32>
    %42 = arith.addf %39, %41 : vector<8x96xf32>
    %43 = vector.extract_strided_slice %42 {offsets = [0, 0], sizes = [8, 32], strides = [1, 1]} : vector<8x96xf32> to vector<8x32xf32>
    %44 = arith.negf %43 : vector<8x32xf32>
    %45 = math.exp %44 : vector<8x32xf32>
    %cst_20 = arith.constant 1.000000e+00 : f32
    %46 = vector.broadcast %cst_20 : f32 to vector<8x32xf32>
    %47 = arith.addf %46, %45 : vector<8x32xf32>
    %48 = arith.divf %46, %47 : vector<8x32xf32>
    %49 = arith.mulf %43, %48 : vector<8x32xf32>
    %50 = vector.extract_strided_slice %42 {offsets = [0, 32], sizes = [8, 32], strides = [1, 1]} : vector<8x96xf32> to vector<8x32xf32>
    %51 = arith.negf %50 : vector<8x32xf32>
    %52 = math.exp %51 : vector<8x32xf32>
    %cst_21 = arith.constant 1.000000e+00 : f32
    %53 = vector.broadcast %cst_21 : f32 to vector<8x32xf32>
    %54 = arith.addf %53, %52 : vector<8x32xf32>
    %55 = arith.divf %53, %54 : vector<8x32xf32>
    %56 = arith.mulf %50, %55 : vector<8x32xf32>
    %57 = vector.extract_strided_slice %42 {offsets = [0, 64], sizes = [8, 32], strides = [1, 1]} : vector<8x96xf32> to vector<8x32xf32>
    %58 = arith.negf %57 : vector<8x32xf32>
    %59 = math.exp %58 : vector<8x32xf32>
    %cst_22 = arith.constant 1.000000e+00 : f32
    %60 = vector.broadcast %cst_22 : f32 to vector<8x32xf32>
    %61 = arith.addf %60, %59 : vector<8x32xf32>
    %62 = arith.divf %60, %61 : vector<8x32xf32>
    %63 = arith.mulf %57, %62 : vector<8x32xf32>
    %c0_23 = arith.constant 0 : index
    %c0_24 = arith.constant 0 : index
    %64 = vector.load %arg8[%c0_23, %c0_24] : memref<32x128xbf16, #tpu.memory_space<vmem>>, vector<32x128xbf16>
    %65 = arith.truncf %56 : vector<8x32xf32> to vector<8x32xbf16>
    %cst_25 = arith.constant dense<0.000000e+00> : vector<8x128xf32>
    %66 = tpu.matmul %65, %64, %cst_25 {dimension_numbers = #tpu.dot_dimension_numbers<[1], [0], [0], [1], [0, 0, 1, 1], [], []>} : vector<8x32xbf16>, vector<32x128xbf16>, vector<8x128xf32> -> vector<8x128xf32>
    %67 = vector.extract_strided_slice %66 {offsets = [0, 0], sizes = [8, 64], strides = [1, 1]} : vector<8x128xf32> to vector<8x64xf32>
    %68 = vector.extract_strided_slice %66 {offsets = [0, 64], sizes = [8, 64], strides = [1, 1]} : vector<8x128xf32> to vector<8x64xf32>
    %69 = vector.shape_cast %67 : vector<8x64xf32> to vector<1x8x64xf32>
    %c0_26 = arith.constant 0 : index
    %c0_27 = arith.constant 0 : index
    %70 = vector.load %arg9[%c0_26, %c0_27] : memref<4x64xf32, #tpu.memory_space<vmem>>, vector<4x64xf32>
    %71 = vector.extract_strided_slice %70 {offsets = [3, 0], sizes = [1, 64], strides = [1, 1]} : vector<4x64xf32> to vector<1x64xf32>
    %72 = vector.shape_cast %71 : vector<1x64xf32> to vector<1x1x64xf32>
    %73 = vector.broadcast %72 : vector<1x1x64xf32> to vector<1x8x64xf32>
    %74 = arith.mulf %73, %69 : vector<1x8x64xf32>
    %cst_28 = arith.constant 0.000000e+00 : f32
    %75 = vector.broadcast %cst_28 : f32 to vector<1x1x64xf32>
    %76 = vector.extract_strided_slice %69 {offsets = [0, 0, 0], sizes = [1, 7, 64], strides = [1, 1, 1]} : vector<1x8x64xf32> to vector<1x7x64xf32>
    %77 = tpu.concatenate %75, %76 in 1 : vector<1x1x64xf32>, vector<1x7x64xf32> -> vector<1x8x64xf32>
    %78 = vector.extract_strided_slice %70 {offsets = [2, 0], sizes = [1, 64], strides = [1, 1]} : vector<4x64xf32> to vector<1x64xf32>
    %79 = vector.shape_cast %78 : vector<1x64xf32> to vector<1x1x64xf32>
    %80 = vector.broadcast %79 : vector<1x1x64xf32> to vector<1x8x64xf32>
    %81 = arith.mulf %80, %77 : vector<1x8x64xf32>
    %82 = arith.addf %74, %81 : vector<1x8x64xf32>
    %cst_29 = arith.constant 0.000000e+00 : f32
    %83 = vector.broadcast %cst_29 : f32 to vector<1x2x64xf32>
    %84 = vector.extract_strided_slice %69 {offsets = [0, 0, 0], sizes = [1, 6, 64], strides = [1, 1, 1]} : vector<1x8x64xf32> to vector<1x6x64xf32>
    %85 = tpu.concatenate %83, %84 in 1 : vector<1x2x64xf32>, vector<1x6x64xf32> -> vector<1x8x64xf32>
    %86 = vector.extract_strided_slice %70 {offsets = [1, 0], sizes = [1, 64], strides = [1, 1]} : vector<4x64xf32> to vector<1x64xf32>
    %87 = vector.shape_cast %86 : vector<1x64xf32> to vector<1x1x64xf32>
    %88 = vector.broadcast %87 : vector<1x1x64xf32> to vector<1x8x64xf32>
    %89 = arith.mulf %88, %85 : vector<1x8x64xf32>
    %90 = arith.addf %82, %89 : vector<1x8x64xf32>
    %cst_30 = arith.constant 0.000000e+00 : f32
    %91 = vector.broadcast %cst_30 : f32 to vector<1x3x64xf32>
    %92 = vector.extract_strided_slice %69 {offsets = [0, 0, 0], sizes = [1, 5, 64], strides = [1, 1, 1]} : vector<1x8x64xf32> to vector<1x5x64xf32>
    %93 = tpu.concatenate %91, %92 in 1 : vector<1x3x64xf32>, vector<1x5x64xf32> -> vector<1x8x64xf32>
    %94 = vector.extract_strided_slice %70 {offsets = [0, 0], sizes = [1, 64], strides = [1, 1]} : vector<4x64xf32> to vector<1x64xf32>
    %95 = vector.shape_cast %94 : vector<1x64xf32> to vector<1x1x64xf32>
    %96 = vector.broadcast %95 : vector<1x1x64xf32> to vector<1x8x64xf32>
    %97 = arith.mulf %96, %93 : vector<1x8x64xf32>
    %98 = arith.addf %90, %97 : vector<1x8x64xf32>
    %c0_31 = arith.constant 0 : index
    %c0_32 = arith.constant 0 : index
    %99 = vector.load %arg10[%c0_31, %c0_32] : memref<1x64xf32, #tpu.memory_space<vmem>>, vector<1x64xf32>
    %100 = vector.shape_cast %99 : vector<1x64xf32> to vector<1x1x64xf32>
    %101 = vector.broadcast %100 : vector<1x1x64xf32> to vector<1x8x64xf32>
    %102 = arith.addf %98, %101 : vector<1x8x64xf32>
    %103 = arith.negf %102 : vector<1x8x64xf32>
    %104 = math.exp %103 : vector<1x8x64xf32>
    %cst_33 = arith.constant 1.000000e+00 : f32
    %105 = vector.broadcast %cst_33 : f32 to vector<1x8x64xf32>
    %106 = arith.addf %105, %104 : vector<1x8x64xf32>
    %107 = arith.divf %105, %106 : vector<1x8x64xf32>
    %108 = arith.mulf %102, %107 : vector<1x8x64xf32>
    %109 = vector.shape_cast %108 : vector<1x8x64xf32> to vector<8x64xf32>
    %c0_34 = arith.constant 0 : index
    %c0_35 = arith.constant 0 : index
    %110 = vector.load %arg11[%c0_34, %c0_35] : memref<64x34xbf16, #tpu.memory_space<vmem>>, vector<64x34xbf16>
    %111 = arith.truncf %109 : vector<8x64xf32> to vector<8x64xbf16>
    %cst_36 = arith.constant dense<0.000000e+00> : vector<8x34xf32>
    %112 = tpu.matmul %111, %110, %cst_36 {dimension_numbers = #tpu.dot_dimension_numbers<[1], [0], [0], [1], [0, 0, 1, 1], [], []>} : vector<8x64xbf16>, vector<64x34xbf16>, vector<8x34xf32> -> vector<8x34xf32>
    %113 = vector.extract_strided_slice %112 {offsets = [0, 0], sizes = [8, 2], strides = [1, 1]} : vector<8x34xf32> to vector<8x2xf32>
    %114 = vector.extract_strided_slice %112 {offsets = [0, 2], sizes = [8, 16], strides = [1, 1]} : vector<8x34xf32> to vector<8x16xf32>
    %115 = vector.extract_strided_slice %112 {offsets = [0, 18], sizes = [8, 16], strides = [1, 1]} : vector<8x34xf32> to vector<8x16xf32>
    %c0_37 = arith.constant 0 : index
    %c0_38 = arith.constant 0 : index
    %116 = vector.load %arg12[%c0_37, %c0_38] : memref<2x64xbf16, #tpu.memory_space<vmem>>, vector<2x64xbf16>
    %117 = arith.truncf %113 : vector<8x2xf32> to vector<8x2xbf16>
    %cst_39 = arith.constant dense<0.000000e+00> : vector<8x64xf32>
    %118 = tpu.matmul %117, %116, %cst_39 {dimension_numbers = #tpu.dot_dimension_numbers<[1], [0], [0], [1], [0, 0, 1, 1], [], []>} : vector<8x2xbf16>, vector<2x64xbf16>, vector<8x64xf32> -> vector<8x64xf32>
    %c0_40 = arith.constant 0 : index
    %c0_41 = arith.constant 0 : index
    %119 = vector.load %arg13[%c0_40, %c0_41] : memref<1x64xf32, #tpu.memory_space<vmem>>, vector<1x64xf32>
    %120 = vector.broadcast %119 : vector<1x64xf32> to vector<8x64xf32>
    %121 = arith.addf %118, %120 : vector<8x64xf32>
    %cst_42 = arith.constant 2.000000e+01 : f32
    %122 = vector.broadcast %cst_42 : f32 to vector<8x64xf32>
    %123 = arith.cmpf ogt, %121, %122 : vector<8x64xf32>
    %cst_43 = arith.constant 2.000000e+01 : f32
    %124 = vector.broadcast %cst_43 : f32 to vector<8x64xf32>
    %125 = arith.minimumf %121, %124 : vector<8x64xf32>
    %126 = math.exp %125 : vector<8x64xf32>
    %cst_44 = arith.constant 1.000000e+00 : f32
    %127 = vector.broadcast %cst_44 : f32 to vector<8x64xf32>
    %128 = arith.addf %127, %126 : vector<8x64xf32>
    %129 = math.log %128 : vector<8x64xf32>
    %130 = arith.select %123, %121, %129 : vector<8x64xi1>, vector<8x64xf32>
    %c0_45 = arith.constant 0 : index
    %c0_46 = arith.constant 0 : index
    %131 = vector.load %arg14[%c0_45, %c0_46] : memref<16x64xf32, #tpu.memory_space<vmem>>, vector<16x64xf32>
    %132 = math.exp %131 : vector<16x64xf32>
    %cst_47 = arith.constant 0.000000e+00 : f32
    %133 = vector.broadcast %cst_47 : f32 to vector<16x64xf32>
    %134 = arith.subf %133, %132 : vector<16x64xf32>
    %135 = vector.shape_cast %130 : vector<8x64xf32> to vector<1x8x1x64xf32>
    %136 = vector.shape_cast %134 : vector<16x64xf32> to vector<1x1x16x64xf32>
    %137 = vector.broadcast %135 : vector<1x8x1x64xf32> to vector<1x8x16x64xf32>
    %138 = vector.broadcast %136 : vector<1x1x16x64xf32> to vector<1x8x16x64xf32>
    %139 = arith.mulf %137, %138 : vector<1x8x16x64xf32>
    %140 = math.exp %139 : vector<1x8x16x64xf32>
    %141 = vector.shape_cast %140 : vector<1x8x16x64xf32> to vector<1x128x64xf32>
    %c0_48 = arith.constant 0 : index
    %c0_49 = arith.constant 0 : index
    %c0_50 = arith.constant 0 : index
    %142 = vector.load %arg27[%c0_48, %c0_49, %c0_50] : memref<1x128x64xf32, #tpu.memory_space<vmem>>, vector<1x128x64xf32>
    tpu.vector_store %arg27[%c0_48, %c0_49, %c0_50], %141 {strides = array<i32>} : memref<1x128x64xf32, #tpu.memory_space<vmem>>, vector<1x128x64xf32>,
    %143 = arith.mulf %130, %109 : vector<8x64xf32>
    %144 = vector.shape_cast %143 : vector<8x64xf32> to vector<1x8x1x64xf32>
    %145 = vector.shape_cast %114 : vector<8x16xf32> to vector<1x8x1x16xf32>
    %146 = vector.shape_cast %4 : vector<16x16xf32> to vector<1x1x16x16xf32>
    %147 = vector.broadcast %145 : vector<1x8x1x16xf32> to vector<1x8x16x16xf32>
    %148 = vector.broadcast %146 : vector<1x1x16x16xf32> to vector<1x8x16x16xf32>
    %149 = arith.mulf %147, %148 : vector<1x8x16x16xf32>
    %cst_51 = arith.constant dense<0.000000e+00> : vector<1x8x16xf32>
    %150 = vector.multi_reduction <add>, %149, %cst_51 [3] : vector<1x8x16x16xf32> to vector<1x8x16xf32>
    %151 = vector.shape_cast %150 : vector<1x8x16xf32> to vector<1x8x16x1xf32>
    %152 = vector.broadcast %151 : vector<1x8x16x1xf32> to vector<1x8x16x64xf32>
    %153 = vector.broadcast %144 : vector<1x8x1x64xf32> to vector<1x8x16x64xf32>
    %154 = arith.mulf %152, %153 : vector<1x8x16x64xf32>
    %155 = vector.shape_cast %154 : vector<1x8x16x64xf32> to vector<1x128x64xf32>
    %c0_52 = arith.constant 0 : index
    %c0_53 = arith.constant 0 : index
    %c0_54 = arith.constant 0 : index
    %156 = vector.load %arg29[%c0_52, %c0_53, %c0_54] : memref<1x128x64xf32, #tpu.memory_space<vmem>>, vector<1x128x64xf32>
    tpu.vector_store %arg29[%c0_52, %c0_53, %c0_54], %155 {strides = array<i32>} : memref<1x128x64xf32, #tpu.memory_space<vmem>>, vector<1x128x64xf32>,
    %c0_55 = arith.constant 0 : index
    %c0_56 = arith.constant 0 : index
    %157 = vector.load %arg17[%c0_55, %c0_56] : memref<32x128xbf16, #tpu.memory_space<vmem>>, vector<32x128xbf16>
    %158 = arith.truncf %63 : vector<8x32xf32> to vector<8x32xbf16>
    %cst_57 = arith.constant dense<0.000000e+00> : vector<8x128xf32>
    %159 = tpu.matmul %158, %157, %cst_57 {dimension_numbers = #tpu.dot_dimension_numbers<[1], [0], [0], [1], [0, 0, 1, 1], [], []>} : vector<8x32xbf16>, vector<32x128xbf16>, vector<8x128xf32> -> vector<8x128xf32>
    %160 = vector.extract_strided_slice %159 {offsets = [0, 0], sizes = [8, 64], strides = [1, 1]} : vector<8x128xf32> to vector<8x64xf32>
    %161 = vector.extract_strided_slice %159 {offsets = [0, 64], sizes = [8, 64], strides = [1, 1]} : vector<8x128xf32> to vector<8x64xf32>
    %162 = vector.shape_cast %160 : vector<8x64xf32> to vector<1x8x64xf32>
    %c0_58 = arith.constant 0 : index
    %c0_59 = arith.constant 0 : index
    %163 = vector.load %arg18[%c0_58, %c0_59] : memref<4x64xf32, #tpu.memory_space<vmem>>, vector<4x64xf32>
    %164 = vector.extract_strided_slice %163 {offsets = [3, 0], sizes = [1, 64], strides = [1, 1]} : vector<4x64xf32> to vector<1x64xf32>
    %165 = vector.shape_cast %164 : vector<1x64xf32> to vector<1x1x64xf32>
    %166 = vector.broadcast %165 : vector<1x1x64xf32> to vector<1x8x64xf32>
    %167 = arith.mulf %166, %162 : vector<1x8x64xf32>
    %cst_60 = arith.constant 0.000000e+00 : f32
    %168 = vector.broadcast %cst_60 : f32 to vector<1x1x64xf32>
    %169 = vector.extract_strided_slice %162 {offsets = [0, 0, 0], sizes = [1, 7, 64], strides = [1, 1, 1]} : vector<1x8x64xf32> to vector<1x7x64xf32>
    %170 = tpu.concatenate %168, %169 in 1 : vector<1x1x64xf32>, vector<1x7x64xf32> -> vector<1x8x64xf32>
    %171 = vector.extract_strided_slice %163 {offsets = [2, 0], sizes = [1, 64], strides = [1, 1]} : vector<4x64xf32> to vector<1x64xf32>
    %172 = vector.shape_cast %171 : vector<1x64xf32> to vector<1x1x64xf32>
    %173 = vector.broadcast %172 : vector<1x1x64xf32> to vector<1x8x64xf32>
    %174 = arith.mulf %173, %170 : vector<1x8x64xf32>
    %175 = arith.addf %167, %174 : vector<1x8x64xf32>
    %cst_61 = arith.constant 0.000000e+00 : f32
    %176 = vector.broadcast %cst_61 : f32 to vector<1x2x64xf32>
    %177 = vector.extract_strided_slice %162 {offsets = [0, 0, 0], sizes = [1, 6, 64], strides = [1, 1, 1]} : vector<1x8x64xf32> to vector<1x6x64xf32>
    %178 = tpu.concatenate %176, %177 in 1 : vector<1x2x64xf32>, vector<1x6x64xf32> -> vector<1x8x64xf32>
    %179 = vector.extract_strided_slice %163 {offsets = [1, 0], sizes = [1, 64], strides = [1, 1]} : vector<4x64xf32> to vector<1x64xf32>
    %180 = vector.shape_cast %179 : vector<1x64xf32> to vector<1x1x64xf32>
    %181 = vector.broadcast %180 : vector<1x1x64xf32> to vector<1x8x64xf32>
    %182 = arith.mulf %181, %178 : vector<1x8x64xf32>
    %183 = arith.addf %175, %182 : vector<1x8x64xf32>
    %cst_62 = arith.constant 0.000000e+00 : f32
    %184 = vector.broadcast %cst_62 : f32 to vector<1x3x64xf32>
    %185 = vector.extract_strided_slice %162 {offsets = [0, 0, 0], sizes = [1, 5, 64], strides = [1, 1, 1]} : vector<1x8x64xf32> to vector<1x5x64xf32>
    %186 = tpu.concatenate %184, %185 in 1 : vector<1x3x64xf32>, vector<1x5x64xf32> -> vector<1x8x64xf32>
    %187 = vector.extract_strided_slice %163 {offsets = [0, 0], sizes = [1, 64], strides = [1, 1]} : vector<4x64xf32> to vector<1x64xf32>
    %188 = vector.shape_cast %187 : vector<1x64xf32> to vector<1x1x64xf32>
    %189 = vector.broadcast %188 : vector<1x1x64xf32> to vector<1x8x64xf32>
    %190 = arith.mulf %189, %186 : vector<1x8x64xf32>
    %191 = arith.addf %183, %190 : vector<1x8x64xf32>
    %c0_63 = arith.constant 0 : index
    %c0_64 = arith.constant 0 : index
    %192 = vector.load %arg19[%c0_63, %c0_64] : memref<1x64xf32, #tpu.memory_space<vmem>>, vector<1x64xf32>
    %193 = vector.shape_cast %192 : vector<1x64xf32> to vector<1x1x64xf32>
    %194 = vector.broadcast %193 : vector<1x1x64xf32> to vector<1x8x64xf32>
    %195 = arith.addf %191, %194 : vector<1x8x64xf32>
    %196 = arith.negf %195 : vector<1x8x64xf32>
    %197 = math.exp %196 : vector<1x8x64xf32>
    %cst_65 = arith.constant 1.000000e+00 : f32
    %198 = vector.broadcast %cst_65 : f32 to vector<1x8x64xf32>
    %199 = arith.addf %198, %197 : vector<1x8x64xf32>
    %200 = arith.divf %198, %199 : vector<1x8x64xf32>
    %201 = arith.mulf %195, %200 : vector<1x8x64xf32>
    %202 = vector.shape_cast %201 : vector<1x8x64xf32> to vector<8x64xf32>
    %c0_66 = arith.constant 0 : index
    %c0_67 = arith.constant 0 : index
    %203 = vector.load %arg20[%c0_66, %c0_67] : memref<64x34xbf16, #tpu.memory_space<vmem>>, vector<64x34xbf16>
    %204 = arith.truncf %202 : vector<8x64xf32> to vector<8x64xbf16>
    %cst_68 = arith.constant dense<0.000000e+00> : vector<8x34xf32>
    %205 = tpu.matmul %204, %203, %cst_68 {dimension_numbers = #tpu.dot_dimension_numbers<[1], [0], [0], [1], [0, 0, 1, 1], [], []>} : vector<8x64xbf16>, vector<64x34xbf16>, vector<8x34xf32> -> vector<8x34xf32>
    %206 = vector.extract_strided_slice %205 {offsets = [0, 0], sizes = [8, 2], strides = [1, 1]} : vector<8x34xf32> to vector<8x2xf32>
    %207 = vector.extract_strided_slice %205 {offsets = [0, 2], sizes = [8, 16], strides = [1, 1]} : vector<8x34xf32> to vector<8x16xf32>
    %208 = vector.extract_strided_slice %205 {offsets = [0, 18], sizes = [8, 16], strides = [1, 1]} : vector<8x34xf32> to vector<8x16xf32>
    %c0_69 = arith.constant 0 : index
    %c0_70 = arith.constant 0 : index
    %209 = vector.load %arg21[%c0_69, %c0_70] : memref<2x64xbf16, #tpu.memory_space<vmem>>, vector<2x64xbf16>
    %210 = arith.truncf %206 : vector<8x2xf32> to vector<8x2xbf16>
    %cst_71 = arith.constant dense<0.000000e+00> : vector<8x64xf32>
    %211 = tpu.matmul %210, %209, %cst_71 {dimension_numbers = #tpu.dot_dimension_numbers<[1], [0], [0], [1], [0, 0, 1, 1], [], []>} : vector<8x2xbf16>, vector<2x64xbf16>, vector<8x64xf32> -> vector<8x64xf32>
    %c0_72 = arith.constant 0 : index
    %c0_73 = arith.constant 0 : index
    %212 = vector.load %arg22[%c0_72, %c0_73] : memref<1x64xf32, #tpu.memory_space<vmem>>, vector<1x64xf32>
    %213 = vector.broadcast %212 : vector<1x64xf32> to vector<8x64xf32>
    %214 = arith.addf %211, %213 : vector<8x64xf32>
    %cst_74 = arith.constant 2.000000e+01 : f32
    %215 = vector.broadcast %cst_74 : f32 to vector<8x64xf32>
    %216 = arith.cmpf ogt, %214, %215 : vector<8x64xf32>
    %cst_75 = arith.constant 2.000000e+01 : f32
    %217 = vector.broadcast %cst_75 : f32 to vector<8x64xf32>
    %218 = arith.minimumf %214, %217 : vector<8x64xf32>
    %219 = math.exp %218 : vector<8x64xf32>
    %cst_76 = arith.constant 1.000000e+00 : f32
    %220 = vector.broadcast %cst_76 : f32 to vector<8x64xf32>
    %221 = arith.addf %220, %219 : vector<8x64xf32>
    %222 = math.log %221 : vector<8x64xf32>
    %223 = arith.select %216, %214, %222 : vector<8x64xi1>, vector<8x64xf32>
    %c0_77 = arith.constant 0 : index
    %c0_78 = arith.constant 0 : index
    %224 = vector.load %arg23[%c0_77, %c0_78] : memref<16x64xf32, #tpu.memory_space<vmem>>, vector<16x64xf32>
    %225 = math.exp %224 : vector<16x64xf32>
    %cst_79 = arith.constant 0.000000e+00 : f32
    %226 = vector.broadcast %cst_79 : f32 to vector<16x64xf32>
    %227 = arith.subf %226, %225 : vector<16x64xf32>
    %228 = vector.shape_cast %223 : vector<8x64xf32> to vector<1x8x1x64xf32>
    %229 = vector.shape_cast %227 : vector<16x64xf32> to vector<1x1x16x64xf32>
    %230 = vector.broadcast %228 : vector<1x8x1x64xf32> to vector<1x8x16x64xf32>
    %231 = vector.broadcast %229 : vector<1x1x16x64xf32> to vector<1x8x16x64xf32>
    %232 = arith.mulf %230, %231 : vector<1x8x16x64xf32>
    %233 = math.exp %232 : vector<1x8x16x64xf32>
    %234 = vector.shape_cast %233 : vector<1x8x16x64xf32> to vector<1x128x64xf32>
    %c0_80 = arith.constant 0 : index
    %c0_81 = arith.constant 0 : index
    %c0_82 = arith.constant 0 : index
    %235 = vector.load %arg28[%c0_80, %c0_81, %c0_82] : memref<1x128x64xf32, #tpu.memory_space<vmem>>, vector<1x128x64xf32>
    tpu.vector_store %arg28[%c0_80, %c0_81, %c0_82], %234 {strides = array<i32>} : memref<1x128x64xf32, #tpu.memory_space<vmem>>, vector<1x128x64xf32>,
    %236 = arith.mulf %223, %202 : vector<8x64xf32>
    %237 = vector.shape_cast %236 : vector<8x64xf32> to vector<1x8x1x64xf32>
    %238 = vector.shape_cast %207 : vector<8x16xf32> to vector<1x8x1x16xf32>
    %239 = vector.shape_cast %4 : vector<16x16xf32> to vector<1x1x16x16xf32>
    %240 = vector.broadcast %238 : vector<1x8x1x16xf32> to vector<1x8x16x16xf32>
    %241 = vector.broadcast %239 : vector<1x1x16x16xf32> to vector<1x8x16x16xf32>
    %242 = arith.mulf %240, %241 : vector<1x8x16x16xf32>
    %cst_83 = arith.constant dense<0.000000e+00> : vector<1x8x16xf32>
    %243 = vector.multi_reduction <add>, %242, %cst_83 [3] : vector<1x8x16x16xf32> to vector<1x8x16xf32>
    %244 = vector.shape_cast %243 : vector<1x8x16xf32> to vector<1x8x16x1xf32>
    %245 = vector.broadcast %244 : vector<1x8x16x1xf32> to vector<1x8x16x64xf32>
    %246 = vector.broadcast %237 : vector<1x8x1x64xf32> to vector<1x8x16x64xf32>
    %247 = arith.mulf %245, %246 : vector<1x8x16x64xf32>
    %248 = vector.shape_cast %247 : vector<1x8x16x64xf32> to vector<1x128x64xf32>
    %c0_84 = arith.constant 0 : index
    %c0_85 = arith.constant 0 : index
    %c0_86 = arith.constant 0 : index
    %249 = vector.load %arg30[%c0_84, %c0_85, %c0_86] : memref<1x128x64xf32, #tpu.memory_space<vmem>>, vector<1x128x64xf32>
    tpu.vector_store %arg30[%c0_84, %c0_85, %c0_86], %248 {strides = array<i32>} : memref<1x128x64xf32, #tpu.memory_space<vmem>>, vector<1x128x64xf32>,
    %cst_87 = arith.constant 0.000000e+00 : f32
    %250 = vector.broadcast %cst_87 : f32 to vector<1x16x64xf32>
    %c0_i32 = arith.constant 0 : i32
    %c16_i32 = arith.constant 16 : i32
    %251 = arith.muli %c0_i32, %c16_i32 : i32
    %252 = tpu.assume_multiple %251, 16 : i32
    %c0_88 = arith.constant 0 : index
    %253 = arith.index_cast %252 : i32 to index
    %c0_89 = arith.constant 0 : index
    %254 = vector.load %arg27[%c0_88, %253, %c0_89] : memref<1x128x64xf32, #tpu.memory_space<vmem>>, vector<1x16x64xf32>
    %255 = arith.mulf %254, %250 : vector<1x16x64xf32>
    %c0_90 = arith.constant 0 : index
    %256 = arith.index_cast %252 : i32 to index
    %c0_91 = arith.constant 0 : index
    %257 = vector.load %arg29[%c0_90, %256, %c0_91] : memref<1x128x64xf32, #tpu.memory_space<vmem>>, vector<1x16x64xf32>
    %258 = arith.addf %255, %257 : vector<1x16x64xf32>
    %c0_92 = arith.constant 0 : index
    %259 = arith.index_cast %252 : i32 to index
    %c0_93 = arith.constant 0 : index
    %260 = vector.load %arg31[%c0_92, %259, %c0_93] : memref<1x128x64xf32, #tpu.memory_space<vmem>>, vector<1x16x64xf32>
    tpu.vector_store %arg31[%c0_92, %259, %c0_93], %258 {strides = array<i32>} : memref<1x128x64xf32, #tpu.memory_space<vmem>>, vector<1x16x64xf32>,
    %c0_94 = arith.constant 0 : index
    %261 = arith.index_cast %252 : i32 to index
    %c0_95 = arith.constant 0 : index
    %262 = vector.load %arg28[%c0_94, %261, %c0_95] : memref<1x128x64xf32, #tpu.memory_space<vmem>>, vector<1x16x64xf32>
    %263 = arith.mulf %262, %250 : vector<1x16x64xf32>
    %c0_96 = arith.constant 0 : index
    %264 = arith.index_cast %252 : i32 to index
    %c0_97 = arith.constant 0 : index
    %265 = vector.load %arg30[%c0_96, %264, %c0_97] : memref<1x128x64xf32, #tpu.memory_space<vmem>>, vector<1x16x64xf32>
    %266 = arith.addf %263, %265 : vector<1x16x64xf32>
    %c0_98 = arith.constant 0 : index
    %267 = arith.index_cast %252 : i32 to index
    %c0_99 = arith.constant 0 : index
    %268 = vector.load %arg32[%c0_98, %267, %c0_99] : memref<1x128x64xf32, #tpu.memory_space<vmem>>, vector<1x16x64xf32>
    tpu.vector_store %arg32[%c0_98, %267, %c0_99], %266 {strides = array<i32>} : memref<1x128x64xf32, #tpu.memory_space<vmem>>, vector<1x16x64xf32>,
    %c1_i32 = arith.constant 1 : i32
    %c16_i32_100 = arith.constant 16 : i32
    %269 = arith.muli %c1_i32, %c16_i32_100 : i32
    %270 = tpu.assume_multiple %269, 16 : i32
    %c0_101 = arith.constant 0 : index
    %271 = arith.index_cast %270 : i32 to index
    %c0_102 = arith.constant 0 : index
    %272 = vector.load %arg27[%c0_101, %271, %c0_102] : memref<1x128x64xf32, #tpu.memory_space<vmem>>, vector<1x16x64xf32>
    %273 = arith.mulf %272, %258 : vector<1x16x64xf32>
    %c0_103 = arith.constant 0 : index
    %274 = arith.index_cast %270 : i32 to index
    %c0_104 = arith.constant 0 : index
    %275 = vector.load %arg29[%c0_103, %274, %c0_104] : memref<1x128x64xf32, #tpu.memory_space<vmem>>, vector<1x16x64xf32>
    %276 = arith.addf %273, %275 : vector<1x16x64xf32>
    %c0_105 = arith.constant 0 : index
    %277 = arith.index_cast %270 : i32 to index
    %c0_106 = arith.constant 0 : index
    %278 = vector.load %arg31[%c0_105, %277, %c0_106] : memref<1x128x64xf32, #tpu.memory_space<vmem>>, vector<1x16x64xf32>
    tpu.vector_store %arg31[%c0_105, %277, %c0_106], %276 {strides = array<i32>} : memref<1x128x64xf32, #tpu.memory_space<vmem>>, vector<1x16x64xf32>,
    %c0_107 = arith.constant 0 : index
    %279 = arith.index_cast %270 : i32 to index
    %c0_108 = arith.constant 0 : index
    %280 = vector.load %arg28[%c0_107, %279, %c0_108] : memref<1x128x64xf32, #tpu.memory_space<vmem>>, vector<1x16x64xf32>
    %281 = arith.mulf %280, %266 : vector<1x16x64xf32>
    %c0_109 = arith.constant 0 : index
    %282 = arith.index_cast %270 : i32 to index
    %c0_110 = arith.constant 0 : index
    %283 = vector.load %arg30[%c0_109, %282, %c0_110] : memref<1x128x64xf32, #tpu.memory_space<vmem>>, vector<1x16x64xf32>
    %284 = arith.addf %281, %283 : vector<1x16x64xf32>
    %c0_111 = arith.constant 0 : index
    %285 = arith.index_cast %270 : i32 to index
    %c0_112 = arith.constant 0 : index
    %286 = vector.load %arg32[%c0_111, %285, %c0_112] : memref<1x128x64xf32, #tpu.memory_space<vmem>>, vector<1x16x64xf32>
    tpu.vector_store %arg32[%c0_111, %285, %c0_112], %284 {strides = array<i32>} : memref<1x128x64xf32, #tpu.memory_space<vmem>>, vector<1x16x64xf32>,
    %c2_i32 = arith.constant 2 : i32
    %c16_i32_113 = arith.constant 16 : i32
    %287 = arith.muli %c2_i32, %c16_i32_113 : i32
    %288 = tpu.assume_multiple %287, 16 : i32
    %c0_114 = arith.constant 0 : index
    %289 = arith.index_cast %288 : i32 to index
    %c0_115 = arith.constant 0 : index
    %290 = vector.load %arg27[%c0_114, %289, %c0_115] : memref<1x128x64xf32, #tpu.memory_space<vmem>>, vector<1x16x64xf32>
    %291 = arith.mulf %290, %276 : vector<1x16x64xf32>
    %c0_116 = arith.constant 0 : index
    %292 = arith.index_cast %288 : i32 to index
    %c0_117 = arith.constant 0 : index
    %293 = vector.load %arg29[%c0_116, %292, %c0_117] : memref<1x128x64xf32, #tpu.memory_space<vmem>>, vector<1x16x64xf32>
    %294 = arith.addf %291, %293 : vector<1x16x64xf32>
    %c0_118 = arith.constant 0 : index
    %295 = arith.index_cast %288 : i32 to index
    %c0_119 = arith.constant 0 : index
    %296 = vector.load %arg31[%c0_118, %295, %c0_119] : memref<1x128x64xf32, #tpu.memory_space<vmem>>, vector<1x16x64xf32>
    tpu.vector_store %arg31[%c0_118, %295, %c0_119], %294 {strides = array<i32>} : memref<1x128x64xf32, #tpu.memory_space<vmem>>, vector<1x16x64xf32>,
    %c0_120 = arith.constant 0 : index
    %297 = arith.index_cast %288 : i32 to index
    %c0_121 = arith.constant 0 : index
    %298 = vector.load %arg28[%c0_120, %297, %c0_121] : memref<1x128x64xf32, #tpu.memory_space<vmem>>, vector<1x16x64xf32>
    %299 = arith.mulf %298, %284 : vector<1x16x64xf32>
    %c0_122 = arith.constant 0 : index
    %300 = arith.index_cast %288 : i32 to index
    %c0_123 = arith.constant 0 : index
    %301 = vector.load %arg30[%c0_122, %300, %c0_123] : memref<1x128x64xf32, #tpu.memory_space<vmem>>, vector<1x16x64xf32>
    %302 = arith.addf %299, %301 : vector<1x16x64xf32>
    %c0_124 = arith.constant 0 : index
    %303 = arith.index_cast %288 : i32 to index
    %c0_125 = arith.constant 0 : index
    %304 = vector.load %arg32[%c0_124, %303, %c0_125] : memref<1x128x64xf32, #tpu.memory_space<vmem>>, vector<1x16x64xf32>
    tpu.vector_store %arg32[%c0_124, %303, %c0_125], %302 {strides = array<i32>} : memref<1x128x64xf32, #tpu.memory_space<vmem>>, vector<1x16x64xf32>,
    %c3_i32 = arith.constant 3 : i32
    %c16_i32_126 = arith.constant 16 : i32
    %305 = arith.muli %c3_i32, %c16_i32_126 : i32
    %306 = tpu.assume_multiple %305, 16 : i32
    %c0_127 = arith.constant 0 : index
    %307 = arith.index_cast %306 : i32 to index
    %c0_128 = arith.constant 0 : index
    %308 = vector.load %arg27[%c0_127, %307, %c0_128] : memref<1x128x64xf32, #tpu.memory_space<vmem>>, vector<1x16x64xf32>
    %309 = arith.mulf %308, %294 : vector<1x16x64xf32>
    %c0_129 = arith.constant 0 : index
    %310 = arith.index_cast %306 : i32 to index
    %c0_130 = arith.constant 0 : index
    %311 = vector.load %arg29[%c0_129, %310, %c0_130] : memref<1x128x64xf32, #tpu.memory_space<vmem>>, vector<1x16x64xf32>
    %312 = arith.addf %309, %311 : vector<1x16x64xf32>
    %c0_131 = arith.constant 0 : index
    %313 = arith.index_cast %306 : i32 to index
    %c0_132 = arith.constant 0 : index
    %314 = vector.load %arg31[%c0_131, %313, %c0_132] : memref<1x128x64xf32, #tpu.memory_space<vmem>>, vector<1x16x64xf32>
    tpu.vector_store %arg31[%c0_131, %313, %c0_132], %312 {strides = array<i32>} : memref<1x128x64xf32, #tpu.memory_space<vmem>>, vector<1x16x64xf32>,
    %c0_133 = arith.constant 0 : index
    %315 = arith.index_cast %306 : i32 to index
    %c0_134 = arith.constant 0 : index
    %316 = vector.load %arg28[%c0_133, %315, %c0_134] : memref<1x128x64xf32, #tpu.memory_space<vmem>>, vector<1x16x64xf32>
    %317 = arith.mulf %316, %302 : vector<1x16x64xf32>
    %c0_135 = arith.constant 0 : index
    %318 = arith.index_cast %306 : i32 to index
    %c0_136 = arith.constant 0 : index
    %319 = vector.load %arg30[%c0_135, %318, %c0_136] : memref<1x128x64xf32, #tpu.memory_space<vmem>>, vector<1x16x64xf32>
    %320 = arith.addf %317, %319 : vector<1x16x64xf32>
    %c0_137 = arith.constant 0 : index
    %321 = arith.index_cast %306 : i32 to index
    %c0_138 = arith.constant 0 : index
    %322 = vector.load %arg32[%c0_137, %321, %c0_138] : memref<1x128x64xf32, #tpu.memory_space<vmem>>, vector<1x16x64xf32>
    tpu.vector_store %arg32[%c0_137, %321, %c0_138], %320 {strides = array<i32>} : memref<1x128x64xf32, #tpu.memory_space<vmem>>, vector<1x16x64xf32>,
    %c4_i32 = arith.constant 4 : i32
    %c16_i32_139 = arith.constant 16 : i32
    %323 = arith.muli %c4_i32, %c16_i32_139 : i32
    %324 = tpu.assume_multiple %323, 16 : i32
    %c0_140 = arith.constant 0 : index
    %325 = arith.index_cast %324 : i32 to index
    %c0_141 = arith.constant 0 : index
    %326 = vector.load %arg27[%c0_140, %325, %c0_141] : memref<1x128x64xf32, #tpu.memory_space<vmem>>, vector<1x16x64xf32>
    %327 = arith.mulf %326, %312 : vector<1x16x64xf32>
    %c0_142 = arith.constant 0 : index
    %328 = arith.index_cast %324 : i32 to index
    %c0_143 = arith.constant 0 : index
    %329 = vector.load %arg29[%c0_142, %328, %c0_143] : memref<1x128x64xf32, #tpu.memory_space<vmem>>, vector<1x16x64xf32>
    %330 = arith.addf %327, %329 : vector<1x16x64xf32>
    %c0_144 = arith.constant 0 : index
    %331 = arith.index_cast %324 : i32 to index
    %c0_145 = arith.constant 0 : index
    %332 = vector.load %arg31[%c0_144, %331, %c0_145] : memref<1x128x64xf32, #tpu.memory_space<vmem>>, vector<1x16x64xf32>
    tpu.vector_store %arg31[%c0_144, %331, %c0_145], %330 {strides = array<i32>} : memref<1x128x64xf32, #tpu.memory_space<vmem>>, vector<1x16x64xf32>,
    %c0_146 = arith.constant 0 : index
    %333 = arith.index_cast %324 : i32 to index
    %c0_147 = arith.constant 0 : index
    %334 = vector.load %arg28[%c0_146, %333, %c0_147] : memref<1x128x64xf32, #tpu.memory_space<vmem>>, vector<1x16x64xf32>
    %335 = arith.mulf %334, %320 : vector<1x16x64xf32>
    %c0_148 = arith.constant 0 : index
    %336 = arith.index_cast %324 : i32 to index
    %c0_149 = arith.constant 0 : index
    %337 = vector.load %arg30[%c0_148, %336, %c0_149] : memref<1x128x64xf32, #tpu.memory_space<vmem>>, vector<1x16x64xf32>
    %338 = arith.addf %335, %337 : vector<1x16x64xf32>
    %c0_150 = arith.constant 0 : index
    %339 = arith.index_cast %324 : i32 to index
    %c0_151 = arith.constant 0 : index
    %340 = vector.load %arg32[%c0_150, %339, %c0_151] : memref<1x128x64xf32, #tpu.memory_space<vmem>>, vector<1x16x64xf32>
    tpu.vector_store %arg32[%c0_150, %339, %c0_151], %338 {strides = array<i32>} : memref<1x128x64xf32, #tpu.memory_space<vmem>>, vector<1x16x64xf32>,
    %c5_i32 = arith.constant 5 : i32
    %c16_i32_152 = arith.constant 16 : i32
    %341 = arith.muli %c5_i32, %c16_i32_152 : i32
    %342 = tpu.assume_multiple %341, 16 : i32
    %c0_153 = arith.constant 0 : index
    %343 = arith.index_cast %342 : i32 to index
    %c0_154 = arith.constant 0 : index
    %344 = vector.load %arg27[%c0_153, %343, %c0_154] : memref<1x128x64xf32, #tpu.memory_space<vmem>>, vector<1x16x64xf32>
    %345 = arith.mulf %344, %330 : vector<1x16x64xf32>
    %c0_155 = arith.constant 0 : index
    %346 = arith.index_cast %342 : i32 to index
    %c0_156 = arith.constant 0 : index
    %347 = vector.load %arg29[%c0_155, %346, %c0_156] : memref<1x128x64xf32, #tpu.memory_space<vmem>>, vector<1x16x64xf32>
    %348 = arith.addf %345, %347 : vector<1x16x64xf32>
    %c0_157 = arith.constant 0 : index
    %349 = arith.index_cast %342 : i32 to index
    %c0_158 = arith.constant 0 : index
    %350 = vector.load %arg31[%c0_157, %349, %c0_158] : memref<1x128x64xf32, #tpu.memory_space<vmem>>, vector<1x16x64xf32>
    tpu.vector_store %arg31[%c0_157, %349, %c0_158], %348 {strides = array<i32>} : memref<1x128x64xf32, #tpu.memory_space<vmem>>, vector<1x16x64xf32>,
    %c0_159 = arith.constant 0 : index
    %351 = arith.index_cast %342 : i32 to index
    %c0_160 = arith.constant 0 : index
    %352 = vector.load %arg28[%c0_159, %351, %c0_160] : memref<1x128x64xf32, #tpu.memory_space<vmem>>, vector<1x16x64xf32>
    %353 = arith.mulf %352, %338 : vector<1x16x64xf32>
    %c0_161 = arith.constant 0 : index
    %354 = arith.index_cast %342 : i32 to index
    %c0_162 = arith.constant 0 : index
    %355 = vector.load %arg30[%c0_161, %354, %c0_162] : memref<1x128x64xf32, #tpu.memory_space<vmem>>, vector<1x16x64xf32>
    %356 = arith.addf %353, %355 : vector<1x16x64xf32>
    %c0_163 = arith.constant 0 : index
    %357 = arith.index_cast %342 : i32 to index
    %c0_164 = arith.constant 0 : index
    %358 = vector.load %arg32[%c0_163, %357, %c0_164] : memref<1x128x64xf32, #tpu.memory_space<vmem>>, vector<1x16x64xf32>
    tpu.vector_store %arg32[%c0_163, %357, %c0_164], %356 {strides = array<i32>} : memref<1x128x64xf32, #tpu.memory_space<vmem>>, vector<1x16x64xf32>,
    %c6_i32 = arith.constant 6 : i32
    %c16_i32_165 = arith.constant 16 : i32
    %359 = arith.muli %c6_i32, %c16_i32_165 : i32
    %360 = tpu.assume_multiple %359, 16 : i32
    %c0_166 = arith.constant 0 : index
    %361 = arith.index_cast %360 : i32 to index
    %c0_167 = arith.constant 0 : index
    %362 = vector.load %arg27[%c0_166, %361, %c0_167] : memref<1x128x64xf32, #tpu.memory_space<vmem>>, vector<1x16x64xf32>
    %363 = arith.mulf %362, %348 : vector<1x16x64xf32>
    %c0_168 = arith.constant 0 : index
    %364 = arith.index_cast %360 : i32 to index
    %c0_169 = arith.constant 0 : index
    %365 = vector.load %arg29[%c0_168, %364, %c0_169] : memref<1x128x64xf32, #tpu.memory_space<vmem>>, vector<1x16x64xf32>
    %366 = arith.addf %363, %365 : vector<1x16x64xf32>
    %c0_170 = arith.constant 0 : index
    %367 = arith.index_cast %360 : i32 to index
    %c0_171 = arith.constant 0 : index
    %368 = vector.load %arg31[%c0_170, %367, %c0_171] : memref<1x128x64xf32, #tpu.memory_space<vmem>>, vector<1x16x64xf32>
    tpu.vector_store %arg31[%c0_170, %367, %c0_171], %366 {strides = array<i32>} : memref<1x128x64xf32, #tpu.memory_space<vmem>>, vector<1x16x64xf32>,
    %c0_172 = arith.constant 0 : index
    %369 = arith.index_cast %360 : i32 to index
    %c0_173 = arith.constant 0 : index
    %370 = vector.load %arg28[%c0_172, %369, %c0_173] : memref<1x128x64xf32, #tpu.memory_space<vmem>>, vector<1x16x64xf32>
    %371 = arith.mulf %370, %356 : vector<1x16x64xf32>
    %c0_174 = arith.constant 0 : index
    %372 = arith.index_cast %360 : i32 to index
    %c0_175 = arith.constant 0 : index
    %373 = vector.load %arg30[%c0_174, %372, %c0_175] : memref<1x128x64xf32, #tpu.memory_space<vmem>>, vector<1x16x64xf32>
    %374 = arith.addf %371, %373 : vector<1x16x64xf32>
    %c0_176 = arith.constant 0 : index
    %375 = arith.index_cast %360 : i32 to index
    %c0_177 = arith.constant 0 : index
    %376 = vector.load %arg32[%c0_176, %375, %c0_177] : memref<1x128x64xf32, #tpu.memory_space<vmem>>, vector<1x16x64xf32>
    tpu.vector_store %arg32[%c0_176, %375, %c0_177], %374 {strides = array<i32>} : memref<1x128x64xf32, #tpu.memory_space<vmem>>, vector<1x16x64xf32>,
    %c7_i32 = arith.constant 7 : i32
    %c16_i32_178 = arith.constant 16 : i32
    %377 = arith.muli %c7_i32, %c16_i32_178 : i32
    %378 = tpu.assume_multiple %377, 16 : i32
    %c0_179 = arith.constant 0 : index
    %379 = arith.index_cast %378 : i32 to index
    %c0_180 = arith.constant 0 : index
    %380 = vector.load %arg27[%c0_179, %379, %c0_180] : memref<1x128x64xf32, #tpu.memory_space<vmem>>, vector<1x16x64xf32>
    %381 = arith.mulf %380, %366 : vector<1x16x64xf32>
    %c0_181 = arith.constant 0 : index
    %382 = arith.index_cast %378 : i32 to index
    %c0_182 = arith.constant 0 : index
    %383 = vector.load %arg29[%c0_181, %382, %c0_182] : memref<1x128x64xf32, #tpu.memory_space<vmem>>, vector<1x16x64xf32>
    %384 = arith.addf %381, %383 : vector<1x16x64xf32>
    %c0_183 = arith.constant 0 : index
    %385 = arith.index_cast %378 : i32 to index
    %c0_184 = arith.constant 0 : index
    %386 = vector.load %arg31[%c0_183, %385, %c0_184] : memref<1x128x64xf32, #tpu.memory_space<vmem>>, vector<1x16x64xf32>
    tpu.vector_store %arg31[%c0_183, %385, %c0_184], %384 {strides = array<i32>} : memref<1x128x64xf32, #tpu.memory_space<vmem>>, vector<1x16x64xf32>,
    %c0_185 = arith.constant 0 : index
    %387 = arith.index_cast %378 : i32 to index
    %c0_186 = arith.constant 0 : index
    %388 = vector.load %arg28[%c0_185, %387, %c0_186] : memref<1x128x64xf32, #tpu.memory_space<vmem>>, vector<1x16x64xf32>
    %389 = arith.mulf %388, %374 : vector<1x16x64xf32>
    %c0_187 = arith.constant 0 : index
    %390 = arith.index_cast %378 : i32 to index
    %c0_188 = arith.constant 0 : index
    %391 = vector.load %arg30[%c0_187, %390, %c0_188] : memref<1x128x64xf32, #tpu.memory_space<vmem>>, vector<1x16x64xf32>
    %392 = arith.addf %389, %391 : vector<1x16x64xf32>
    %c0_189 = arith.constant 0 : index
    %393 = arith.index_cast %378 : i32 to index
    %c0_190 = arith.constant 0 : index
    %394 = vector.load %arg32[%c0_189, %393, %c0_190] : memref<1x128x64xf32, #tpu.memory_space<vmem>>, vector<1x16x64xf32>
    tpu.vector_store %arg32[%c0_189, %393, %c0_190], %392 {strides = array<i32>} : memref<1x128x64xf32, #tpu.memory_space<vmem>>, vector<1x16x64xf32>,
    %c8_i32 = arith.constant 8 : i32
    %c0_191 = arith.constant 0 : index
    %c0_192 = arith.constant 0 : index
    %c0_193 = arith.constant 0 : index
    %395 = vector.load %arg31[%c0_191, %c0_192, %c0_193] : memref<1x128x64xf32, #tpu.memory_space<vmem>>, vector<1x128x64xf32>
    %396 = vector.shape_cast %395 : vector<1x128x64xf32> to vector<1x8x16x64xf32>
    %397 = vector.shape_cast %115 : vector<8x16xf32> to vector<1x8x1x16xf32>
    %398 = vector.shape_cast %4 : vector<16x16xf32> to vector<1x1x16x16xf32>
    %399 = vector.broadcast %397 : vector<1x8x1x16xf32> to vector<1x8x16x16xf32>
    %400 = vector.broadcast %398 : vector<1x1x16x16xf32> to vector<1x8x16x16xf32>
    %401 = arith.mulf %399, %400 : vector<1x8x16x16xf32>
    %cst_194 = arith.constant dense<0.000000e+00> : vector<1x8x16xf32>
    %402 = vector.multi_reduction <add>, %401, %cst_194 [3] : vector<1x8x16x16xf32> to vector<1x8x16xf32>
    %403 = vector.shape_cast %402 : vector<1x8x16xf32> to vector<1x8x16x1xf32>
    %404 = vector.broadcast %403 : vector<1x8x16x1xf32> to vector<1x8x16x64xf32>
    %405 = arith.mulf %404, %396 : vector<1x8x16x64xf32>
    %cst_195 = arith.constant dense<0.000000e+00> : vector<1x8x64xf32>
    %406 = vector.multi_reduction <add>, %405, %cst_195 [2] : vector<1x8x16x64xf32> to vector<1x8x64xf32>
    %407 = vector.shape_cast %406 : vector<1x8x64xf32> to vector<8x64xf32>
    %c0_196 = arith.constant 0 : index
    %c0_197 = arith.constant 0 : index
    %408 = vector.load %arg15[%c0_196, %c0_197] : memref<1x64xf32, #tpu.memory_space<vmem>>, vector<1x64xf32>
    %409 = vector.broadcast %408 : vector<1x64xf32> to vector<8x64xf32>
    %410 = arith.mulf %409, %109 : vector<8x64xf32>
    %411 = arith.addf %407, %410 : vector<8x64xf32>
    %412 = arith.negf %68 : vector<8x64xf32>
    %413 = math.exp %412 : vector<8x64xf32>
    %cst_198 = arith.constant 1.000000e+00 : f32
    %414 = vector.broadcast %cst_198 : f32 to vector<8x64xf32>
    %415 = arith.addf %414, %413 : vector<8x64xf32>
    %416 = arith.divf %414, %415 : vector<8x64xf32>
    %417 = arith.mulf %68, %416 : vector<8x64xf32>
    %418 = arith.mulf %411, %417 : vector<8x64xf32>
    %c0_199 = arith.constant 0 : index
    %c0_200 = arith.constant 0 : index
    %419 = vector.load %arg16[%c0_199, %c0_200] : memref<64x32xbf16, #tpu.memory_space<vmem>>, vector<64x32xbf16>
    %420 = arith.truncf %418 : vector<8x64xf32> to vector<8x64xbf16>
    %cst_201 = arith.constant dense<0.000000e+00> : vector<8x32xf32>
    %421 = tpu.matmul %420, %419, %cst_201 {dimension_numbers = #tpu.dot_dimension_numbers<[1], [0], [0], [1], [0, 0, 1, 1], [], []>} : vector<8x64xbf16>, vector<64x32xbf16>, vector<8x32xf32> -> vector<8x32xf32>
    %c0_202 = arith.constant 0 : index
    %c0_203 = arith.constant 0 : index
    %c0_204 = arith.constant 0 : index
    %422 = vector.load %arg32[%c0_202, %c0_203, %c0_204] : memref<1x128x64xf32, #tpu.memory_space<vmem>>, vector<1x128x64xf32>
    %423 = vector.shape_cast %422 : vector<1x128x64xf32> to vector<1x8x16x64xf32>
    %424 = vector.shape_cast %208 : vector<8x16xf32> to vector<1x8x1x16xf32>
    %425 = vector.shape_cast %4 : vector<16x16xf32> to vector<1x1x16x16xf32>
    %426 = vector.broadcast %424 : vector<1x8x1x16xf32> to vector<1x8x16x16xf32>
    %427 = vector.broadcast %425 : vector<1x1x16x16xf32> to vector<1x8x16x16xf32>
    %428 = arith.mulf %426, %427 : vector<1x8x16x16xf32>
    %cst_205 = arith.constant dense<0.000000e+00> : vector<1x8x16xf32>
    %429 = vector.multi_reduction <add>, %428, %cst_205 [3] : vector<1x8x16x16xf32> to vector<1x8x16xf32>
    %430 = vector.shape_cast %429 : vector<1x8x16xf32> to vector<1x8x16x1xf32>
    %431 = vector.broadcast %430 : vector<1x8x16x1xf32> to vector<1x8x16x64xf32>
    %432 = arith.mulf %431, %423 : vector<1x8x16x64xf32>
    %cst_206 = arith.constant dense<0.000000e+00> : vector<1x8x64xf32>
    %433 = vector.multi_reduction <add>, %432, %cst_206 [2] : vector<1x8x16x64xf32> to vector<1x8x64xf32>
    %434 = vector.shape_cast %433 : vector<1x8x64xf32> to vector<8x64xf32>
    %c0_207 = arith.constant 0 : index
    %c0_208 = arith.constant 0 : index
    %435 = vector.load %arg24[%c0_207, %c0_208] : memref<1x64xf32, #tpu.memory_space<vmem>>, vector<1x64xf32>
    %436 = vector.broadcast %435 : vector<1x64xf32> to vector<8x64xf32>
    %437 = arith.mulf %436, %202 : vector<8x64xf32>
    %438 = arith.addf %434, %437 : vector<8x64xf32>
    %439 = arith.negf %161 : vector<8x64xf32>
    %440 = math.exp %439 : vector<8x64xf32>
    %cst_209 = arith.constant 1.000000e+00 : f32
    %441 = vector.broadcast %cst_209 : f32 to vector<8x64xf32>
    %442 = arith.addf %441, %440 : vector<8x64xf32>
    %443 = arith.divf %441, %442 : vector<8x64xf32>
    %444 = arith.mulf %161, %443 : vector<8x64xf32>
    %445 = arith.mulf %438, %444 : vector<8x64xf32>
    %c0_210 = arith.constant 0 : index
    %c0_211 = arith.constant 0 : index
    %446 = vector.load %arg25[%c0_210, %c0_211] : memref<64x32xbf16, #tpu.memory_space<vmem>>, vector<64x32xbf16>
    %447 = arith.truncf %445 : vector<8x64xf32> to vector<8x64xbf16>
    %cst_212 = arith.constant dense<0.000000e+00> : vector<8x32xf32>
    %448 = tpu.matmul %447, %446, %cst_212 {dimension_numbers = #tpu.dot_dimension_numbers<[1], [0], [0], [1], [0, 0, 1, 1], [], []>} : vector<8x64xbf16>, vector<64x32xbf16>, vector<8x32xf32> -> vector<8x32xf32>
    %449 = arith.addf %421, %448 : vector<8x32xf32>
    %450 = arith.mulf %449, %49 : vector<8x32xf32>
    %451 = arith.addf %450, %6 : vector<8x32xf32>
    %452 = vector.shape_cast %451 : vector<8x32xf32> to vector<1x8x32xf32>
    %c0_213 = arith.constant 0 : index
    %c0_214 = arith.constant 0 : index
    %c0_215 = arith.constant 0 : index
    %453 = vector.load %arg26[%c0_213, %c0_214, %c0_215] : memref<1x8x32xf32, #tpu.memory_space<vmem>>, vector<1x8x32xf32>
    tpu.vector_store %arg26[%c0_213, %c0_214, %c0_215], %452 {strides = array<i32>} : memref<1x8x32xf32, #tpu.memory_space<vmem>>, vector<1x8x32xf32>,
    return
  }
  func.func @transform_0(%arg0: i32) -> (i32, i32, i32) {
    %c0_i32 = arith.constant 0 : i32
    %c0_i32_0 = arith.constant 0 : i32
    %c0_i32_1 = arith.constant 0 : i32
    return %arg0, %c0_i32, %c0_i32_0 : i32, i32, i32
  }
  func.func @transform_1(%arg0: i32) -> (i32, i32) {
    %c0_i32 = arith.constant 0 : i32
    %c0_i32_0 = arith.constant 0 : i32
    %c0_i32_1 = arith.constant 0 : i32
    return %c0_i32, %c0_i32_0 : i32, i32
  }
  func.func @transform_2(%arg0: i32) -> (i32, i32) {
    %c0_i32 = arith.constant 0 : i32
    %c0_i32_0 = arith.constant 0 : i32
    %c0_i32_1 = arith.constant 0 : i32
    return %c0_i32, %c0_i32_0 : i32, i32
  }
  func.func @transform_3(%arg0: i32) -> (i32, i32) {
    %c0_i32 = arith.constant 0 : i32
    %c0_i32_0 = arith.constant 0 : i32
    %c0_i32_1 = arith.constant 0 : i32
    return %c0_i32, %c0_i32_0 : i32, i32
  }
  func.func @transform_4(%arg0: i32) -> (i32, i32) {
    %c0_i32 = arith.constant 0 : i32
    %c0_i32_0 = arith.constant 0 : i32
    %c0_i32_1 = arith.constant 0 : i32
    return %c0_i32, %c0_i32_0 : i32, i32
  }
  func.func @transform_5(%arg0: i32) -> (i32, i32) {
    %c0_i32 = arith.constant 0 : i32
    %c0_i32_0 = arith.constant 0 : i32
    %c0_i32_1 = arith.constant 0 : i32
    return %c0_i32, %c0_i32_0 : i32, i32
  }
  func.func @transform_6(%arg0: i32) -> (i32, i32) {
    %c0_i32 = arith.constant 0 : i32
    %c0_i32_0 = arith.constant 0 : i32
    %c0_i32_1 = arith.constant 0 : i32
    return %c0_i32, %c0_i32_0 : i32, i32
  }
  func.func @transform_7(%arg0: i32) -> (i32, i32) {
    %c0_i32 = arith.constant 0 : i32
    %c0_i32_0 = arith.constant 0 : i32
    %c0_i32_1 = arith.constant 0 : i32
    return %c0_i32, %c0_i32_0 : i32, i32
  }
  func.func @transform_8(%arg0: i32) -> (i32, i32) {
    %c0_i32 = arith.constant 0 : i32
    %c0_i32_0 = arith.constant 0 : i32
    %c0_i32_1 = arith.constant 0 : i32
    return %c0_i32, %c0_i32_0 : i32, i32
  }
  func.func @transform_9(%arg0: i32) -> (i32, i32) {
    %c0_i32 = arith.constant 0 : i32
    %c0_i32_0 = arith.constant 0 : i32
    %c0_i32_1 = arith.constant 0 : i32
    return %c0_i32, %c0_i32_0 : i32, i32
  }
  func.func @transform_10(%arg0: i32) -> (i32, i32) {
    %c0_i32 = arith.constant 0 : i32
    %c0_i32_0 = arith.constant 0 : i32
    %c0_i32_1 = arith.constant 0 : i32
    return %c0_i32, %c0_i32_0 : i32, i32
  }
  func.func @transform_11(%arg0: i32) -> (i32, i32) {
    %c0_i32 = arith.constant 0 : i32
    %c0_i32_0 = arith.constant 0 : i32
    %c0_i32_1 = arith.constant 0 : i32
    return %c0_i32, %c0_i32_0 : i32, i32
  }
  func.func @transform_12(%arg0: i32) -> (i32, i32) {
    %c0_i32 = arith.constant 0 : i32
    %c0_i32_0 = arith.constant 0 : i32
    %c0_i32_1 = arith.constant 0 : i32
    return %c0_i32, %c0_i32_0 : i32, i32
  }
  func.func @transform_13(%arg0: i32) -> (i32, i32) {
    %c0_i32 = arith.constant 0 : i32
    %c0_i32_0 = arith.constant 0 : i32
    %c0_i32_1 = arith.constant 0 : i32
    return %c0_i32, %c0_i32_0 : i32, i32
  }
  func.func @transform_14(%arg0: i32) -> (i32, i32) {
    %c0_i32 = arith.constant 0 : i32
    %c0_i32_0 = arith.constant 0 : i32
    %c0_i32_1 = arith.constant 0 : i32
    return %c0_i32, %c0_i32_0 : i32, i32
  }
  func.func @transform_15(%arg0: i32) -> (i32, i32) {
    %c0_i32 = arith.constant 0 : i32
    %c0_i32_0 = arith.constant 0 : i32
    %c0_i32_1 = arith.constant 0 : i32
    return %c0_i32, %c0_i32_0 : i32, i32
  }
  func.func @transform_16(%arg0: i32) -> (i32, i32) {
    %c0_i32 = arith.constant 0 : i32
    %c0_i32_0 = arith.constant 0 : i32
    %c0_i32_1 = arith.constant 0 : i32
    return %c0_i32, %c0_i32_0 : i32, i32
  }
  func.func @transform_17(%arg0: i32) -> (i32, i32) {
    %c0_i32 = arith.constant 0 : i32
    %c0_i32_0 = arith.constant 0 : i32
    %c0_i32_1 = arith.constant 0 : i32
    return %c0_i32, %c0_i32_0 : i32, i32
  }
  func.func @transform_18(%arg0: i32) -> (i32, i32) {
    %c0_i32 = arith.constant 0 : i32
    %c0_i32_0 = arith.constant 0 : i32
    %c0_i32_1 = arith.constant 0 : i32
    return %c0_i32, %c0_i32_0 : i32, i32
  }
  func.func @transform_19(%arg0: i32) -> (i32, i32) {
    %c0_i32 = arith.constant 0 : i32
    %c0_i32_0 = arith.constant 0 : i32
    %c0_i32_1 = arith.constant 0 : i32
    return %c0_i32, %c0_i32_0 : i32, i32
  }
  func.func @transform_20(%arg0: i32) -> (i32, i32) {
    %c0_i32 = arith.constant 0 : i32
    %c0_i32_0 = arith.constant 0 : i32
    %c0_i32_1 = arith.constant 0 : i32
    return %c0_i32, %c0_i32_0 : i32, i32
  }
  func.func @transform_21(%arg0: i32) -> (i32, i32) {
    %c0_i32 = arith.constant 0 : i32
    %c0_i32_0 = arith.constant 0 : i32
    %c0_i32_1 = arith.constant 0 : i32
    return %c0_i32, %c0_i32_0 : i32, i32
  }
  func.func @transform_22(%arg0: i32) -> (i32, i32) {
    %c0_i32 = arith.constant 0 : i32
    %c0_i32_0 = arith.constant 0 : i32
    %c0_i32_1 = arith.constant 0 : i32
    return %c0_i32, %c0_i32_0 : i32, i32
  }
  func.func @transform_23(%arg0: i32) -> (i32, i32) {
    %c0_i32 = arith.constant 0 : i32
    %c0_i32_0 = arith.constant 0 : i32
    %c0_i32_1 = arith.constant 0 : i32
    return %c0_i32, %c0_i32_0 : i32, i32
  }
  func.func @transform_24(%arg0: i32) -> (i32, i32) {
    %c0_i32 = arith.constant 0 : i32
    %c0_i32_0 = arith.constant 0 : i32
    %c0_i32_1 = arith.constant 0 : i32
    return %c0_i32, %c0_i32_0 : i32, i32
  }
  func.func @transform_25(%arg0: i32) -> (i32, i32, i32) {
    %c0_i32 = arith.constant 0 : i32
    %c0_i32_0 = arith.constant 0 : i32
    %c0_i32_1 = arith.constant 0 : i32
    return %arg0, %c0_i32, %c0_i32_0 : i32, i32, i32
  }
}

</mosaic_0001>

<llo_original>
// kernel: tpu_custom_call.1
$region0: #{tpu_custom_call.1}
  #allocation0 [shape = 'u32[]', space=smem, size = 0x4, offset = 0x4, fixed_abs, tag = 'smem constant byte address 0x4 - core index']
  #allocation1 [shape = 'u32[144,128]{1,0:T(1,128)}', space=vmem, size = 0x12000, scoped, tag = 'internal scratch']
  #allocation2 [shape = 'f32[1,128,64]{2,1,0:T(8,128)}', space=vmem, size = 0x10000, scoped, tag = 'scratch operand']
  #allocation3 [shape = 'f32[1,128,64]{2,1,0:T(8,128)}', space=vmem, size = 0x10000, scoped, tag = 'scratch operand']
  #allocation4 [shape = 'f32[1,128,64]{2,1,0:T(8,128)}', space=vmem, size = 0x10000, scoped, tag = 'scratch operand']
  #allocation5 [shape = 'f32[1,128,64]{2,1,0:T(8,128)}', space=vmem, size = 0x10000, scoped, tag = 'scratch operand']
  #allocation6 [shape = 'f32[1,128,64]{2,1,0:T(8,128)}', space=vmem, size = 0x10000, scoped, tag = 'scratch operand']
  #allocation7 [shape = 'f32[1,128,64]{2,1,0:T(8,128)}', space=vmem, size = 0x10000, scoped, tag = 'scratch operand']
  %s0 = inlined_call_operand.vmem [shape: f32[2,8,32], index: 0, kind: input, shape index: {}]
  %s1 = inlined_call_operand.vmem [shape: f32[1,32], index: 1, kind: input, shape index: {}]
  %s2 = inlined_call_operand.vmem [shape: f32[1,32], index: 2, kind: input, shape index: {}]
  %s3 = inlined_call_operand.vmem [shape: bf16[32,32], index: 3, kind: input, shape index: {}]
  %s4 = inlined_call_operand.vmem [shape: f32[1,32], index: 4, kind: input, shape index: {}]
  %s5 = inlined_call_operand.vmem [shape: bf16[32,96], index: 5, kind: input, shape index: {}]
  %s6 = inlined_call_operand.vmem [shape: f32[1,96], index: 6, kind: input, shape index: {}]
  %s7 = inlined_call_operand.vmem [shape: bf16[32,128], index: 7, kind: input, shape index: {}]
  %s8 = inlined_call_operand.vmem [shape: f32[4,64], index: 8, kind: input, shape index: {}]
  %s9 = inlined_call_operand.vmem [shape: f32[1,64], index: 9, kind: input, shape index: {}]
  %s10 = inlined_call_operand.vmem [shape: bf16[64,34], index: 10, kind: input, shape index: {}]
  %s11 = inlined_call_operand.vmem [shape: bf16[2,64], index: 11, kind: input, shape index: {}]
  %s12 = inlined_call_operand.vmem [shape: f32[1,64], index: 12, kind: input, shape index: {}]
  %s13 = inlined_call_operand.vmem [shape: f32[16,64], index: 13, kind: input, shape index: {}]
  %s14 = inlined_call_operand.vmem [shape: f32[1,64], index: 14, kind: input, shape index: {}]
  %s15 = inlined_call_operand.vmem [shape: bf16[64,32], index: 15, kind: input, shape index: {}]
  %s16 = inlined_call_operand.vmem [shape: bf16[32,128], index: 16, kind: input, shape index: {}]
  %s17 = inlined_call_operand.vmem [shape: f32[4,64], index: 17, kind: input, shape index: {}]
  %s18 = inlined_call_operand.vmem [shape: f32[1,64], index: 18, kind: input, shape index: {}]
  %s19 = inlined_call_operand.vmem [shape: bf16[64,34], index: 19, kind: input, shape index: {}]
  %s20 = inlined_call_operand.vmem [shape: bf16[2,64], index: 20, kind: input, shape index: {}]
  %s21 = inlined_call_operand.vmem [shape: f32[1,64], index: 21, kind: input, shape index: {}]
  %s22 = inlined_call_operand.vmem [shape: f32[16,64], index: 22, kind: input, shape index: {}]
  %s23 = inlined_call_operand.vmem [shape: f32[1,64], index: 23, kind: input, shape index: {}]
  %s24 = inlined_call_operand.vmem [shape: bf16[64,32], index: 24, kind: input, shape index: {}]
  %s25 = inlined_call_operand.hbm [shape: f32[2,8,32], index: 25, kind: output, shape index: {}]
  %s26 = sld [smem:[#allocation0]]
  $region133: #{tpu_custom_call.1} parent=0
    _
  %s28 = ssub.s32 1, %s26
  %s29 = scalar_select 0, %s28, %s26
  $region1: #{tpu_custom_call.1} parent=0
    #allocation8 [shape = 'u8[8192]{0}', space=vmem, size = 0x2000, scoped, tag = 'output window, operand 0']
    #allocation9 [shape = 's32[2]{0}', space=sflag, size = 0x8, scoped, tag = 'scoped memory for tpu_custom_call.1']
    %30 = vsyncpa [#allocation9], 0
    %s31 = scalar_lea.sflag [#allocation9], 1
    %32 = vsyncpa %s31, 0
    loop: start=0, step=1, limit=4
    $region2: #{tpu_custom_call.1} parent=1 // loop_pre_header
      _
    $region3: #{tpu_custom_call.1} parent=1 // loop_header
      %s34 = sphi 0, %s38
      %p35 = scmp.ge.s32.totalorder %s34, 4
      %s44 = sphi 0, %s46
      %s47 = sphi 0, %s44
      %s48 = sphi 0, %s47
      %s64 = sphi 0, %s48
      %s68 = sphi 0, %s68
      %s70 = sphi 0, %s68
      %s71 = sphi 0, %s70
      %s85 = sphi 0, %s71
      %s89 = sphi 0, %s89
      %s91 = sphi 0, %s89
      %s92 = sphi 0, %s91
      %s106 = sphi 0, %s92
      %s110 = sphi 0, %s110
      %s112 = sphi 0, %s110
      %s113 = sphi 0, %s112
      %s127 = sphi 0, %s113
      %s131 = sphi 0, %s131
      %s133 = sphi 0, %s131
      %s134 = sphi 0, %s133
      %s148 = sphi 0, %s134
      %s152 = sphi 0, %s152
      %s154 = sphi 0, %s152
      %s155 = sphi 0, %s154
      %s169 = sphi 0, %s155
      %s173 = sphi 0, %s173
      %s175 = sphi 0, %s173
      %s176 = sphi 0, %s175
      %s190 = sphi 0, %s176
      %s194 = sphi 0, %s194
      %s196 = sphi 0, %s194
      %s197 = sphi 0, %s196
      %s211 = sphi 0, %s197
      %s215 = sphi 0, %s215
      %s217 = sphi 0, %s215
      %s218 = sphi 0, %s217
      %s232 = sphi 0, %s218
      %s236 = sphi 0, %s236
      %s238 = sphi 0, %s236
      %s239 = sphi 0, %s238
      %s253 = sphi 0, %s239
      %s257 = sphi 0, %s257
      %s259 = sphi 0, %s257
      %s260 = sphi 0, %s259
      %s274 = sphi 0, %s260
      %s278 = sphi 0, %s278
      %s280 = sphi 0, %s278
      %s281 = sphi 0, %s280
      %s295 = sphi 0, %s281
      %s299 = sphi 0, %s299
      %s301 = sphi 0, %s299
      %s302 = sphi 0, %s301
      %s316 = sphi 0, %s302
      %s320 = sphi 0, %s320
      %s322 = sphi 0, %s320
      %s323 = sphi 0, %s322
      %s337 = sphi 0, %s323
      %s341 = sphi 0, %s341
      %s343 = sphi 0, %s341
      %s344 = sphi 0, %s343
      %s358 = sphi 0, %s344
      %s362 = sphi 0, %s362
      %s364 = sphi 0, %s362
      %s365 = sphi 0, %s364
      %s379 = sphi 0, %s365
      %s383 = sphi 0, %s383
      %s385 = sphi 0, %s383
      %s386 = sphi 0, %s385
      %s400 = sphi 0, %s386
      %s404 = sphi 0, %s404
      %s406 = sphi 0, %s404
      %s407 = sphi 0, %s406
      %s421 = sphi 0, %s407
      %s425 = sphi 0, %s425
      %s427 = sphi 0, %s425
      %s428 = sphi 0, %s427
      %s442 = sphi 0, %s428
      %s446 = sphi 0, %s446
      %s448 = sphi 0, %s446
      %s449 = sphi 0, %s448
      %s463 = sphi 0, %s449
      %s467 = sphi 0, %s467
      %s469 = sphi 0, %s467
      %s470 = sphi 0, %s469
      %s484 = sphi 0, %s470
      %s488 = sphi 0, %s488
      %s490 = sphi 0, %s488
      %s491 = sphi 0, %s490
      %s505 = sphi 0, %s491
      %s509 = sphi 0, %s509
      %s511 = sphi 0, %s509
      %s512 = sphi 0, %s511
      %s526 = sphi 0, %s512
      %s530 = sphi 0, %s530
      %s532 = sphi 0, %s530
      %s533 = sphi 0, %s532
      %s547 = sphi 0, %s533
      %s551 = sphi 0, %s551
      %s553 = sphi 0, %s551
      %s554 = sphi 0, %s553
      %s568 = sphi 0, %s554
      %s574 = sphi 0, %s576
      %s577 = sphi 0, %s574
      %s578 = sphi 0, %s577
      %s594 = sphi 0, %s578
    $region4: #{tpu_custom_call.1} parent=1 // loop_header_branch
      %37 = sbr.rel (%p35) target = $region8
    $region5: #{tpu_custom_call.1} parent=1 // loop_body
      %s39 = ssub.s32 %s34, 1
      %s40 = ssub.s32 %s34, 2
      %s41 = sadd.s32 %s34, 1
      %s42 = ssub.s32 %s34, %s41
      %p43 = scmp.eq.s32.totalorder %s42, 0
      %s45 = sadd.s32 %s44, 1
      %s46 = scalar_select %p43, %s44, %s45
      %p49 = pneg %p43
      %p50 = scmp.eq.s32.totalorder %s34, 1
      %p51 = por %p49, %p50
      %p52 = scmp.ne.s32.totalorder %s44, %s47
      %p53 = scmp.eq.s32.totalorder %s34, 0
      %p54 = por %p52, %p53
      %p55 = scmp.ne.s32.totalorder %s44, %s47
      %p56 = scmp.eq.s32.totalorder %s39, 1
      %p57 = por %p55, %p56
      %p58 = scmp.ne.s32.totalorder %s47, %s48
      %p59 = scmp.eq.s32.totalorder %s39, 0
      %p60 = por %p58, %p59
      %p61 = scmp.ne.s32.totalorder %s47, %s48
      %p62 = scmp.eq.s32.totalorder %s40, 1
      %p63 = por %p61, %p62
      %p65 = scmp.ne.s32.totalorder %s48, %s64
      %p66 = scmp.eq.s32.totalorder %s40, 0
      %p67 = por %p65, %p66
      %s69 = sadd.s32 %s68, 1
      %p72 = scmp.eq.s32.totalorder %s34, 1
      %p73 = scmp.ne.s32.totalorder %s68, %s70
      %p74 = scmp.eq.s32.totalorder %s34, 0
      %p75 = por %p73, %p74
      %p76 = scmp.ne.s32.totalorder %s68, %s70
      %p77 = scmp.eq.s32.totalorder %s39, 1
      %p78 = por %p76, %p77
      %p79 = scmp.ne.s32.totalorder %s70, %s71
      %p80 = scmp.eq.s32.totalorder %s39, 0
      %p81 = por %p79, %p80
      %p82 = scmp.ne.s32.totalorder %s70, %s71
      %p83 = scmp.eq.s32.totalorder %s40, 1
      %p84 = por %p82, %p83
      %p86 = scmp.ne.s32.totalorder %s71, %s85
      %p87 = scmp.eq.s32.totalorder %s40, 0
      %p88 = por %p86, %p87
      %s90 = sadd.s32 %s89, 1
      %p93 = scmp.eq.s32.totalorder %s34, 1
      %p94 = scmp.ne.s32.totalorder %s89, %s91
      %p95 = scmp.eq.s32.totalorder %s34, 0
      %p96 = por %p94, %p95
      %p97 = scmp.ne.s32.totalorder %s89, %s91
      %p98 = scmp.eq.s32.totalorder %s39, 1
      %p99 = por %p97, %p98
      %p100 = scmp.ne.s32.totalorder %s91, %s92
      %p101 = scmp.eq.s32.totalorder %s39, 0
      %p102 = por %p100, %p101
      %p103 = scmp.ne.s32.totalorder %s91, %s92
      %p104 = scmp.eq.s32.totalorder %s40, 1
      %p105 = por %p103, %p104
      %p107 = scmp.ne.s32.totalorder %s92, %s106
      %p108 = scmp.eq.s32.totalorder %s40, 0
      %p109 = por %p107, %p108
      %s111 = sadd.s32 %s110, 1
      %p114 = scmp.eq.s32.totalorder %s34, 1
      %p115 = scmp.ne.s32.totalorder %s110, %s112
      %p116 = scmp.eq.s32.totalorder %s34, 0
      %p117 = por %p115, %p116
      %p118 = scmp.ne.s32.totalorder %s110, %s112
      %p119 = scmp.eq.s32.totalorder %s39, 1
      %p120 = por %p118, %p119
      %p121 = scmp.ne.s32.totalorder %s112, %s113
      %p122 = scmp.eq.s32.totalorder %s39, 0
      %p123 = por %p121, %p122
      %p124 = scmp.ne.s32.totalorder %s112, %s113
      %p125 = scmp.eq.s32.totalorder %s40, 1
      %p126 = por %p124, %p125
      %p128 = scmp.ne.s32.totalorder %s113, %s127
      %p129 = scmp.eq.s32.totalorder %s40, 0
      %p130 = por %p128, %p129
      %s132 = sadd.s32 %s131, 1
      %p135 = scmp.eq.s32.totalorder %s34, 1
      %p136 = scmp.ne.s32.totalorder %s131, %s133
      %p137 = scmp.eq.s32.totalorder %s34, 0
      %p138 = por %p136, %p137
      %p139 = scmp.ne.s32.totalorder %s131, %s133
      %p140 = scmp.eq.s32.totalorder %s39, 1
      %p141 = por %p139, %p140
      %p142 = scmp.ne.s32.totalorder %s133, %s134
      %p143 = scmp.eq.s32.totalorder %s39, 0
      %p144 = por %p142, %p143
      %p145 = scmp.ne.s32.totalorder %s133, %s134
      %p146 = scmp.eq.s32.totalorder %s40, 1
      %p147 = por %p145, %p146
      %p149 = scmp.ne.s32.totalorder %s134, %s148
      %p150 = scmp.eq.s32.totalorder %s40, 0
      %p151 = por %p149, %p150
      %s153 = sadd.s32 %s152, 1
      %p156 = scmp.eq.s32.totalorder %s34, 1
      %p157 = scmp.ne.s32.totalorder %s152, %s154
      %p158 = scmp.eq.s32.totalorder %s34, 0
      %p159 = por %p157, %p158
      %p160 = scmp.ne.s32.totalorder %s152, %s154
      %p161 = scmp.eq.s32.totalorder %s39, 1
      %p162 = por %p160, %p161
      %p163 = scmp.ne.s32.totalorder %s154, %s155
      %p164 = scmp.eq.s32.totalorder %s39, 0
      %p165 = por %p163, %p164
      %p166 = scmp.ne.s32.totalorder %s154, %s155
      %p167 = scmp.eq.s32.totalorder %s40, 1
      %p168 = por %p166, %p167
      %p170 = scmp.ne.s32.totalorder %s155, %s169
      %p171 = scmp.eq.s32.totalorder %s40, 0
      %p172 = por %p170, %p171
      %s174 = sadd.s32 %s173, 1
      %p177 = scmp.eq.s32.totalorder %s34, 1
      %p178 = scmp.ne.s32.totalorder %s173, %s175
      %p179 = scmp.eq.s32.totalorder %s34, 0
      %p180 = por %p178, %p179
      %p181 = scmp.ne.s32.totalorder %s173, %s175
      %p182 = scmp.eq.s32.totalorder %s39, 1
      %p183 = por %p181, %p182
      %p184 = scmp.ne.s32.totalorder %s175, %s176
      %p185 = scmp.eq.s32.totalorder %s39, 0
      %p186 = por %p184, %p185
      %p187 = scmp.ne.s32.totalorder %s175, %s176
      %p188 = scmp.eq.s32.totalorder %s40, 1
      %p189 = por %p187, %p188
      %p191 = scmp.ne.s32.totalorder %s176, %s190
      %p192 = scmp.eq.s32.totalorder %s40, 0
      %p193 = por %p191, %p192
      %s195 = sadd.s32 %s194, 1
      %p198 = scmp.eq.s32.totalorder %s34, 1
      %p199 = scmp.ne.s32.totalorder %s194, %s196
      %p200 = scmp.eq.s32.totalorder %s34, 0
      %p201 = por %p199, %p200
      %p202 = scmp.ne.s32.totalorder %s194, %s196
      %p203 = scmp.eq.s32.totalorder %s39, 1
      %p204 = por %p202, %p203
      %p205 = scmp.ne.s32.totalorder %s196, %s197
      %p206 = scmp.eq.s32.totalorder %s39, 0
      %p207 = por %p205, %p206
      %p208 = scmp.ne.s32.totalorder %s196, %s197
      %p209 = scmp.eq.s32.totalorder %s40, 1
      %p210 = por %p208, %p209
      %p212 = scmp.ne.s32.totalorder %s197, %s211
      %p213 = scmp.eq.s32.totalorder %s40, 0
      %p214 = por %p212, %p213
      %s216 = sadd.s32 %s215, 1
      %p219 = scmp.eq.s32.totalorder %s34, 1
      %p220 = scmp.ne.s32.totalorder %s215, %s217
      %p221 = scmp.eq.s32.totalorder %s34, 0
      %p222 = por %p220, %p221
      %p223 = scmp.ne.s32.totalorder %s215, %s217
      %p224 = scmp.eq.s32.totalorder %s39, 1
      %p225 = por %p223, %p224
      %p226 = scmp.ne.s32.totalorder %s217, %s218
      %p227 = scmp.eq.s32.totalorder %s39, 0
      %p228 = por %p226, %p227
      %p229 = scmp.ne.s32.totalorder %s217, %s218
      %p230 = scmp.eq.s32.totalorder %s40, 1
      %p231 = por %p229, %p230
      %p233 = scmp.ne.s32.totalorder %s218, %s232
      %p234 = scmp.eq.s32.totalorder %s40, 0
      %p235 = por %p233, %p234
      %s237 = sadd.s32 %s236, 1
      %p240 = scmp.eq.s32.totalorder %s34, 1
      %p241 = scmp.ne.s32.totalorder %s236, %s238
      %p242 = scmp.eq.s32.totalorder %s34, 0
      %p243 = por %p241, %p242
      %p244 = scmp.ne.s32.totalorder %s236, %s238
      %p245 = scmp.eq.s32.totalorder %s39, 1
      %p246 = por %p244, %p245
      %p247 = scmp.ne.s32.totalorder %s238, %s239
      %p248 = scmp.eq.s32.totalorder %s39, 0
      %p249 = por %p247, %p248
      %p250 = scmp.ne.s32.totalorder %s238, %s239
      %p251 = scmp.eq.s32.totalorder %s40, 1
      %p252 = por %p250, %p251
      %p254 = scmp.ne.s32.totalorder %s239, %s253
      %p255 = scmp.eq.s32.totalorder %s40, 0
      %p256 = por %p254, %p255
      %s258 = sadd.s32 %s257, 1
      %p261 = scmp.eq.s32.totalorder %s34, 1
      %p262 = scmp.ne.s32.totalorder %s257, %s259
      %p263 = scmp.eq.s32.totalorder %s34, 0
      %p264 = por %p262, %p263
      %p265 = scmp.ne.s32.totalorder %s257, %s259
      %p266 = scmp.eq.s32.totalorder %s39, 1
      %p267 = por %p265, %p266
      %p268 = scmp.ne.s32.totalorder %s259, %s260
      %p269 = scmp.eq.s32.totalorder %s39, 0
      %p270 = por %p268, %p269
      %p271 = scmp.ne.s32.totalorder %s259, %s260
      %p272 = scmp.eq.s32.totalorder %s40, 1
      %p273 = por %p271, %p272
      %p275 = scmp.ne.s32.totalorder %s260, %s274
      %p276 = scmp.eq.s32.totalorder %s40, 0
      %p277 = por %p275, %p276
      %s279 = sadd.s32 %s278, 1
      %p282 = scmp.eq.s32.totalorder %s34, 1
      %p283 = scmp.ne.s32.totalorder %s278, %s280
      %p284 = scmp.eq.s32.totalorder %s34, 0
      %p285 = por %p283, %p284
      %p286 = scmp.ne.s32.totalorder %s278, %s280
      %p287 = scmp.eq.s32.totalorder %s39, 1
      %p288 = por %p286, %p287
      %p289 = scmp.ne.s32.totalorder %s280, %s281
      %p290 = scmp.eq.s32.totalorder %s39, 0
      %p291 = por %p289, %p290
      %p292 = scmp.ne.s32.totalorder %s280, %s281
      %p293 = scmp.eq.s32.totalorder %s40, 1
      %p294 = por %p292, %p293
      %p296 = scmp.ne.s32.totalorder %s281, %s295
      %p297 = scmp.eq.s32.totalorder %s40, 0
      %p298 = por %p296, %p297
      %s300 = sadd.s32 %s299, 1
      %p303 = scmp.eq.s32.totalorder %s34, 1
      %p304 = scmp.ne.s32.totalorder %s299, %s301
      %p305 = scmp.eq.s32.totalorder %s34, 0
      %p306 = por %p304, %p305
      %p307 = scmp.ne.s32.totalorder %s299, %s301
      %p308 = scmp.eq.s32.totalorder %s39, 1
      %p309 = por %p307, %p308
      %p310 = scmp.ne.s32.totalorder %s301, %s302
      %p311 = scmp.eq.s32.totalorder %s39, 0
      %p312 = por %p310, %p311
      %p313 = scmp.ne.s32.totalorder %s301, %s302
      %p314 = scmp.eq.s32.totalorder %s40, 1
      %p315 = por %p313, %p314
      %p317 = scmp.ne.s32.totalorder %s302, %s316
      %p318 = scmp.eq.s32.totalorder %s40, 0
      %p319 = por %p317, %p318
      %s321 = sadd.s32 %s320, 1
      %p324 = scmp.eq.s32.totalorder %s34, 1
      %p325 = scmp.ne.s32.totalorder %s320, %s322
      %p326 = scmp.eq.s32.totalorder %s34, 0
      %p327 = por %p325, %p326
      %p328 = scmp.ne.s32.totalorder %s320, %s322
      %p329 = scmp.eq.s32.totalorder %s39, 1
      %p330 = por %p328, %p329
      %p331 = scmp.ne.s32.totalorder %s322, %s323
      %p332 = scmp.eq.s32.totalorder %s39, 0
      %p333 = por %p331, %p332
      %p334 = scmp.ne.s32.totalorder %s322, %s323
      %p335 = scmp.eq.s32.totalorder %s40, 1
      %p336 = por %p334, %p335
      %p338 = scmp.ne.s32.totalorder %s323, %s337
      %p339 = scmp.eq.s32.totalorder %s40, 0
      %p340 = por %p338, %p339
      %s342 = sadd.s32 %s341, 1
      %p345 = scmp.eq.s32.totalorder %s34, 1
      %p346 = scmp.ne.s32.totalorder %s341, %s343
      %p347 = scmp.eq.s32.totalorder %s34, 0
      %p348 = por %p346, %p347
      %p349 = scmp.ne.s32.totalorder %s341, %s343
      %p350 = scmp.eq.s32.totalorder %s39, 1
      %p351 = por %p349, %p350
      %p352 = scmp.ne.s32.totalorder %s343, %s344
      %p353 = scmp.eq.s32.totalorder %s39, 0
      %p354 = por %p352, %p353
      %p355 = scmp.ne.s32.totalorder %s343, %s344
      %p356 = scmp.eq.s32.totalorder %s40, 1
      %p357 = por %p355, %p356
      %p359 = scmp.ne.s32.totalorder %s344, %s358
      %p360 = scmp.eq.s32.totalorder %s40, 0
      %p361 = por %p359, %p360
      %s363 = sadd.s32 %s362, 1
      %p366 = scmp.eq.s32.totalorder %s34, 1
      %p367 = scmp.ne.s32.totalorder %s362, %s364
      %p368 = scmp.eq.s32.totalorder %s34, 0
      %p369 = por %p367, %p368
      %p370 = scmp.ne.s32.totalorder %s362, %s364
      %p371 = scmp.eq.s32.totalorder %s39, 1
      %p372 = por %p370, %p371
      %p373 = scmp.ne.s32.totalorder %s364, %s365
      %p374 = scmp.eq.s32.totalorder %s39, 0
      %p375 = por %p373, %p374
      %p376 = scmp.ne.s32.totalorder %s364, %s365
      %p377 = scmp.eq.s32.totalorder %s40, 1
      %p378 = por %p376, %p377
      %p380 = scmp.ne.s32.totalorder %s365, %s379
      %p381 = scmp.eq.s32.totalorder %s40, 0
      %p382 = por %p380, %p381
      %s384 = sadd.s32 %s383, 1
      %p387 = scmp.eq.s32.totalorder %s34, 1
      %p388 = scmp.ne.s32.totalorder %s383, %s385
      %p389 = scmp.eq.s32.totalorder %s34, 0
      %p390 = por %p388, %p389
      %p391 = scmp.ne.s32.totalorder %s383, %s385
      %p392 = scmp.eq.s32.totalorder %s39, 1
      %p393 = por %p391, %p392
      %p394 = scmp.ne.s32.totalorder %s385, %s386
      %p395 = scmp.eq.s32.totalorder %s39, 0
      %p396 = por %p394, %p395
      %p397 = scmp.ne.s32.totalorder %s385, %s386
      %p398 = scmp.eq.s32.totalorder %s40, 1
      %p399 = por %p397, %p398
      %p401 = scmp.ne.s32.totalorder %s386, %s400
      %p402 = scmp.eq.s32.totalorder %s40, 0
      %p403 = por %p401, %p402
      %s405 = sadd.s32 %s404, 1
      %p408 = scmp.eq.s32.totalorder %s34, 1
      %p409 = scmp.ne.s32.totalorder %s404, %s406
      %p410 = scmp.eq.s32.totalorder %s34, 0
      %p411 = por %p409, %p410
      %p412 = scmp.ne.s32.totalorder %s404, %s406
      %p413 = scmp.eq.s32.totalorder %s39, 1
      %p414 = por %p412, %p413
      %p415 = scmp.ne.s32.totalorder %s406, %s407
      %p416 = scmp.eq.s32.totalorder %s39, 0
      %p417 = por %p415, %p416
      %p418 = scmp.ne.s32.totalorder %s406, %s407
      %p419 = scmp.eq.s32.totalorder %s40, 1
      %p420 = por %p418, %p419
      %p422 = scmp.ne.s32.totalorder %s407, %s421
      %p423 = scmp.eq.s32.totalorder %s40, 0
      %p424 = por %p422, %p423
      %s426 = sadd.s32 %s425, 1
      %p429 = scmp.eq.s32.totalorder %s34, 1
      %p430 = scmp.ne.s32.totalorder %s425, %s427
      %p431 = scmp.eq.s32.totalorder %s34, 0
      %p432 = por %p430, %p431
      %p433 = scmp.ne.s32.totalorder %s425, %s427
      %p434 = scmp.eq.s32.totalorder %s39, 1
      %p435 = por %p433, %p434
      %p436 = scmp.ne.s32.totalorder %s427, %s428
      %p437 = scmp.eq.s32.totalorder %s39, 0
      %p438 = por %p436, %p437
      %p439 = scmp.ne.s32.totalorder %s427, %s428
      %p440 = scmp.eq.s32.totalorder %s40, 1
      %p441 = por %p439, %p440
      %p443 = scmp.ne.s32.totalorder %s428, %s442
      %p444 = scmp.eq.s32.totalorder %s40, 0
      %p445 = por %p443, %p444
      %s447 = sadd.s32 %s446, 1
      %p450 = scmp.eq.s32.totalorder %s34, 1
      %p451 = scmp.ne.s32.totalorder %s446, %s448
      %p452 = scmp.eq.s32.totalorder %s34, 0
      %p453 = por %p451, %p452
      %p454 = scmp.ne.s32.totalorder %s446, %s448
      %p455 = scmp.eq.s32.totalorder %s39, 1
      %p456 = por %p454, %p455
      %p457 = scmp.ne.s32.totalorder %s448, %s449
      %p458 = scmp.eq.s32.totalorder %s39, 0
      %p459 = por %p457, %p458
      %p460 = scmp.ne.s32.totalorder %s448, %s449
      %p461 = scmp.eq.s32.totalorder %s40, 1
      %p462 = por %p460, %p461
      %p464 = scmp.ne.s32.totalorder %s449, %s463
      %p465 = scmp.eq.s32.totalorder %s40, 0
      %p466 = por %p464, %p465
      %s468 = sadd.s32 %s467, 1
      %p471 = scmp.eq.s32.totalorder %s34, 1
      %p472 = scmp.ne.s32.totalorder %s467, %s469
      %p473 = scmp.eq.s32.totalorder %s34, 0
      %p474 = por %p472, %p473
      %p475 = scmp.ne.s32.totalorder %s467, %s469
      %p476 = scmp.eq.s32.totalorder %s39, 1
      %p477 = por %p475, %p476
      %p478 = scmp.ne.s32.totalorder %s469, %s470
      %p479 = scmp.eq.s32.totalorder %s39, 0
      %p480 = por %p478, %p479
      %p481 = scmp.ne.s32.totalorder %s469, %s470
      %p482 = scmp.eq.s32.totalorder %s40, 1
      %p483 = por %p481, %p482
      %p485 = scmp.ne.s32.totalorder %s470, %s484
      %p486 = scmp.eq.s32.totalorder %s40, 0
      %p487 = por %p485, %p486
      %s489 = sadd.s32 %s488, 1
      %p492 = scmp.eq.s32.totalorder %s34, 1
      %p493 = scmp.ne.s32.totalorder %s488, %s490
      %p494 = scmp.eq.s32.totalorder %s34, 0
      %p495 = por %p493, %p494
      %p496 = scmp.ne.s32.totalorder %s488, %s490
      %p497 = scmp.eq.s32.totalorder %s39, 1
      %p498 = por %p496, %p497
      %p499 = scmp.ne.s32.totalorder %s490, %s491
      %p500 = scmp.eq.s32.totalorder %s39, 0
      %p501 = por %p499, %p500
      %p502 = scmp.ne.s32.totalorder %s490, %s491
      %p503 = scmp.eq.s32.totalorder %s40, 1
      %p504 = por %p502, %p503
      %p506 = scmp.ne.s32.totalorder %s491, %s505
      %p507 = scmp.eq.s32.totalorder %s40, 0
      %p508 = por %p506, %p507
      %s510 = sadd.s32 %s509, 1
      %p513 = scmp.eq.s32.totalorder %s34, 1
      %p514 = scmp.ne.s32.totalorder %s509, %s511
      %p515 = scmp.eq.s32.totalorder %s34, 0
      %p516 = por %p514, %p515
      %p517 = scmp.ne.s32.totalorder %s509, %s511
      %p518 = scmp.eq.s32.totalorder %s39, 1
      %p519 = por %p517, %p518
      %p520 = scmp.ne.s32.totalorder %s511, %s512
      %p521 = scmp.eq.s32.totalorder %s39, 0
      %p522 = por %p520, %p521
      %p523 = scmp.ne.s32.totalorder %s511, %s512
      %p524 = scmp.eq.s32.totalorder %s40, 1
      %p525 = por %p523, %p524
      %p527 = scmp.ne.s32.totalorder %s512, %s526
      %p528 = scmp.eq.s32.totalorder %s40, 0
      %p529 = por %p527, %p528
      %s531 = sadd.s32 %s530, 1
      %p534 = scmp.eq.s32.totalorder %s34, 1
      %p535 = scmp.ne.s32.totalorder %s530, %s532
      %p536 = scmp.eq.s32.totalorder %s34, 0
      %p537 = por %p535, %p536
      %p538 = scmp.ne.s32.totalorder %s530, %s532
      %p539 = scmp.eq.s32.totalorder %s39, 1
      %p540 = por %p538, %p539
      %p541 = scmp.ne.s32.totalorder %s532, %s533
      %p542 = scmp.eq.s32.totalorder %s39, 0
      %p543 = por %p541, %p542
      %p544 = scmp.ne.s32.totalorder %s532, %s533
      %p545 = scmp.eq.s32.totalorder %s40, 1
      %p546 = por %p544, %p545
      %p548 = scmp.ne.s32.totalorder %s533, %s547
      %p549 = scmp.eq.s32.totalorder %s40, 0
      %p550 = por %p548, %p549
      %s552 = sadd.s32 %s551, 1
      %p555 = scmp.eq.s32.totalorder %s34, 1
      %p556 = scmp.ne.s32.totalorder %s551, %s553
      %p557 = scmp.eq.s32.totalorder %s34, 0
      %p558 = por %p556, %p557
      %p559 = scmp.ne.s32.totalorder %s551, %s553
      %p560 = scmp.eq.s32.totalorder %s39, 1
      %p561 = por %p559, %p560
      %p562 = scmp.ne.s32.totalorder %s553, %s554
      %p563 = scmp.eq.s32.totalorder %s39, 0
      %p564 = por %p562, %p563
      %p565 = scmp.ne.s32.totalorder %s553, %s554
      %p566 = scmp.eq.s32.totalorder %s40, 1
      %p567 = por %p565, %p566
      %p569 = scmp.ne.s32.totalorder %s554, %s568
      %p570 = scmp.eq.s32.totalorder %s40, 0
      %p571 = por %p569, %p570
      %s572 = ssub.s32 %s34, %s41
      %p573 = scmp.eq.s32.totalorder %s572, 0
      %s575 = sadd.s32 %s574, 1
      %s576 = scalar_select %p573, %s574, %s575
      %p579 = pneg %p573
      %p580 = scmp.eq.s32.totalorder %s34, 1
      %p581 = por %p579, %p580
      %p582 = scmp.ne.s32.totalorder %s574, %s577
      %p583 = scmp.eq.s32.totalorder %s34, 0
      %p584 = por %p582, %p583
      %p585 = scmp.ne.s32.totalorder %s574, %s577
      %p586 = scmp.eq.s32.totalorder %s39, 1
      %p587 = por %p585, %p586
      %p588 = scmp.ne.s32.totalorder %s577, %s578
      %p589 = scmp.eq.s32.totalorder %s39, 0
      %p590 = por %p588, %p589
      %p591 = scmp.ne.s32.totalorder %s577, %s578
      %p592 = scmp.eq.s32.totalorder %s40, 1
      %p593 = por %p591, %p592
      %p595 = scmp.ne.s32.totalorder %s578, %s594
      %p596 = scmp.eq.s32.totalorder %s40, 0
      %p597 = por %p595, %p596
      %p598 = scmp.le.s32.totalorder 1, %s34
      %p599 = scmp.lt.s32.totalorder %s34, 3
      %p600 = pnand %p598, %p599
      %p601 = pneg %p600
      // Predicated region
      $region9: #{tpu_custom_call.1} parent=5 // pred_check
        _
      $region10: #{tpu_custom_call.1} parent=5 // pred_check_branch
        %603 = sbr.rel (%p600) target = $region12
      $region11: #{tpu_custom_call.1} parent=5 // pred_region
        %s604 = ssub.s32 %s34, 1
        // Predicated region
        $region13: #{tpu_custom_call.1} parent=11 // pred_check
          %p605 = pneg %p81
        $region14: #{tpu_custom_call.1} parent=11 // pred_check_branch
          %607 = sbr.rel (%p605) target = $region16
        $region15: #{tpu_custom_call.1} parent=11 // pred_region
          _
        $region16: #{tpu_custom_call.1} parent=11 // pred_fallthru
          _
        // Predicated region
        $region17: #{tpu_custom_call.1} parent=11 // pred_check
          %p608 = pneg %p102
        $region18: #{tpu_custom_call.1} parent=11 // pred_check_branch
          %610 = sbr.rel (%p608) target = $region20
        $region19: #{tpu_custom_call.1} parent=11 // pred_region
          _
        $region20: #{tpu_custom_call.1} parent=11 // pred_fallthru
          _
        // Predicated region
        $region21: #{tpu_custom_call.1} parent=11 // pred_check
          %p611 = pneg %p123
        $region22: #{tpu_custom_call.1} parent=11 // pred_check_branch
          %613 = sbr.rel (%p611) target = $region24
        $region23: #{tpu_custom_call.1} parent=11 // pred_region
          _
        $region24: #{tpu_custom_call.1} parent=11 // pred_fallthru
          _
        // Predicated region
        $region25: #{tpu_custom_call.1} parent=11 // pred_check
          %p614 = pneg %p144
        $region26: #{tpu_custom_call.1} parent=11 // pred_check_branch
          %616 = sbr.rel (%p614) target = $region28
        $region27: #{tpu_custom_call.1} parent=11 // pred_region
          _
        $region28: #{tpu_custom_call.1} parent=11 // pred_fallthru
          _
        // Predicated region
        $region29: #{tpu_custom_call.1} parent=11 // pred_check
          %p617 = pneg %p165
        $region30: #{tpu_custom_call.1} parent=11 // pred_check_branch
          %619 = sbr.rel (%p617) target = $region32
        $region31: #{tpu_custom_call.1} parent=11 // pred_region
          _
        $region32: #{tpu_custom_call.1} parent=11 // pred_fallthru
          _
        // Predicated region
        $region33: #{tpu_custom_call.1} parent=11 // pred_check
          %p620 = pneg %p186
        $region34: #{tpu_custom_call.1} parent=11 // pred_check_branch
          %622 = sbr.rel (%p620) target = $region36
        $region35: #{tpu_custom_call.1} parent=11 // pred_region
          _
        $region36: #{tpu_custom_call.1} parent=11 // pred_fallthru
          _
        // Predicated region
        $region37: #{tpu_custom_call.1} parent=11 // pred_check
          %p623 = pneg %p207
        $region38: #{tpu_custom_call.1} parent=11 // pred_check_branch
          %625 = sbr.rel (%p623) target = $region40
        $region39: #{tpu_custom_call.1} parent=11 // pred_region
          _
        $region40: #{tpu_custom_call.1} parent=11 // pred_fallthru
          _
        // Predicated region
        $region41: #{tpu_custom_call.1} parent=11 // pred_check
          %p626 = pneg %p228
        $region42: #{tpu_custom_call.1} parent=11 // pred_check_branch
          %628 = sbr.rel (%p626) target = $region44
        $region43: #{tpu_custom_call.1} parent=11 // pred_region
          _
        $region44: #{tpu_custom_call.1} parent=11 // pred_fallthru
          _
        // Predicated region
        $region45: #{tpu_custom_call.1} parent=11 // pred_check
          %p629 = pneg %p249
        $region46: #{tpu_custom_call.1} parent=11 // pred_check_branch
          %631 = sbr.rel (%p629) target = $region48
        $region47: #{tpu_custom_call.1} parent=11 // pred_region
          _
        $region48: #{tpu_custom_call.1} parent=11 // pred_fallthru
          _
        // Predicated region
        $region49: #{tpu_custom_call.1} parent=11 // pred_check
          %p632 = pneg %p270
        $region50: #{tpu_custom_call.1} parent=11 // pred_check_branch
          %634 = sbr.rel (%p632) target = $region52
        $region51: #{tpu_custom_call.1} parent=11 // pred_region
          _
        $region52: #{tpu_custom_call.1} parent=11 // pred_fallthru
          _
        // Predicated region
        $region53: #{tpu_custom_call.1} parent=11 // pred_check
          %p635 = pneg %p291
        $region54: #{tpu_custom_call.1} parent=11 // pred_check_branch
          %637 = sbr.rel (%p635) target = $region56
        $region55: #{tpu_custom_call.1} parent=11 // pred_region
          _
        $region56: #{tpu_custom_call.1} parent=11 // pred_fallthru
          _
        // Predicated region
        $region57: #{tpu_custom_call.1} parent=11 // pred_check
          %p638 = pneg %p312
        $region58: #{tpu_custom_call.1} parent=11 // pred_check_branch
          %640 = sbr.rel (%p638) target = $region60
        $region59: #{tpu_custom_call.1} parent=11 // pred_region
          _
        $region60: #{tpu_custom_call.1} parent=11 // pred_fallthru
          _
        // Predicated region
        $region61: #{tpu_custom_call.1} parent=11 // pred_check
          %p641 = pneg %p333
        $region62: #{tpu_custom_call.1} parent=11 // pred_check_branch
          %643 = sbr.rel (%p641) target = $region64
        $region63: #{tpu_custom_call.1} parent=11 // pred_region
          _
        $region64: #{tpu_custom_call.1} parent=11 // pred_fallthru
          _
        // Predicated region
        $region65: #{tpu_custom_call.1} parent=11 // pred_check
          %p644 = pneg %p354
        $region66: #{tpu_custom_call.1} parent=11 // pred_check_branch
          %646 = sbr.rel (%p644) target = $region68
        $region67: #{tpu_custom_call.1} parent=11 // pred_region
          _
        $region68: #{tpu_custom_call.1} parent=11 // pred_fallthru
          _
        // Predicated region
        $region69: #{tpu_custom_call.1} parent=11 // pred_check
          %p647 = pneg %p375
        $region70: #{tpu_custom_call.1} parent=11 // pred_check_branch
          %649 = sbr.rel (%p647) target = $region72
        $region71: #{tpu_custom_call.1} parent=11 // pred_region
          _
        $region72: #{tpu_custom_call.1} parent=11 // pred_fallthru
          _
        // Predicated region
        $region73: #{tpu_custom_call.1} parent=11 // pred_check
          %p650 = pneg %p396
        $region74: #{tpu_custom_call.1} parent=11 // pred_check_branch
          %652 = sbr.rel (%p650) target = $region76
        $region75: #{tpu_custom_call.1} parent=11 // pred_region
          _
        $region76: #{tpu_custom_call.1} parent=11 // pred_fallthru
          _
        // Predicated region
        $region77: #{tpu_custom_call.1} parent=11 // pred_check
          %p653 = pneg %p417
        $region78: #{tpu_custom_call.1} parent=11 // pred_check_branch
          %655 = sbr.rel (%p653) target = $region80
        $region79: #{tpu_custom_call.1} parent=11 // pred_region
          _
        $region80: #{tpu_custom_call.1} parent=11 // pred_fallthru
          _
        // Predicated region
        $region81: #{tpu_custom_call.1} parent=11 // pred_check
          %p656 = pneg %p438
        $region82: #{tpu_custom_call.1} parent=11 // pred_check_branch
          %658 = sbr.rel (%p656) target = $region84
        $region83: #{tpu_custom_call.1} parent=11 // pred_region
          _
        $region84: #{tpu_custom_call.1} parent=11 // pred_fallthru
          _
        // Predicated region
        $region85: #{tpu_custom_call.1} parent=11 // pred_check
          %p659 = pneg %p459
        $region86: #{tpu_custom_call.1} parent=11 // pred_check_branch
          %661 = sbr.rel (%p659) target = $region88
        $region87: #{tpu_custom_call.1} parent=11 // pred_region
          _
        $region88: #{tpu_custom_call.1} parent=11 // pred_fallthru
          _
        // Predicated region
        $region89: #{tpu_custom_call.1} parent=11 // pred_check
          %p662 = pneg %p480
        $region90: #{tpu_custom_call.1} parent=11 // pred_check_branch
          %664 = sbr.rel (%p662) target = $region92
        $region91: #{tpu_custom_call.1} parent=11 // pred_region
          _
        $region92: #{tpu_custom_call.1} parent=11 // pred_fallthru
          _
        // Predicated region
        $region93: #{tpu_custom_call.1} parent=11 // pred_check
          %p665 = pneg %p501
        $region94: #{tpu_custom_call.1} parent=11 // pred_check_branch
          %667 = sbr.rel (%p665) target = $region96
        $region95: #{tpu_custom_call.1} parent=11 // pred_region
          _
        $region96: #{tpu_custom_call.1} parent=11 // pred_fallthru
          _
        // Predicated region
        $region97: #{tpu_custom_call.1} parent=11 // pred_check
          %p668 = pneg %p522
        $region98: #{tpu_custom_call.1} parent=11 // pred_check_branch
          %670 = sbr.rel (%p668) target = $region100
        $region99: #{tpu_custom_call.1} parent=11 // pred_region
          _
        $region100: #{tpu_custom_call.1} parent=11 // pred_fallthru
          _
        // Predicated region
        $region101: #{tpu_custom_call.1} parent=11 // pred_check
          %p671 = pneg %p543
        $region102: #{tpu_custom_call.1} parent=11 // pred_check_branch
          %673 = sbr.rel (%p671) target = $region104
        $region103: #{tpu_custom_call.1} parent=11 // pred_region
          _
        $region104: #{tpu_custom_call.1} parent=11 // pred_fallthru
          _
        // Predicated region
        $region105: #{tpu_custom_call.1} parent=11 // pred_check
          %p674 = pneg %p564
        $region106: #{tpu_custom_call.1} parent=11 // pred_check_branch
          %676 = sbr.rel (%p674) target = $region108
        $region107: #{tpu_custom_call.1} parent=11 // pred_region
          _
        $region108: #{tpu_custom_call.1} parent=11 // pred_fallthru
          _
      $region12: #{tpu_custom_call.1} parent=5 // pred_fallthru
        _
      %p677 = scmp.lt.s32.totalorder %s34, 2
      // Predicated region
      $region109: #{tpu_custom_call.1} parent=5 // pred_check
        %p678 = pneg %p677
      $region110: #{tpu_custom_call.1} parent=5 // pred_check_branch
        %680 = sbr.rel (%p678) target = $region112
      $region111: #{tpu_custom_call.1} parent=5 // pred_region
        // Predicated region
        $region113: #{tpu_custom_call.1} parent=111 // pred_check
          %p681 = pneg %p54
        $region114: #{tpu_custom_call.1} parent=111 // pred_check_branch
          %683 = sbr.rel (%p681) target = $region116
        $region115: #{tpu_custom_call.1} parent=111 // pred_region
          %p684 = scmp.lt.s32.totalorder %s34, 1
          %s685 = scalar_select %p684, %s34, 1
          %s686 = smul.addr %s685, 8
          %s687 = scalar_lea.vmem %s0, %s686
        $region116: #{tpu_custom_call.1} parent=111 // pred_fallthru
          _
      $region112: #{tpu_custom_call.1} parent=5 // pred_fallthru
        _
      %p688 = scmp.le.s32.totalorder 1, %s34
      %p689 = scmp.lt.s32.totalorder %s34, 3
      %p690 = pnand %p688, %p689
      %p691 = pneg %p690
      // Predicated region
      $region117: #{tpu_custom_call.1} parent=5 // pred_check
        _
      $region118: #{tpu_custom_call.1} parent=5 // pred_check_branch
        %693 = sbr.rel (%p690) target = $region120
      $region119: #{tpu_custom_call.1} parent=5 // pred_region
        %s694 = ssub.s32 %s34, 1
        %p695 = scmp.lt.s32.totalorder %s39, 1
        %s696 = scalar_select %p695, %s39, 1
        %s697 = smul.addr %s696, 8
        %s698 = scalar_lea.vmem %s0, %s697
        %p699 = pneg %p60
        %p700 = pneg %p57
        %p701 = pneg %p81
        %p702 = pneg %p78
        %p703 = pneg %p102
        %p704 = pneg %p99
        %p705 = pneg %p123
        %p706 = pneg %p120
        %p707 = pneg %p144
        %p708 = pneg %p141
        %p709 = pneg %p165
        %p710 = pneg %p162
        %p711 = pneg %p186
        %p712 = pneg %p183
        %p713 = pneg %p207
        %p714 = pneg %p204
        %p715 = pneg %p228
        %p716 = pneg %p225
        %p717 = pneg %p249
        %p718 = pneg %p246
        %p719 = pneg %p270
        %p720 = pneg %p267
        %p721 = pneg %p291
        %p722 = pneg %p288
        %p723 = pneg %p312
        %p724 = pneg %p309
        %p725 = pneg %p333
        %p726 = pneg %p330
        %p727 = pneg %p354
        %p728 = pneg %p351
        %p729 = pneg %p375
        %p730 = pneg %p372
        %p731 = pneg %p396
        %p732 = pneg %p393
        %p733 = pneg %p417
        %p734 = pneg %p414
        %p735 = pneg %p438
        %p736 = pneg %p435
        %p737 = pneg %p459
        %p738 = pneg %p456
        %p739 = pneg %p480
        %p740 = pneg %p477
        %p741 = pneg %p501
        %p742 = pneg %p498
        %p743 = pneg %p522
        %p744 = pneg %p519
        %p745 = pneg %p543
        %p746 = pneg %p540
        %p747 = pneg %p564
        %p748 = pneg %p561
        %p749 = pneg %p590
        %p750 = pneg %p587
        %s751 = sand.u32 %s577, 1
        %s752 = scalar_lea.sflag [#allocation9], %s751
        %s753 = sand.u32 %s577, 1
        %s754 = smul.addr %s753, 8
        %s755 = scalar_lea.vmem [#allocation8], %s754
        %p756 = scmp.lt.s32.totalorder %s39, 1
        %s757 = scalar_select %p756, %s39, 1
        %s758 = smul.addr %s757, 8
        %s759 = scalar_lea.vmem %s0, %s758
        %v761 = vlaneseq
        %v762 = vshrl.u32 %v761, 7
        %v763 = vadd.s32 %v762, 8
        %v764 = vlaneseq
        %v765 = vand.u32 %v764, 127
        %vm766 = vcmp.eq.s32.totalorder %v762, %v765
        %vm767 = vcmp.eq.s32.totalorder %v763, %v765
        %v768 = vsel %vm766, 1, 0
        %v769 = vsel %vm767, 1, 0
        %v770 = vcvt.s32.f32 %v768
        %v771 = vcvt.s32.f32 %v769
        %v772 = vld [vmem:[%s759] sm:$0xff]
        %vm773 = vcmask 261120
        %v774 = vsel %vm773, %v772, 0.0
        %775 = vadd.xlane.f32.xlu0 %v774
        %v776 = vpop.xlane.xlu0 %775
        %v777 = vrcp.pop 32.0
        %v778 = vmul.f32 %v776, %v777
        %v779 = vsub.f32 %v772, %v778
        %v780 = vmul.f32 %v779, %v779
        %v781 = vsel %vm773, %v780, 0.0
        %782 = vadd.xlane.f32.xlu0 %v781
        %v783 = vpop.xlane.xlu0 %782
        %v784 = vmul.f32 %v783, %v777
        %v785 = vadd.f32 %v784, 1e-05
        %v786 = vrsqrt.pop %v785
        %v787 = vmul.f32 %v779, %v786
        %v788 = vld [vmem:[%s1] sm:$0x1]
        %v790 = vlaneseq
        %v791 = vshrl.u32 %v790, 7
        %v792 = vsub.s32 0, %v791
        %v793 = vrot.slane %v788, %v792
        %v795 = vmul.f32 %v787, %v793
        %v796 = vld [vmem:[%s2] sm:$0x1]
        %v798 = vlaneseq
        %v799 = vshrl.u32 %v798, 7
        %v800 = vsub.s32 0, %v799
        %v801 = vrot.slane %v796, %v800
        %v803 = vadd.f32 %v795, %v801
        %v804 = vld [vmem:[%s3] sm:$0xf]
        %v805 = vld [vmem:[%s3 + $0x4] sm:$0xf]
        %v806 = vld [vmem:[%s3 + $0x8] sm:$0xf]
        %v807 = vld [vmem:[%s3 + $0xc] sm:$0xf]
        %v808 = vpack.c.bf16 %v803, %v803
        %v809 = vld [vmem:[%s4] sm:$0x1]
        %v811 = vlaneseq
        %v812 = vshrl.u32 %v811, 7
        %v813 = vsub.s32 0, %v812
        %v814 = vrot.slane %v809, %v813
        %v820 = vunpack.c.l.b16 %v804
        %v821 = vunpack.c.l.b16 %v805
        %v822 = vunpack.c.l.b16 %v806
        %v823 = vunpack.c.l.b16 %v807
        %v824 = vpack.c.b16 %v821, %v820
        %v825 = vpack.c.b16 %v823, %v822
        %v829 = vsel %vm773, %v808, 0
        %831 = vmatprep.subr.bf16.mxu0 0
        %832 = vmatpush1.bf16.msra.mxu0 0
        %833 = vmatprep.subr.bf16.mxu0 0
        %834 = vmatpush1.bf16.msra.mxu0 0
        %835 = vmatprep.subr.bf16.mxu0 0
        %836 = vmatpush1.bf16.msra.mxu0 0
        %837 = vmatprep.subr.bf16.mxu0 0
        %838 = vmatpush1.bf16.msra.mxu0 0
        %839 = vmatprep.subr.bf16.mxu0 0
        %840 = vmatpush1.bf16.msra.mxu0 0
        %841 = vmatprep.subr.bf16.mxu0 0
        %842 = vmatpush1.bf16.msra.mxu0 0
        %843 = vmatprep.subr.bf16.mxu0 0
        %844 = vmatpush1.bf16.msra.mxu0 %v825
        %845 = vmatprep.subr.bf16.mxu0 0
        %846 = vmatpush1.bf16.msra.mxu0 %v824
        %847 = vmatprep.subr.bf16.mxu0 0
        %848 = vmatpush2.bf16.msra.mxu0 0
        %849 = vmatprep.subr.bf16.mxu0 0
        %850 = vmatpush2.bf16.msra.mxu0 0
        %851 = vmatprep.subr.bf16.mxu0 0
        %852 = vmatpush2.bf16.msra.mxu0 0
        %853 = vmatprep.subr.bf16.mxu0 0
        %854 = vmatpush2.bf16.msra.mxu0 0
        %855 = vmatprep.subr.bf16.mxu0 0
        %856 = vmatpush2.bf16.msra.mxu0 0
        %857 = vmatprep.subr.bf16.mxu0 0
        %858 = vmatpush2.bf16.msra.mxu0 0
        %859 = vmatprep.subr.bf16.mxu0 0
        %860 = vmatpush2.bf16.msra.mxu0 0
        %861 = vmatprep.subr.bf16.mxu0 0
        %862 = vmatpush2.bf16.msra.mxu0 0
        %863 = vmatprep.mubr.bf16.mxu0 0
        %864 = vmatmul.mubr.bf16.gmra.mxu0 %v829
        %v865 = vpop.f32.mrf.mxu0
        %v866 = vadd.f32 %v814, %v865
        %v867 = vpop.f32.mrf.mxu0
        %v868 = vpop.f32.mrf.mxu0
        %v869 = vpop.f32.mrf.mxu0
        %870 = vdwg.mxu0
        %v871 = vld [vmem:[%s5] sm:$0xf]
        %v872 = vld [vmem:[%s5 + $0x4] sm:$0xf]
        %v873 = vld [vmem:[%s5 + $0x8] sm:$0xf]
        %v874 = vld [vmem:[%s5 + $0xc] sm:$0xf]
        %v875 = vpack.c.bf16 %v866, %v866
        %v876 = vld [vmem:[%s6] sm:$0x1]
        %v878 = vlaneseq
        %v879 = vshrl.u32 %v878, 7
        %v880 = vsub.s32 0, %v879
        %v881 = vrot.slane %v876, %v880
        %v887 = vunpack.c.l.b16 %v871
        %v888 = vunpack.c.l.b16 %v872
        %v889 = vunpack.c.l.b16 %v873
        %v890 = vunpack.c.l.b16 %v874
        %v891 = vpack.c.b16 %v888, %v887
        %v892 = vpack.c.b16 %v890, %v889
        %v896 = vsel %vm773, %v875, 0
        %898 = vmatprep.subr.bf16.mxu0 0
        %899 = vmatpush1.bf16.msra.mxu0 0
        %900 = vmatprep.subr.bf16.mxu0 0
        %901 = vmatpush1.bf16.msra.mxu0 0
        %902 = vmatprep.subr.bf16.mxu0 0
        %903 = vmatpush1.bf16.msra.mxu0 0
        %904 = vmatprep.subr.bf16.mxu0 0
        %905 = vmatpush1.bf16.msra.mxu0 0
        %906 = vmatprep.subr.bf16.mxu0 0
        %907 = vmatpush1.bf16.msra.mxu0 0
        %908 = vmatprep.subr.bf16.mxu0 0
        %909 = vmatpush1.bf16.msra.mxu0 0
        %910 = vmatprep.subr.bf16.mxu0 0
        %911 = vmatpush1.bf16.msra.mxu0 %v892
        %912 = vmatprep.subr.bf16.mxu0 0
        %913 = vmatpush1.bf16.msra.mxu0 %v891
        %914 = vmatprep.subr.bf16.mxu0 0
        %915 = vmatpush2.bf16.msra.mxu0 0
        %916 = vmatprep.subr.bf16.mxu0 0
        %917 = vmatpush2.bf16.msra.mxu0 0
        %918 = vmatprep.subr.bf16.mxu0 0
        %919 = vmatpush2.bf16.msra.mxu0 0
        %920 = vmatprep.subr.bf16.mxu0 0
        %921 = vmatpush2.bf16.msra.mxu0 0
        %922 = vmatprep.subr.bf16.mxu0 0
        %923 = vmatpush2.bf16.msra.mxu0 0
        %924 = vmatprep.subr.bf16.mxu0 0
        %925 = vmatpush2.bf16.msra.mxu0 0
        %926 = vmatprep.subr.bf16.mxu0 0
        %927 = vmatpush2.bf16.msra.mxu0 0
        %928 = vmatprep.subr.bf16.mxu0 0
        %929 = vmatpush2.bf16.msra.mxu0 0
        %930 = vmatprep.mubr.bf16.mxu0 0
        %931 = vmatmul.mubr.bf16.gmra.mxu0 %v896
        %v932 = vpop.f32.mrf.mxu0
        %v933 = vadd.f32 %v881, %v932
        %v934 = vpop.f32.mrf.mxu0
        %v935 = vpop.f32.mrf.mxu0
        %v936 = vpop.f32.mrf.mxu0
        %937 = vdwg.mxu0
        %v938 = vxor.u32 %v933, 2147483648
        %v939 = vmul.f32 %v938, 1.442695
        %v940 = vpow.pop %v939
        %v941 = vadd.f32 %v940, 1.0
        %v942 = vrcp.pop %v941
        %v943 = vmul.f32 1.0, %v942
        %v944 = vmul.f32 %v933, %v943
        %v945 = vld [vmem:[%s7] sm:$0xf]
        %v946 = vld [vmem:[%s7 + $0x4] sm:$0xf]
        %v947 = vld [vmem:[%s7 + $0x8] sm:$0xf]
        %v948 = vld [vmem:[%s7 + $0xc] sm:$0xf]
        %v949 = vpack.c.bf16 %v944, %v944
        %951 = vrot.lane.b32.xlu0 %v949, 96
        %v952 = vpop.permute.xlu0 %951
        %v957 = vunpack.c.l.b16 %v945
        %v958 = vunpack.c.l.b16 %v946
        %v959 = vunpack.c.l.b16 %v947
        %v960 = vunpack.c.l.b16 %v948
        %v961 = vpack.c.b16 %v958, %v957
        %v962 = vpack.c.b16 %v960, %v959
        %v966 = vsel %vm773, %v952, 0
        %968 = vmatprep.subr.bf16.mxu0 0
        %969 = vmatpush1.bf16.msra.mxu0 0
        %970 = vmatprep.subr.bf16.mxu0 0
        %971 = vmatpush1.bf16.msra.mxu0 0
        %972 = vmatprep.subr.bf16.mxu0 0
        %973 = vmatpush1.bf16.msra.mxu0 0
        %974 = vmatprep.subr.bf16.mxu0 0
        %975 = vmatpush1.bf16.msra.mxu0 0
        %976 = vmatprep.subr.bf16.mxu0 0
        %977 = vmatpush1.bf16.msra.mxu0 0
        %978 = vmatprep.subr.bf16.mxu0 0
        %979 = vmatpush1.bf16.msra.mxu0 0
        %980 = vmatprep.subr.bf16.mxu0 0
        %981 = vmatpush1.bf16.msra.mxu0 %v962
        %982 = vmatprep.subr.bf16.mxu0 0
        %983 = vmatpush1.bf16.msra.mxu0 %v961
        %984 = vmatprep.subr.bf16.mxu0 0
        %985 = vmatpush2.bf16.msra.mxu0 0
        %986 = vmatprep.subr.bf16.mxu0 0
        %987 = vmatpush2.bf16.msra.mxu0 0
        %988 = vmatprep.subr.bf16.mxu0 0
        %989 = vmatpush2.bf16.msra.mxu0 0
        %990 = vmatprep.subr.bf16.mxu0 0
        %991 = vmatpush2.bf16.msra.mxu0 0
        %992 = vmatprep.subr.bf16.mxu0 0
        %993 = vmatpush2.bf16.msra.mxu0 0
        %994 = vmatprep.subr.bf16.mxu0 0
        %995 = vmatpush2.bf16.msra.mxu0 0
        %996 = vmatprep.subr.bf16.mxu0 0
        %997 = vmatpush2.bf16.msra.mxu0 0
        %998 = vmatprep.subr.bf16.mxu0 0
        %999 = vmatpush2.bf16.msra.mxu0 0
        %1000 = vmatprep.mubr.bf16.mxu0 0
        %1001 = vmatmul.mubr.bf16.gmra.mxu0 %v966
        %v1002 = vpop.f32.mrf.mxu0
        %v1003 = vadd.f32 0.0, %v1002
        %v1004 = vpop.f32.mrf.mxu0
        %v1005 = vpop.f32.mrf.mxu0
        %v1006 = vpop.f32.mrf.mxu0
        %1007 = vdwg.mxu0
        %v1008 = vld [vmem:[%s8] sm:$0xf]
        %v1009 = vlaneseq
        %v1010 = vshrl.u32 %v1009, 7
        %v1011 = vsub.s32 3, %v1010
        %v1012 = vrot.slane %v1008, %v1011
        %v1013 = vmul.f32 %v1012, %v1003
        %v1015 = vrot.slane %v1003, 7
        %vm1017 = vcmask 1040384
        %v1018 = vsel %vm1017, 0.0, %v1015
        %v1019 = vlaneseq
        %v1020 = vshrl.u32 %v1019, 7
        %v1021 = vsub.s32 2, %v1020
        %v1022 = vrot.slane %v1008, %v1021
        %v1023 = vmul.f32 %v1022, %v1018
        %v1024 = vadd.f32 %v1013, %v1023
        %v1025 = vrot.slane %v1003, 6
        %vm1027 = vcmask 1041408
        %v1028 = vsel %vm1027, 0.0, %v1025
        %v1029 = vlaneseq
        %v1030 = vshrl.u32 %v1029, 7
        %v1031 = vsub.s32 1, %v1030
        %v1032 = vrot.slane %v1008, %v1031
        %v1033 = vmul.f32 %v1032, %v1028
        %v1034 = vadd.f32 %v1024, %v1033
        %v1035 = vrot.slane %v1003, 5
        %vm1037 = vcmask 1042432
        %v1038 = vsel %vm1037, 0.0, %v1035
        %v1039 = vlaneseq
        %v1040 = vshrl.u32 %v1039, 7
        %v1041 = vsub.s32 0, %v1040
        %v1042 = vrot.slane %v1008, %v1041
        %v1043 = vmul.f32 %v1042, %v1038
        %v1044 = vadd.f32 %v1034, %v1043
        %v1045 = vld [vmem:[%s9] sm:$0x1]
        %v1047 = vlaneseq
        %v1048 = vshrl.u32 %v1047, 7
        %v1049 = vsub.s32 0, %v1048
        %v1050 = vrot.slane %v1045, %v1049
        %v1052 = vadd.f32 %v1044, %v1050
        %v1053 = vxor.u32 %v1052, 2147483648
        %v1054 = vmul.f32 %v1053, 1.442695
        %v1055 = vpow.pop %v1054
        %v1056 = vadd.f32 %v1055, 1.0
        %v1057 = vrcp.pop %v1056
        %v1058 = vmul.f32 1.0, %v1057
        %v1059 = vmul.f32 %v1052, %v1058
        %v1060 = vld [vmem:[%s10] sm:$0xf]
        %v1061 = vld [vmem:[%s10 + $0x4] sm:$0xf]
        %v1062 = vld [vmem:[%s10 + $0x8] sm:$0xf]
        %v1063 = vld [vmem:[%s10 + $0xc] sm:$0xf]
        %v1064 = vld [vmem:[%s10 + $0x10] sm:$0xf]
        %v1065 = vld [vmem:[%s10 + $0x14] sm:$0xf]
        %v1066 = vld [vmem:[%s10 + $0x18] sm:$0xf]
        %v1067 = vld [vmem:[%s10 + $0x1c] sm:$0xf]
        %v1068 = vpack.c.bf16 %v1059, %v1059
        %v1077 = vunpack.c.l.b16 %v1060
        %v1078 = vunpack.c.l.b16 %v1061
        %v1079 = vunpack.c.l.b16 %v1062
        %v1080 = vunpack.c.l.b16 %v1063
        %v1081 = vunpack.c.l.b16 %v1064
        %v1082 = vunpack.c.l.b16 %v1065
        %v1083 = vunpack.c.l.b16 %v1066
        %v1084 = vunpack.c.l.b16 %v1067
        %v1085 = vpack.c.b16 %v1078, %v1077
        %v1086 = vpack.c.b16 %v1080, %v1079
        %v1087 = vpack.c.b16 %v1082, %v1081
        %v1088 = vpack.c.b16 %v1084, %v1083
        %vm1093 = vcmask 523264
        %v1095 = vsel %vm1093, %v1068, 0
        %1097 = vmatprep.subr.bf16.mxu0 0
        %1098 = vmatpush1.bf16.msra.mxu0 0
        %1099 = vmatprep.subr.bf16.mxu0 0
        %1100 = vmatpush1.bf16.msra.mxu0 0
        %1101 = vmatprep.subr.bf16.mxu0 0
        %1102 = vmatpush1.bf16.msra.mxu0 0
        %1103 = vmatprep.subr.bf16.mxu0 0
        %1104 = vmatpush1.bf16.msra.mxu0 0
        %1105 = vmatprep.subr.bf16.mxu0 0
        %1106 = vmatpush1.bf16.msra.mxu0 %v1088
        %1107 = vmatprep.subr.bf16.mxu0 0
        %1108 = vmatpush1.bf16.msra.mxu0 %v1087
        %1109 = vmatprep.subr.bf16.mxu0 0
        %1110 = vmatpush1.bf16.msra.mxu0 %v1086
        %1111 = vmatprep.subr.bf16.mxu0 0
        %1112 = vmatpush1.bf16.msra.mxu0 %v1085
        %1113 = vmatprep.subr.bf16.mxu0 0
        %1114 = vmatpush2.bf16.msra.mxu0 0
        %1115 = vmatprep.subr.bf16.mxu0 0
        %1116 = vmatpush2.bf16.msra.mxu0 0
        %1117 = vmatprep.subr.bf16.mxu0 0
        %1118 = vmatpush2.bf16.msra.mxu0 0
        %1119 = vmatprep.subr.bf16.mxu0 0
        %1120 = vmatpush2.bf16.msra.mxu0 0
        %1121 = vmatprep.subr.bf16.mxu0 0
        %1122 = vmatpush2.bf16.msra.mxu0 0
        %1123 = vmatprep.subr.bf16.mxu0 0
        %1124 = vmatpush2.bf16.msra.mxu0 0
        %1125 = vmatprep.subr.bf16.mxu0 0
        %1126 = vmatpush2.bf16.msra.mxu0 0
        %1127 = vmatprep.subr.bf16.mxu0 0
        %1128 = vmatpush2.bf16.msra.mxu0 0
        %1129 = vmatprep.mubr.bf16.mxu0 0
        %1130 = vmatmul.mubr.bf16.gmra.mxu0 %v1095
        %v1131 = vpop.f32.mrf.mxu0
        %v1132 = vadd.f32 0.0, %v1131
        %v1133 = vpop.f32.mrf.mxu0
        %v1134 = vpop.f32.mrf.mxu0
        %v1135 = vpop.f32.mrf.mxu0
        %1136 = vdwg.mxu0
        %v1137 = vld [vmem:[%s11] sm:$0x1]
        %v1138 = vpack.c.bf16 %v1132, %v1132
        %v1139 = vld [vmem:[%s12] sm:$0x1]
        %v1141 = vlaneseq
        %v1142 = vshrl.u32 %v1141, 7
        %v1143 = vsub.s32 0, %v1142
        %v1144 = vrot.slane %v1139, %v1143
        %vm1146 = vcmask 15360
        %v1148 = vsel %vm1146, %v1138, 0
        %v1151 = vsel %vm1017, %v1137, 0
        %1153 = vmatprep.subr.bf16.mxu0 0
        %1154 = vmatpush1.bf16.msra.mxu0 0
        %1155 = vmatprep.subr.bf16.mxu0 0
        %1156 = vmatpush1.bf16.msra.mxu0 0
        %1157 = vmatprep.subr.bf16.mxu0 0
        %1158 = vmatpush1.bf16.msra.mxu0 0
        %1159 = vmatprep.subr.bf16.mxu0 0
        %1160 = vmatpush1.bf16.msra.mxu0 0
        %1161 = vmatprep.subr.bf16.mxu0 0
        %1162 = vmatpush1.bf16.msra.mxu0 0
        %1163 = vmatprep.subr.bf16.mxu0 0
        %1164 = vmatpush1.bf16.msra.mxu0 0
        %1165 = vmatprep.subr.bf16.mxu0 0
        %1166 = vmatpush1.bf16.msra.mxu0 0
        %1167 = vmatprep.subr.bf16.mxu0 0
        %1168 = vmatpush1.bf16.msra.mxu0 %v1151
        %1169 = vmatprep.subr.bf16.mxu0 0
        %1170 = vmatpush2.bf16.msra.mxu0 0
        %1171 = vmatprep.subr.bf16.mxu0 0
        %1172 = vmatpush2.bf16.msra.mxu0 0
        %1173 = vmatprep.subr.bf16.mxu0 0
        %1174 = vmatpush2.bf16.msra.mxu0 0
        %1175 = vmatprep.subr.bf16.mxu0 0
        %1176 = vmatpush2.bf16.msra.mxu0 0
        %1177 = vmatprep.subr.bf16.mxu0 0
        %1178 = vmatpush2.bf16.msra.mxu0 0
        %1179 = vmatprep.subr.bf16.mxu0 0
        %1180 = vmatpush2.bf16.msra.mxu0 0
        %1181 = vmatprep.subr.bf16.mxu0 0
        %1182 = vmatpush2.bf16.msra.mxu0 0
        %1183 = vmatprep.subr.bf16.mxu0 0
        %1184 = vmatpush2.bf16.msra.mxu0 0
        %1185 = vmatprep.mubr.bf16.mxu0 0
        %1186 = vmatmul.mubr.bf16.gmra.mxu0 %v1148
        %v1187 = vpop.f32.mrf.mxu0
        %v1188 = vadd.f32 %v1144, %v1187
        %v1189 = vpop.f32.mrf.mxu0
        %v1190 = vpop.f32.mrf.mxu0
        %v1191 = vpop.f32.mrf.mxu0
        %1192 = vdwg.mxu0
        %vm1193 = vcmp.gt.f32.partialorder %v1188, 20.0
        %v1194 = vmin.f32 %v1188, 20.0
        %v1195 = vmul.f32 %v1194, 1.442695
        %v1196 = vpow.pop %v1195
        %v1197 = vadd.f32 %v1196, 1.0
        %v1198 = vlog2.pop %v1197
        %v1199 = vmul.f32 %v1198, 0.6931472
        %v1200 = vsel %vm1193, %v1188, %v1199
        %v1201 = vld [vmem:[%s13] sm:$0xff]
        %v1202 = vld [vmem:[%s13 + $0x8] sm:$0xff]
        %v1203 = vmul.f32 %v1201, 1.442695
        %v1204 = vpow.pop %v1203
        %v1205 = vmul.f32 %v1202, 1.442695
        %v1206 = vpow.pop %v1205
        %v1207 = vsub.f32 0.0, %v1204
        %v1208 = vsub.f32 0.0, %v1206
        %v1210 = vcombine.high %v1200, %v1200
        %v1212 = vunpack.c.l.s4 1966171168
        %v1213 = vunpack.c.0.s8 %v1212
        %v1214 = vlaneseq
        %v1215 = vshrl.u32 %v1214, 7
        %v1216 = vsub.s32 %v1213, %v1215
        %v1217 = vrot.slane %v1200, %v1216
        %v1219 = vunpack.c.l.s4 1966171168
        %v1220 = vunpack.c.0.s8 %v1219
        %v1221 = vlaneseq
        %v1222 = vshrl.u32 %v1221, 7
        %v1223 = vsub.s32 %v1220, %v1222
        %v1224 = vrot.slane %v1210, %v1223
        %v1225 = vcombine.high %v1217, %v1217
        %v1226 = vcombine.high %v1224, %v1224
        %v1228 = vunpack.c.l.s4 1966171168
        %v1229 = vunpack.c.0.s8 %v1228
        %v1230 = vlaneseq
        %v1231 = vshrl.u32 %v1230, 7
        %v1232 = vsub.s32 %v1229, %v1231
        %v1233 = vrot.slane %v1217, %v1232
        %v1235 = vunpack.c.l.s4 1966171168
        %v1236 = vunpack.c.0.s8 %v1235
        %v1237 = vlaneseq
        %v1238 = vshrl.u32 %v1237, 7
        %v1239 = vsub.s32 %v1236, %v1238
        %v1240 = vrot.slane %v1224, %v1239
        %v1242 = vunpack.c.l.s4 1966171168
        %v1243 = vunpack.c.0.s8 %v1242
        %v1244 = vlaneseq
        %v1245 = vshrl.u32 %v1244, 7
        %v1246 = vsub.s32 %v1243, %v1245
        %v1247 = vrot.slane %v1225, %v1246
        %v1249 = vunpack.c.l.s4 1966171168
        %v1250 = vunpack.c.0.s8 %v1249
        %v1251 = vlaneseq
        %v1252 = vshrl.u32 %v1251, 7
        %v1253 = vsub.s32 %v1250, %v1252
        %v1254 = vrot.slane %v1226, %v1253
        %v1255 = vcombine.high %v1233, %v1233
        %v1256 = vcombine.high %v1240, %v1240
        %v1257 = vcombine.high %v1247, %v1247
        %v1258 = vcombine.high %v1254, %v1254
        %v1259 = vlaneseq
        %v1260 = vshrl.u32 %v1259, 7
        %v1261 = vsub.s32 0, %v1260
        %v1262 = vrot.slane %v1233, %v1261
        %v1263 = vlaneseq
        %v1264 = vshrl.u32 %v1263, 7
        %v1265 = vsub.s32 0, %v1264
        %v1266 = vrot.slane %v1247, %v1265
        %v1267 = vlaneseq
        %v1268 = vshrl.u32 %v1267, 7
        %v1269 = vsub.s32 0, %v1268
        %v1270 = vrot.slane %v1255, %v1269
        %v1271 = vlaneseq
        %v1272 = vshrl.u32 %v1271, 7
        %v1273 = vsub.s32 0, %v1272
        %v1274 = vrot.slane %v1257, %v1273
        %v1275 = vlaneseq
        %v1276 = vshrl.u32 %v1275, 7
        %v1277 = vsub.s32 0, %v1276
        %v1278 = vrot.slane %v1240, %v1277
        %v1279 = vlaneseq
        %v1280 = vshrl.u32 %v1279, 7
        %v1281 = vsub.s32 0, %v1280
        %v1282 = vrot.slane %v1254, %v1281
        %v1283 = vlaneseq
        %v1284 = vshrl.u32 %v1283, 7
        %v1285 = vsub.s32 0, %v1284
        %v1286 = vrot.slane %v1256, %v1285
        %v1287 = vlaneseq
        %v1288 = vshrl.u32 %v1287, 7
        %v1289 = vsub.s32 0, %v1288
        %v1290 = vrot.slane %v1258, %v1289
        %v1299 = vmul.f32 %v1262, %v1207
        %v1300 = vmul.f32 %v1262, %v1208
        %v1301 = vmul.f32 %v1266, %v1207
        %v1302 = vmul.f32 %v1266, %v1208
        %v1303 = vmul.f32 %v1270, %v1207
        %v1304 = vmul.f32 %v1270, %v1208
        %v1305 = vmul.f32 %v1274, %v1207
        %v1306 = vmul.f32 %v1274, %v1208
        %v1307 = vmul.f32 %v1278, %v1207
        %v1308 = vmul.f32 %v1278, %v1208
        %v1309 = vmul.f32 %v1282, %v1207
        %v1310 = vmul.f32 %v1282, %v1208
        %v1311 = vmul.f32 %v1286, %v1207
        %v1312 = vmul.f32 %v1286, %v1208
        %v1313 = vmul.f32 %v1290, %v1207
        %v1314 = vmul.f32 %v1290, %v1208
        %v1315 = vmul.f32 %v1299, 1.442695
        %v1316 = vpow.pop %v1315
        %v1317 = vmul.f32 %v1300, 1.442695
        %v1318 = vpow.pop %v1317
        %v1319 = vmul.f32 %v1301, 1.442695
        %v1320 = vpow.pop %v1319
        %v1321 = vmul.f32 %v1302, 1.442695
        %v1322 = vpow.pop %v1321
        %v1323 = vmul.f32 %v1303, 1.442695
        %v1324 = vpow.pop %v1323
        %v1325 = vmul.f32 %v1304, 1.442695
        %v1326 = vpow.pop %v1325
        %v1327 = vmul.f32 %v1305, 1.442695
        %v1328 = vpow.pop %v1327
        %v1329 = vmul.f32 %v1306, 1.442695
        %v1330 = vpow.pop %v1329
        %v1331 = vmul.f32 %v1307, 1.442695
        %v1332 = vpow.pop %v1331
        %v1333 = vmul.f32 %v1308, 1.442695
        %v1334 = vpow.pop %v1333
        %v1335 = vmul.f32 %v1309, 1.442695
        %v1336 = vpow.pop %v1335
        %v1337 = vmul.f32 %v1310, 1.442695
        %v1338 = vpow.pop %v1337
        %v1339 = vmul.f32 %v1311, 1.442695
        %v1340 = vpow.pop %v1339
        %v1341 = vmul.f32 %v1312, 1.442695
        %v1342 = vpow.pop %v1341
        %v1343 = vmul.f32 %v1313, 1.442695
        %v1344 = vpow.pop %v1343
        %v1345 = vmul.f32 %v1314, 1.442695
        %v1346 = vpow.pop %v1345
        %1347 = vst.msk [vmem:[#allocation2] sm:$0xff] %vm1093, %v1316
        %1348 = vst.msk [vmem:[#allocation2 + $0x8] sm:$0xff] %vm1093, %v1318
        %1349 = vst.msk [vmem:[#allocation2 + $0x10] sm:$0xff] %vm1093, %v1320
        %1350 = vst.msk [vmem:[#allocation2 + $0x18] sm:$0xff] %vm1093, %v1322
        %1351 = vst.msk [vmem:[#allocation2 + $0x20] sm:$0xff] %vm1093, %v1324
        %1352 = vst.msk [vmem:[#allocation2 + $0x28] sm:$0xff] %vm1093, %v1326
        %1353 = vst.msk [vmem:[#allocation2 + $0x30] sm:$0xff] %vm1093, %v1328
        %1354 = vst.msk [vmem:[#allocation2 + $0x38] sm:$0xff] %vm1093, %v1330
        %1355 = vst.msk [vmem:[#allocation2 + $0x40] sm:$0xff] %vm1093, %v1332
        %1356 = vst.msk [vmem:[#allocation2 + $0x48] sm:$0xff] %vm1093, %v1334
        %1357 = vst.msk [vmem:[#allocation2 + $0x50] sm:$0xff] %vm1093, %v1336
        %1358 = vst.msk [vmem:[#allocation2 + $0x58] sm:$0xff] %vm1093, %v1338
        %1359 = vst.msk [vmem:[#allocation2 + $0x60] sm:$0xff] %vm1093, %v1340
        %1360 = vst.msk [vmem:[#allocation2 + $0x68] sm:$0xff] %vm1093, %v1342
        %1361 = vst.msk [vmem:[#allocation2 + $0x70] sm:$0xff] %vm1093, %v1344
        %1362 = vst.msk [vmem:[#allocation2 + $0x78] sm:$0xff] %vm1093, %v1346
        %v1363 = vmul.f32 %v1200, %v1059
        %v1365 = vcombine.high %v1363, %v1363
        %v1367 = vunpack.c.l.s4 1966171168
        %v1368 = vunpack.c.0.s8 %v1367
        %v1369 = vlaneseq
        %v1370 = vshrl.u32 %v1369, 7
        %v1371 = vsub.s32 %v1368, %v1370
        %v1372 = vrot.slane %v1363, %v1371
        %v1374 = vunpack.c.l.s4 1966171168
        %v1375 = vunpack.c.0.s8 %v1374
        %v1376 = vlaneseq
        %v1377 = vshrl.u32 %v1376, 7
        %v1378 = vsub.s32 %v1375, %v1377
        %v1379 = vrot.slane %v1365, %v1378
        %v1380 = vcombine.high %v1372, %v1372
        %v1381 = vcombine.high %v1379, %v1379
        %v1383 = vunpack.c.l.s4 1966171168
        %v1384 = vunpack.c.0.s8 %v1383
        %v1385 = vlaneseq
        %v1386 = vshrl.u32 %v1385, 7
        %v1387 = vsub.s32 %v1384, %v1386
        %v1388 = vrot.slane %v1372, %v1387
        %v1390 = vunpack.c.l.s4 1966171168
        %v1391 = vunpack.c.0.s8 %v1390
        %v1392 = vlaneseq
        %v1393 = vshrl.u32 %v1392, 7
        %v1394 = vsub.s32 %v1391, %v1393
        %v1395 = vrot.slane %v1379, %v1394
        %v1397 = vunpack.c.l.s4 1966171168
        %v1398 = vunpack.c.0.s8 %v1397
        %v1399 = vlaneseq
        %v1400 = vshrl.u32 %v1399, 7
        %v1401 = vsub.s32 %v1398, %v1400
        %v1402 = vrot.slane %v1380, %v1401
        %v1404 = vunpack.c.l.s4 1966171168
        %v1405 = vunpack.c.0.s8 %v1404
        %v1406 = vlaneseq
        %v1407 = vshrl.u32 %v1406, 7
        %v1408 = vsub.s32 %v1405, %v1407
        %v1409 = vrot.slane %v1381, %v1408
        %v1410 = vcombine.high %v1388, %v1388
        %v1411 = vcombine.high %v1395, %v1395
        %v1412 = vcombine.high %v1402, %v1402
        %v1413 = vcombine.high %v1409, %v1409
        %v1415 = vcombine.high %v1132, %v1132
        %v1417 = vunpack.c.l.s4 1966171168
        %v1418 = vunpack.c.0.s8 %v1417
        %v1419 = vlaneseq
        %v1420 = vshrl.u32 %v1419, 7
        %v1421 = vsub.s32 %v1418, %v1420
        %v1422 = vrot.slane %v1132, %v1421
        %v1424 = vunpack.c.l.s4 1966171168
        %v1425 = vunpack.c.0.s8 %v1424
        %v1426 = vlaneseq
        %v1427 = vshrl.u32 %v1426, 7
        %v1428 = vsub.s32 %v1425, %v1427
        %v1429 = vrot.slane %v1415, %v1428
        %v1430 = vcombine.high %v1422, %v1422
        %v1431 = vcombine.high %v1429, %v1429
        %v1433 = vunpack.c.l.s4 1966171168
        %v1434 = vunpack.c.0.s8 %v1433
        %v1435 = vlaneseq
        %v1436 = vshrl.u32 %v1435, 7
        %v1437 = vsub.s32 %v1434, %v1436
        %v1438 = vrot.slane %v1422, %v1437
        %v1440 = vunpack.c.l.s4 1966171168
        %v1441 = vunpack.c.0.s8 %v1440
        %v1442 = vlaneseq
        %v1443 = vshrl.u32 %v1442, 7
        %v1444 = vsub.s32 %v1441, %v1443
        %v1445 = vrot.slane %v1429, %v1444
        %v1447 = vunpack.c.l.s4 1966171168
        %v1448 = vunpack.c.0.s8 %v1447
        %v1449 = vlaneseq
        %v1450 = vshrl.u32 %v1449, 7
        %v1451 = vsub.s32 %v1448, %v1450
        %v1452 = vrot.slane %v1430, %v1451
        %v1454 = vunpack.c.l.s4 1966171168
        %v1455 = vunpack.c.0.s8 %v1454
        %v1456 = vlaneseq
        %v1457 = vshrl.u32 %v1456, 7
        %v1458 = vsub.s32 %v1455, %v1457
        %v1459 = vrot.slane %v1431, %v1458
        %v1460 = vcombine.high %v1438, %v1438
        %v1461 = vcombine.high %v1445, %v1445
        %v1462 = vcombine.high %v1452, %v1452
        %v1463 = vcombine.high %v1459, %v1459
        %v1464 = vlaneseq
        %v1465 = vshrl.u32 %v1464, 7
        %v1466 = vsub.s32 0, %v1465
        %v1467 = vrot.slane %v1438, %v1466
        %v1468 = vlaneseq
        %v1469 = vshrl.u32 %v1468, 7
        %v1470 = vsub.s32 0, %v1469
        %v1471 = vrot.slane %v1452, %v1470
        %v1472 = vlaneseq
        %v1473 = vshrl.u32 %v1472, 7
        %v1474 = vsub.s32 0, %v1473
        %v1475 = vrot.slane %v1460, %v1474
        %v1476 = vlaneseq
        %v1477 = vshrl.u32 %v1476, 7
        %v1478 = vsub.s32 0, %v1477
        %v1479 = vrot.slane %v1462, %v1478
        %v1480 = vlaneseq
        %v1481 = vshrl.u32 %v1480, 7
        %v1482 = vsub.s32 0, %v1481
        %v1483 = vrot.slane %v1445, %v1482
        %v1484 = vlaneseq
        %v1485 = vshrl.u32 %v1484, 7
        %v1486 = vsub.s32 0, %v1485
        %v1487 = vrot.slane %v1459, %v1486
        %v1488 = vlaneseq
        %v1489 = vshrl.u32 %v1488, 7
        %v1490 = vsub.s32 0, %v1489
        %v1491 = vrot.slane %v1461, %v1490
        %v1492 = vlaneseq
        %v1493 = vshrl.u32 %v1492, 7
        %v1494 = vsub.s32 0, %v1493
        %v1495 = vrot.slane %v1463, %v1494
        %1506 = vrot.lane.b32.xlu0 %v770, 2
        %v1507 = vpop.permute.xlu0 %1506
        %1508 = vrot.lane.b32.xlu0 %v771, 2
        %v1509 = vpop.permute.xlu0 %1508
        %v1512 = vmul.f32 %v1467, %v1507
        %v1513 = vmul.f32 %v1467, %v1509
        %v1514 = vmul.f32 %v1471, %v1507
        %v1515 = vmul.f32 %v1471, %v1509
        %v1516 = vmul.f32 %v1475, %v1507
        %v1517 = vmul.f32 %v1475, %v1509
        %v1518 = vmul.f32 %v1479, %v1507
        %v1519 = vmul.f32 %v1479, %v1509
        %v1520 = vmul.f32 %v1483, %v1507
        %v1521 = vmul.f32 %v1483, %v1509
        %v1522 = vmul.f32 %v1487, %v1507
        %v1523 = vmul.f32 %v1487, %v1509
        %v1524 = vmul.f32 %v1491, %v1507
        %v1525 = vmul.f32 %v1491, %v1509
        %v1526 = vmul.f32 %v1495, %v1507
        %v1527 = vmul.f32 %v1495, %v1509
        %1544 = vrot.lane.b32.xlu0 %v1512, 126
        %v1545 = vpop.permute.xlu0 %1544
        %1546 = vrot.lane.b32.xlu0 %v1513, 126
        %v1547 = vpop.permute.xlu0 %1546
        %1548 = vrot.lane.b32.xlu0 %v1514, 126
        %v1549 = vpop.permute.xlu0 %1548
        %1550 = vrot.lane.b32.xlu0 %v1515, 126
        %v1551 = vpop.permute.xlu0 %1550
        %1552 = vrot.lane.b32.xlu0 %v1516, 126
        %v1553 = vpop.permute.xlu0 %1552
        %1554 = vrot.lane.b32.xlu0 %v1517, 126
        %v1555 = vpop.permute.xlu0 %1554
        %1556 = vrot.lane.b32.xlu0 %v1518, 126
        %v1557 = vpop.permute.xlu0 %1556
        %1558 = vrot.lane.b32.xlu0 %v1519, 126
        %v1559 = vpop.permute.xlu0 %1558
        %1560 = vrot.lane.b32.xlu0 %v1520, 126
        %v1561 = vpop.permute.xlu0 %1560
        %1562 = vrot.lane.b32.xlu0 %v1521, 126
        %v1563 = vpop.permute.xlu0 %1562
        %1564 = vrot.lane.b32.xlu0 %v1522, 126
        %v1565 = vpop.permute.xlu0 %1564
        %1566 = vrot.lane.b32.xlu0 %v1523, 126
        %v1567 = vpop.permute.xlu0 %1566
        %1568 = vrot.lane.b32.xlu0 %v1524, 126
        %v1569 = vpop.permute.xlu0 %1568
        %1570 = vrot.lane.b32.xlu0 %v1525, 126
        %v1571 = vpop.permute.xlu0 %1570
        %1572 = vrot.lane.b32.xlu0 %v1526, 126
        %v1573 = vpop.permute.xlu0 %1572
        %1574 = vrot.lane.b32.xlu0 %v1527, 126
        %v1575 = vpop.permute.xlu0 %1574
        %vm1592 = vcmask 130048
        %v1593 = vsel %vm1592, %v1545, 0.0
        %1594 = vadd.xlane.f32.xlu0 %v1593
        %v1595 = vpop.xlane.xlu0 %1594
        %v1596 = vsel %vm1592, %v1547, 0.0
        %1597 = vadd.xlane.f32.xlu0 %v1596
        %v1598 = vpop.xlane.xlu0 %1597
        %v1599 = vsel %vm1592, %v1549, 0.0
        %1600 = vadd.xlane.f32.xlu0 %v1599
        %v1601 = vpop.xlane.xlu0 %1600
        %v1602 = vsel %vm1592, %v1551, 0.0
        %1603 = vadd.xlane.f32.xlu0 %v1602
        %v1604 = vpop.xlane.xlu0 %1603
        %v1605 = vsel %vm1592, %v1553, 0.0
        %1606 = vadd.xlane.f32.xlu0 %v1605
        %v1607 = vpop.xlane.xlu0 %1606
        %v1608 = vsel %vm1592, %v1555, 0.0
        %1609 = vadd.xlane.f32.xlu0 %v1608
        %v1610 = vpop.xlane.xlu0 %1609
        %v1611 = vsel %vm1592, %v1557, 0.0
        %1612 = vadd.xlane.f32.xlu0 %v1611
        %v1613 = vpop.xlane.xlu0 %1612
        %v1614 = vsel %vm1592, %v1559, 0.0
        %1615 = vadd.xlane.f32.xlu0 %v1614
        %v1616 = vpop.xlane.xlu0 %1615
        %v1617 = vsel %vm1592, %v1561, 0.0
        %1618 = vadd.xlane.f32.xlu0 %v1617
        %v1619 = vpop.xlane.xlu0 %1618
        %v1620 = vsel %vm1592, %v1563, 0.0
        %1621 = vadd.xlane.f32.xlu0 %v1620
        %v1622 = vpop.xlane.xlu0 %1621
        %v1623 = vsel %vm1592, %v1565, 0.0
        %1624 = vadd.xlane.f32.xlu0 %v1623
        %v1625 = vpop.xlane.xlu0 %1624
        %v1626 = vsel %vm1592, %v1567, 0.0
        %1627 = vadd.xlane.f32.xlu0 %v1626
        %v1628 = vpop.xlane.xlu0 %1627
        %v1629 = vsel %vm1592, %v1569, 0.0
        %1630 = vadd.xlane.f32.xlu0 %v1629
        %v1631 = vpop.xlane.xlu0 %1630
        %v1632 = vsel %vm1592, %v1571, 0.0
        %1633 = vadd.xlane.f32.xlu0 %v1632
        %v1634 = vpop.xlane.xlu0 %1633
        %v1635 = vsel %vm1592, %v1573, 0.0
        %1636 = vadd.xlane.f32.xlu0 %v1635
        %v1637 = vpop.xlane.xlu0 %1636
        %v1638 = vsel %vm1592, %v1575, 0.0
        %1639 = vadd.xlane.f32.xlu0 %v1638
        %v1640 = vpop.xlane.xlu0 %1639
        %v1641 = vlaneseq
        %v1642 = vshrl.u32 %v1641, 7
        %v1643 = vsub.s32 0, %v1642
        %v1644 = vrot.slane %v1388, %v1643
        %v1645 = vlaneseq
        %v1646 = vshrl.u32 %v1645, 7
        %v1647 = vsub.s32 0, %v1646
        %v1648 = vrot.slane %v1402, %v1647
        %v1649 = vlaneseq
        %v1650 = vshrl.u32 %v1649, 7
        %v1651 = vsub.s32 0, %v1650
        %v1652 = vrot.slane %v1410, %v1651
        %v1653 = vlaneseq
        %v1654 = vshrl.u32 %v1653, 7
        %v1655 = vsub.s32 0, %v1654
        %v1656 = vrot.slane %v1412, %v1655
        %v1657 = vlaneseq
        %v1658 = vshrl.u32 %v1657, 7
        %v1659 = vsub.s32 0, %v1658
        %v1660 = vrot.slane %v1395, %v1659
        %v1661 = vlaneseq
        %v1662 = vshrl.u32 %v1661, 7
        %v1663 = vsub.s32 0, %v1662
        %v1664 = vrot.slane %v1409, %v1663
        %v1665 = vlaneseq
        %v1666 = vshrl.u32 %v1665, 7
        %v1667 = vsub.s32 0, %v1666
        %v1668 = vrot.slane %v1411, %v1667
        %v1669 = vlaneseq
        %v1670 = vshrl.u32 %v1669, 7
        %v1671 = vsub.s32 0, %v1670
        %v1672 = vrot.slane %v1413, %v1671
        %v1681 = vmul.f32 %v1595, %v1644
        %v1682 = vmul.f32 %v1598, %v1644
        %v1683 = vmul.f32 %v1601, %v1648
        %v1684 = vmul.f32 %v1604, %v1648
        %v1685 = vmul.f32 %v1607, %v1652
        %v1686 = vmul.f32 %v1610, %v1652
        %v1687 = vmul.f32 %v1613, %v1656
        %v1688 = vmul.f32 %v1616, %v1656
        %v1689 = vmul.f32 %v1619, %v1660
        %v1690 = vmul.f32 %v1622, %v1660
        %v1691 = vmul.f32 %v1625, %v1664
        %v1692 = vmul.f32 %v1628, %v1664
        %v1693 = vmul.f32 %v1631, %v1668
        %v1694 = vmul.f32 %v1634, %v1668
        %v1695 = vmul.f32 %v1637, %v1672
        %v1696 = vmul.f32 %v1640, %v1672
        %1697 = vst.msk [vmem:[#allocation4] sm:$0xff] %vm1093, %v1681
        %1698 = vst.msk [vmem:[#allocation4 + $0x8] sm:$0xff] %vm1093, %v1682
        %1699 = vst.msk [vmem:[#allocation4 + $0x10] sm:$0xff] %vm1093, %v1683
        %1700 = vst.msk [vmem:[#allocation4 + $0x18] sm:$0xff] %vm1093, %v1684
        %1701 = vst.msk [vmem:[#allocation4 + $0x20] sm:$0xff] %vm1093, %v1685
        %1702 = vst.msk [vmem:[#allocation4 + $0x28] sm:$0xff] %vm1093, %v1686
        %1703 = vst.msk [vmem:[#allocation4 + $0x30] sm:$0xff] %vm1093, %v1687
        %1704 = vst.msk [vmem:[#allocation4 + $0x38] sm:$0xff] %vm1093, %v1688
        %1705 = vst.msk [vmem:[#allocation4 + $0x40] sm:$0xff] %vm1093, %v1689
        %1706 = vst.msk [vmem:[#allocation4 + $0x48] sm:$0xff] %vm1093, %v1690
        %1707 = vst.msk [vmem:[#allocation4 + $0x50] sm:$0xff] %vm1093, %v1691
        %1708 = vst.msk [vmem:[#allocation4 + $0x58] sm:$0xff] %vm1093, %v1692
        %1709 = vst.msk [vmem:[#allocation4 + $0x60] sm:$0xff] %vm1093, %v1693
        %1710 = vst.msk [vmem:[#allocation4 + $0x68] sm:$0xff] %vm1093, %v1694
        %1711 = vst.msk [vmem:[#allocation4 + $0x70] sm:$0xff] %vm1093, %v1695
        %1712 = vst.msk [vmem:[#allocation4 + $0x78] sm:$0xff] %vm1093, %v1696
        %v1713 = vld [vmem:[%s16] sm:$0xf]
        %v1714 = vld [vmem:[%s16 + $0x4] sm:$0xf]
        %v1715 = vld [vmem:[%s16 + $0x8] sm:$0xf]
        %v1716 = vld [vmem:[%s16 + $0xc] sm:$0xf]
        %1717 = vrot.lane.b32.xlu0 %v949, 64
        %v1718 = vpop.permute.xlu0 %1717
        %v1723 = vunpack.c.l.b16 %v1713
        %v1724 = vunpack.c.l.b16 %v1714
        %v1725 = vunpack.c.l.b16 %v1715
        %v1726 = vunpack.c.l.b16 %v1716
        %v1727 = vpack.c.b16 %v1724, %v1723
        %v1728 = vpack.c.b16 %v1726, %v1725
        %v1732 = vsel %vm773, %v1718, 0
        %1734 = vmatprep.subr.bf16.mxu0 0
        %1735 = vmatpush1.bf16.msra.mxu0 0
        %1736 = vmatprep.subr.bf16.mxu0 0
        %1737 = vmatpush1.bf16.msra.mxu0 0
        %1738 = vmatprep.subr.bf16.mxu0 0
        %1739 = vmatpush1.bf16.msra.mxu0 0
        %1740 = vmatprep.subr.bf16.mxu0 0
        %1741 = vmatpush1.bf16.msra.mxu0 0
        %1742 = vmatprep.subr.bf16.mxu0 0
        %1743 = vmatpush1.bf16.msra.mxu0 0
        %1744 = vmatprep.subr.bf16.mxu0 0
        %1745 = vmatpush1.bf16.msra.mxu0 0
        %1746 = vmatprep.subr.bf16.mxu0 0
        %1747 = vmatpush1.bf16.msra.mxu0 %v1728
        %1748 = vmatprep.subr.bf16.mxu0 0
        %1749 = vmatpush1.bf16.msra.mxu0 %v1727
        %1750 = vmatprep.subr.bf16.mxu0 0
        %1751 = vmatpush2.bf16.msra.mxu0 0
        %1752 = vmatprep.subr.bf16.mxu0 0
        %1753 = vmatpush2.bf16.msra.mxu0 0
        %1754 = vmatprep.subr.bf16.mxu0 0
        %1755 = vmatpush2.bf16.msra.mxu0 0
        %1756 = vmatprep.subr.bf16.mxu0 0
        %1757 = vmatpush2.bf16.msra.mxu0 0
        %1758 = vmatprep.subr.bf16.mxu0 0
        %1759 = vmatpush2.bf16.msra.mxu0 0
        %1760 = vmatprep.subr.bf16.mxu0 0
        %1761 = vmatpush2.bf16.msra.mxu0 0
        %1762 = vmatprep.subr.bf16.mxu0 0
        %1763 = vmatpush2.bf16.msra.mxu0 0
        %1764 = vmatprep.subr.bf16.mxu0 0
        %1765 = vmatpush2.bf16.msra.mxu0 0
        %1766 = vmatprep.mubr.bf16.mxu0 0
        %1767 = vmatmul.mubr.bf16.gmra.mxu0 %v1732
        %v1768 = vpop.f32.mrf.mxu0
        %v1769 = vadd.f32 0.0, %v1768
        %v1770 = vpop.f32.mrf.mxu0
        %v1771 = vpop.f32.mrf.mxu0
        %v1772 = vpop.f32.mrf.mxu0
        %1773 = vdwg.mxu0
        %v1774 = vld [vmem:[%s17] sm:$0xf]
        %v1775 = vlaneseq
        %v1776 = vshrl.u32 %v1775, 7
        %v1777 = vsub.s32 3, %v1776
        %v1778 = vrot.slane %v1774, %v1777
        %v1779 = vmul.f32 %v1778, %v1769
        %v1781 = vrot.slane %v1769, 7
        %v1783 = vsel %vm1017, 0.0, %v1781
        %v1784 = vlaneseq
        %v1785 = vshrl.u32 %v1784, 7
        %v1786 = vsub.s32 2, %v1785
        %v1787 = vrot.slane %v1774, %v1786
        %v1788 = vmul.f32 %v1787, %v1783
        %v1789 = vadd.f32 %v1779, %v1788
        %v1790 = vrot.slane %v1769, 6
        %v1792 = vsel %vm1027, 0.0, %v1790
        %v1793 = vlaneseq
        %v1794 = vshrl.u32 %v1793, 7
        %v1795 = vsub.s32 1, %v1794
        %v1796 = vrot.slane %v1774, %v1795
        %v1797 = vmul.f32 %v1796, %v1792
        %v1798 = vadd.f32 %v1789, %v1797
        %v1799 = vrot.slane %v1769, 5
        %v1801 = vsel %vm1037, 0.0, %v1799
        %v1802 = vlaneseq
        %v1803 = vshrl.u32 %v1802, 7
        %v1804 = vsub.s32 0, %v1803
        %v1805 = vrot.slane %v1774, %v1804
        %v1806 = vmul.f32 %v1805, %v1801
        %v1807 = vadd.f32 %v1798, %v1806
        %v1808 = vld [vmem:[%s18] sm:$0x1]
        %v1810 = vlaneseq
        %v1811 = vshrl.u32 %v1810, 7
        %v1812 = vsub.s32 0, %v1811
        %v1813 = vrot.slane %v1808, %v1812
        %v1815 = vadd.f32 %v1807, %v1813
        %v1816 = vxor.u32 %v1815, 2147483648
        %v1817 = vmul.f32 %v1816, 1.442695
        %v1818 = vpow.pop %v1817
        %v1819 = vadd.f32 %v1818, 1.0
        %v1820 = vrcp.pop %v1819
        %v1821 = vmul.f32 1.0, %v1820
        %v1822 = vmul.f32 %v1815, %v1821
        %v1823 = vld [vmem:[%s19] sm:$0xf]
        %v1824 = vld [vmem:[%s19 + $0x4] sm:$0xf]
        %v1825 = vld [vmem:[%s19 + $0x8] sm:$0xf]
        %v1826 = vld [vmem:[%s19 + $0xc] sm:$0xf]
        %v1827 = vld [vmem:[%s19 + $0x10] sm:$0xf]
        %v1828 = vld [vmem:[%s19 + $0x14] sm:$0xf]
        %v1829 = vld [vmem:[%s19 + $0x18] sm:$0xf]
        %v1830 = vld [vmem:[%s19 + $0x1c] sm:$0xf]
        %v1831 = vpack.c.bf16 %v1822, %v1822
        %v1840 = vunpack.c.l.b16 %v1823
        %v1841 = vunpack.c.l.b16 %v1824
        %v1842 = vunpack.c.l.b16 %v1825
        %v1843 = vunpack.c.l.b16 %v1826
        %v1844 = vunpack.c.l.b16 %v1827
        %v1845 = vunpack.c.l.b16 %v1828
        %v1846 = vunpack.c.l.b16 %v1829
        %v1847 = vunpack.c.l.b16 %v1830
        %v1848 = vpack.c.b16 %v1841, %v1840
        %v1849 = vpack.c.b16 %v1843, %v1842
        %v1850 = vpack.c.b16 %v1845, %v1844
        %v1851 = vpack.c.b16 %v1847, %v1846
        %v1857 = vsel %vm1093, %v1831, 0
        %1859 = vmatprep.subr.bf16.mxu0 0
        %1860 = vmatpush1.bf16.msra.mxu0 0
        %1861 = vmatprep.subr.bf16.mxu0 0
        %1862 = vmatpush1.bf16.msra.mxu0 0
        %1863 = vmatprep.subr.bf16.mxu0 0
        %1864 = vmatpush1.bf16.msra.mxu0 0
        %1865 = vmatprep.subr.bf16.mxu0 0
        %1866 = vmatpush1.bf16.msra.mxu0 0
        %1867 = vmatprep.subr.bf16.mxu0 0
        %1868 = vmatpush1.bf16.msra.mxu0 %v1851
        %1869 = vmatprep.subr.bf16.mxu0 0
        %1870 = vmatpush1.bf16.msra.mxu0 %v1850
        %1871 = vmatprep.subr.bf16.mxu0 0
        %1872 = vmatpush1.bf16.msra.mxu0 %v1849
        %1873 = vmatprep.subr.bf16.mxu0 0
        %1874 = vmatpush1.bf16.msra.mxu0 %v1848
        %1875 = vmatprep.subr.bf16.mxu0 0
        %1876 = vmatpush2.bf16.msra.mxu0 0
        %1877 = vmatprep.subr.bf16.mxu0 0
        %1878 = vmatpush2.bf16.msra.mxu0 0
        %1879 = vmatprep.subr.bf16.mxu0 0
        %1880 = vmatpush2.bf16.msra.mxu0 0
        %1881 = vmatprep.subr.bf16.mxu0 0
        %1882 = vmatpush2.bf16.msra.mxu0 0
        %1883 = vmatprep.subr.bf16.mxu0 0
        %1884 = vmatpush2.bf16.msra.mxu0 0
        %1885 = vmatprep.subr.bf16.mxu0 0
        %1886 = vmatpush2.bf16.msra.mxu0 0
        %1887 = vmatprep.subr.bf16.mxu0 0
        %1888 = vmatpush2.bf16.msra.mxu0 0
        %1889 = vmatprep.subr.bf16.mxu0 0
        %1890 = vmatpush2.bf16.msra.mxu0 0
        %1891 = vmatprep.mubr.bf16.mxu0 0
        %1892 = vmatmul.mubr.bf16.gmra.mxu0 %v1857
        %v1893 = vpop.f32.mrf.mxu0
        %v1894 = vadd.f32 0.0, %v1893
        %v1895 = vpop.f32.mrf.mxu0
        %v1896 = vpop.f32.mrf.mxu0
        %v1897 = vpop.f32.mrf.mxu0
        %1898 = vdwg.mxu0
        %v1899 = vld [vmem:[%s20] sm:$0x1]
        %v1900 = vpack.c.bf16 %v1894, %v1894
        %v1901 = vld [vmem:[%s21] sm:$0x1]
        %v1903 = vlaneseq
        %v1904 = vshrl.u32 %v1903, 7
        %v1905 = vsub.s32 0, %v1904
        %v1906 = vrot.slane %v1901, %v1905
        %v1909 = vsel %vm1146, %v1900, 0
        %v1912 = vsel %vm1017, %v1899, 0
        %1914 = vmatprep.subr.bf16.mxu0 0
        %1915 = vmatpush1.bf16.msra.mxu0 0
        %1916 = vmatprep.subr.bf16.mxu0 0
        %1917 = vmatpush1.bf16.msra.mxu0 0
        %1918 = vmatprep.subr.bf16.mxu0 0
        %1919 = vmatpush1.bf16.msra.mxu0 0
        %1920 = vmatprep.subr.bf16.mxu0 0
        %1921 = vmatpush1.bf16.msra.mxu0 0
        %1922 = vmatprep.subr.bf16.mxu0 0
        %1923 = vmatpush1.bf16.msra.mxu0 0
        %1924 = vmatprep.subr.bf16.mxu0 0
        %1925 = vmatpush1.bf16.msra.mxu0 0
        %1926 = vmatprep.subr.bf16.mxu0 0
        %1927 = vmatpush1.bf16.msra.mxu0 0
        %1928 = vmatprep.subr.bf16.mxu0 0
        %1929 = vmatpush1.bf16.msra.mxu0 %v1912
        %1930 = vmatprep.subr.bf16.mxu0 0
        %1931 = vmatpush2.bf16.msra.mxu0 0
        %1932 = vmatprep.subr.bf16.mxu0 0
        %1933 = vmatpush2.bf16.msra.mxu0 0
        %1934 = vmatprep.subr.bf16.mxu0 0
        %1935 = vmatpush2.bf16.msra.mxu0 0
        %1936 = vmatprep.subr.bf16.mxu0 0
        %1937 = vmatpush2.bf16.msra.mxu0 0
        %1938 = vmatprep.subr.bf16.mxu0 0
        %1939 = vmatpush2.bf16.msra.mxu0 0
        %1940 = vmatprep.subr.bf16.mxu0 0
        %1941 = vmatpush2.bf16.msra.mxu0 0
        %1942 = vmatprep.subr.bf16.mxu0 0
        %1943 = vmatpush2.bf16.msra.mxu0 0
        %1944 = vmatprep.subr.bf16.mxu0 0
        %1945 = vmatpush2.bf16.msra.mxu0 0
        %1946 = vmatprep.mubr.bf16.mxu0 0
        %1947 = vmatmul.mubr.bf16.gmra.mxu0 %v1909
        %v1948 = vpop.f32.mrf.mxu0
        %v1949 = vadd.f32 %v1906, %v1948
        %v1950 = vpop.f32.mrf.mxu0
        %v1951 = vpop.f32.mrf.mxu0
        %v1952 = vpop.f32.mrf.mxu0
        %1953 = vdwg.mxu0
        %vm1954 = vcmp.gt.f32.partialorder %v1949, 20.0
        %v1955 = vmin.f32 %v1949, 20.0
        %v1956 = vmul.f32 %v1955, 1.442695
        %v1957 = vpow.pop %v1956
        %v1958 = vadd.f32 %v1957, 1.0
        %v1959 = vlog2.pop %v1958
        %v1960 = vmul.f32 %v1959, 0.6931472
        %v1961 = vsel %vm1954, %v1949, %v1960
        %v1962 = vld [vmem:[%s22] sm:$0xff]
        %v1963 = vld [vmem:[%s22 + $0x8] sm:$0xff]
        %v1964 = vmul.f32 %v1962, 1.442695
        %v1965 = vpow.pop %v1964
        %v1966 = vmul.f32 %v1963, 1.442695
        %v1967 = vpow.pop %v1966
        %v1968 = vsub.f32 0.0, %v1965
        %v1969 = vsub.f32 0.0, %v1967
        %v1971 = vcombine.high %v1961, %v1961
        %v1973 = vunpack.c.l.s4 1966171168
        %v1974 = vunpack.c.0.s8 %v1973
        %v1975 = vlaneseq
        %v1976 = vshrl.u32 %v1975, 7
        %v1977 = vsub.s32 %v1974, %v1976
        %v1978 = vrot.slane %v1961, %v1977
        %v1980 = vunpack.c.l.s4 1966171168
        %v1981 = vunpack.c.0.s8 %v1980
        %v1982 = vlaneseq
        %v1983 = vshrl.u32 %v1982, 7
        %v1984 = vsub.s32 %v1981, %v1983
        %v1985 = vrot.slane %v1971, %v1984
        %v1986 = vcombine.high %v1978, %v1978
        %v1987 = vcombine.high %v1985, %v1985
        %v1989 = vunpack.c.l.s4 1966171168
        %v1990 = vunpack.c.0.s8 %v1989
        %v1991 = vlaneseq
        %v1992 = vshrl.u32 %v1991, 7
        %v1993 = vsub.s32 %v1990, %v1992
        %v1994 = vrot.slane %v1978, %v1993
        %v1996 = vunpack.c.l.s4 1966171168
        %v1997 = vunpack.c.0.s8 %v1996
        %v1998 = vlaneseq
        %v1999 = vshrl.u32 %v1998, 7
        %v2000 = vsub.s32 %v1997, %v1999
        %v2001 = vrot.slane %v1985, %v2000
        %v2003 = vunpack.c.l.s4 1966171168
        %v2004 = vunpack.c.0.s8 %v2003
        %v2005 = vlaneseq
        %v2006 = vshrl.u32 %v2005, 7
        %v2007 = vsub.s32 %v2004, %v2006
        %v2008 = vrot.slane %v1986, %v2007
        %v2010 = vunpack.c.l.s4 1966171168
        %v2011 = vunpack.c.0.s8 %v2010
        %v2012 = vlaneseq
        %v2013 = vshrl.u32 %v2012, 7
        %v2014 = vsub.s32 %v2011, %v2013
        %v2015 = vrot.slane %v1987, %v2014
        %v2016 = vcombine.high %v1994, %v1994
        %v2017 = vcombine.high %v2001, %v2001
        %v2018 = vcombine.high %v2008, %v2008
        %v2019 = vcombine.high %v2015, %v2015
        %v2020 = vlaneseq
        %v2021 = vshrl.u32 %v2020, 7
        %v2022 = vsub.s32 0, %v2021
        %v2023 = vrot.slane %v1994, %v2022
        %v2024 = vlaneseq
        %v2025 = vshrl.u32 %v2024, 7
        %v2026 = vsub.s32 0, %v2025
        %v2027 = vrot.slane %v2008, %v2026
        %v2028 = vlaneseq
        %v2029 = vshrl.u32 %v2028, 7
        %v2030 = vsub.s32 0, %v2029
        %v2031 = vrot.slane %v2016, %v2030
        %v2032 = vlaneseq
        %v2033 = vshrl.u32 %v2032, 7
        %v2034 = vsub.s32 0, %v2033
        %v2035 = vrot.slane %v2018, %v2034
        %v2036 = vlaneseq
        %v2037 = vshrl.u32 %v2036, 7
        %v2038 = vsub.s32 0, %v2037
        %v2039 = vrot.slane %v2001, %v2038
        %v2040 = vlaneseq
        %v2041 = vshrl.u32 %v2040, 7
        %v2042 = vsub.s32 0, %v2041
        %v2043 = vrot.slane %v2015, %v2042
        %v2044 = vlaneseq
        %v2045 = vshrl.u32 %v2044, 7
        %v2046 = vsub.s32 0, %v2045
        %v2047 = vrot.slane %v2017, %v2046
        %v2048 = vlaneseq
        %v2049 = vshrl.u32 %v2048, 7
        %v2050 = vsub.s32 0, %v2049
        %v2051 = vrot.slane %v2019, %v2050
        %v2060 = vmul.f32 %v2023, %v1968
        %v2061 = vmul.f32 %v2023, %v1969
        %v2062 = vmul.f32 %v2027, %v1968
        %v2063 = vmul.f32 %v2027, %v1969
        %v2064 = vmul.f32 %v2031, %v1968
        %v2065 = vmul.f32 %v2031, %v1969
        %v2066 = vmul.f32 %v2035, %v1968
        %v2067 = vmul.f32 %v2035, %v1969
        %v2068 = vmul.f32 %v2039, %v1968
        %v2069 = vmul.f32 %v2039, %v1969
        %v2070 = vmul.f32 %v2043, %v1968
        %v2071 = vmul.f32 %v2043, %v1969
        %v2072 = vmul.f32 %v2047, %v1968
        %v2073 = vmul.f32 %v2047, %v1969
        %v2074 = vmul.f32 %v2051, %v1968
        %v2075 = vmul.f32 %v2051, %v1969
        %v2076 = vmul.f32 %v2060, 1.442695
        %v2077 = vpow.pop %v2076
        %v2078 = vmul.f32 %v2061, 1.442695
        %v2079 = vpow.pop %v2078
        %v2080 = vmul.f32 %v2062, 1.442695
        %v2081 = vpow.pop %v2080
        %v2082 = vmul.f32 %v2063, 1.442695
        %v2083 = vpow.pop %v2082
        %v2084 = vmul.f32 %v2064, 1.442695
        %v2085 = vpow.pop %v2084
        %v2086 = vmul.f32 %v2065, 1.442695
        %v2087 = vpow.pop %v2086
        %v2088 = vmul.f32 %v2066, 1.442695
        %v2089 = vpow.pop %v2088
        %v2090 = vmul.f32 %v2067, 1.442695
        %v2091 = vpow.pop %v2090
        %v2092 = vmul.f32 %v2068, 1.442695
        %v2093 = vpow.pop %v2092
        %v2094 = vmul.f32 %v2069, 1.442695
        %v2095 = vpow.pop %v2094
        %v2096 = vmul.f32 %v2070, 1.442695
        %v2097 = vpow.pop %v2096
        %v2098 = vmul.f32 %v2071, 1.442695
        %v2099 = vpow.pop %v2098
        %v2100 = vmul.f32 %v2072, 1.442695
        %v2101 = vpow.pop %v2100
        %v2102 = vmul.f32 %v2073, 1.442695
        %v2103 = vpow.pop %v2102
        %v2104 = vmul.f32 %v2074, 1.442695
        %v2105 = vpow.pop %v2104
        %v2106 = vmul.f32 %v2075, 1.442695
        %v2107 = vpow.pop %v2106
        %2108 = vst.msk [vmem:[#allocation3] sm:$0xff] %vm1093, %v2077
        %2109 = vst.msk [vmem:[#allocation3 + $0x8] sm:$0xff] %vm1093, %v2079
        %2110 = vst.msk [vmem:[#allocation3 + $0x10] sm:$0xff] %vm1093, %v2081
        %2111 = vst.msk [vmem:[#allocation3 + $0x18] sm:$0xff] %vm1093, %v2083
        %2112 = vst.msk [vmem:[#allocation3 + $0x20] sm:$0xff] %vm1093, %v2085
        %2113 = vst.msk [vmem:[#allocation3 + $0x28] sm:$0xff] %vm1093, %v2087
        %2114 = vst.msk [vmem:[#allocation3 + $0x30] sm:$0xff] %vm1093, %v2089
        %2115 = vst.msk [vmem:[#allocation3 + $0x38] sm:$0xff] %vm1093, %v2091
        %2116 = vst.msk [vmem:[#allocation3 + $0x40] sm:$0xff] %vm1093, %v2093
        %2117 = vst.msk [vmem:[#allocation3 + $0x48] sm:$0xff] %vm1093, %v2095
        %2118 = vst.msk [vmem:[#allocation3 + $0x50] sm:$0xff] %vm1093, %v2097
        %2119 = vst.msk [vmem:[#allocation3 + $0x58] sm:$0xff] %vm1093, %v2099
        %2120 = vst.msk [vmem:[#allocation3 + $0x60] sm:$0xff] %vm1093, %v2101
        %2121 = vst.msk [vmem:[#allocation3 + $0x68] sm:$0xff] %vm1093, %v2103
        %2122 = vst.msk [vmem:[#allocation3 + $0x70] sm:$0xff] %vm1093, %v2105
        %2123 = vst.msk [vmem:[#allocation3 + $0x78] sm:$0xff] %vm1093, %v2107
        %v2124 = vmul.f32 %v1961, %v1822
        %v2126 = vcombine.high %v2124, %v2124
        %v2128 = vunpack.c.l.s4 1966171168
        %v2129 = vunpack.c.0.s8 %v2128
        %v2130 = vlaneseq
        %v2131 = vshrl.u32 %v2130, 7
        %v2132 = vsub.s32 %v2129, %v2131
        %v2133 = vrot.slane %v2124, %v2132
        %v2135 = vunpack.c.l.s4 1966171168
        %v2136 = vunpack.c.0.s8 %v2135
        %v2137 = vlaneseq
        %v2138 = vshrl.u32 %v2137, 7
        %v2139 = vsub.s32 %v2136, %v2138
        %v2140 = vrot.slane %v2126, %v2139
        %v2141 = vcombine.high %v2133, %v2133
        %v2142 = vcombine.high %v2140, %v2140
        %v2144 = vunpack.c.l.s4 1966171168
        %v2145 = vunpack.c.0.s8 %v2144
        %v2146 = vlaneseq
        %v2147 = vshrl.u32 %v2146, 7
        %v2148 = vsub.s32 %v2145, %v2147
        %v2149 = vrot.slane %v2133, %v2148
        %v2151 = vunpack.c.l.s4 1966171168
        %v2152 = vunpack.c.0.s8 %v2151
        %v2153 = vlaneseq
        %v2154 = vshrl.u32 %v2153, 7
        %v2155 = vsub.s32 %v2152, %v2154
        %v2156 = vrot.slane %v2140, %v2155
        %v2158 = vunpack.c.l.s4 1966171168
        %v2159 = vunpack.c.0.s8 %v2158
        %v2160 = vlaneseq
        %v2161 = vshrl.u32 %v2160, 7
        %v2162 = vsub.s32 %v2159, %v2161
        %v2163 = vrot.slane %v2141, %v2162
        %v2165 = vunpack.c.l.s4 1966171168
        %v2166 = vunpack.c.0.s8 %v2165
        %v2167 = vlaneseq
        %v2168 = vshrl.u32 %v2167, 7
        %v2169 = vsub.s32 %v2166, %v2168
        %v2170 = vrot.slane %v2142, %v2169
        %v2171 = vcombine.high %v2149, %v2149
        %v2172 = vcombine.high %v2156, %v2156
        %v2173 = vcombine.high %v2163, %v2163
        %v2174 = vcombine.high %v2170, %v2170
        %v2176 = vcombine.high %v1894, %v1894
        %v2178 = vunpack.c.l.s4 1966171168
        %v2179 = vunpack.c.0.s8 %v2178
        %v2180 = vlaneseq
        %v2181 = vshrl.u32 %v2180, 7
        %v2182 = vsub.s32 %v2179, %v2181
        %v2183 = vrot.slane %v1894, %v2182
        %v2185 = vunpack.c.l.s4 1966171168
        %v2186 = vunpack.c.0.s8 %v2185
        %v2187 = vlaneseq
        %v2188 = vshrl.u32 %v2187, 7
        %v2189 = vsub.s32 %v2186, %v2188
        %v2190 = vrot.slane %v2176, %v2189
        %v2191 = vcombine.high %v2183, %v2183
        %v2192 = vcombine.high %v2190, %v2190
        %v2194 = vunpack.c.l.s4 1966171168
        %v2195 = vunpack.c.0.s8 %v2194
        %v2196 = vlaneseq
        %v2197 = vshrl.u32 %v2196, 7
        %v2198 = vsub.s32 %v2195, %v2197
        %v2199 = vrot.slane %v2183, %v2198
        %v2201 = vunpack.c.l.s4 1966171168
        %v2202 = vunpack.c.0.s8 %v2201
        %v2203 = vlaneseq
        %v2204 = vshrl.u32 %v2203, 7
        %v2205 = vsub.s32 %v2202, %v2204
        %v2206 = vrot.slane %v2190, %v2205
        %v2208 = vunpack.c.l.s4 1966171168
        %v2209 = vunpack.c.0.s8 %v2208
        %v2210 = vlaneseq
        %v2211 = vshrl.u32 %v2210, 7
        %v2212 = vsub.s32 %v2209, %v2211
        %v2213 = vrot.slane %v2191, %v2212
        %v2215 = vunpack.c.l.s4 1966171168
        %v2216 = vunpack.c.0.s8 %v2215
        %v2217 = vlaneseq
        %v2218 = vshrl.u32 %v2217, 7
        %v2219 = vsub.s32 %v2216, %v2218
        %v2220 = vrot.slane %v2192, %v2219
        %v2221 = vcombine.high %v2199, %v2199
        %v2222 = vcombine.high %v2206, %v2206
        %v2223 = vcombine.high %v2213, %v2213
        %v2224 = vcombine.high %v2220, %v2220
        %v2225 = vlaneseq
        %v2226 = vshrl.u32 %v2225, 7
        %v2227 = vsub.s32 0, %v2226
        %v2228 = vrot.slane %v2199, %v2227
        %v2229 = vlaneseq
        %v2230 = vshrl.u32 %v2229, 7
        %v2231 = vsub.s32 0, %v2230
        %v2232 = vrot.slane %v2213, %v2231
        %v2233 = vlaneseq
        %v2234 = vshrl.u32 %v2233, 7
        %v2235 = vsub.s32 0, %v2234
        %v2236 = vrot.slane %v2221, %v2235
        %v2237 = vlaneseq
        %v2238 = vshrl.u32 %v2237, 7
        %v2239 = vsub.s32 0, %v2238
        %v2240 = vrot.slane %v2223, %v2239
        %v2241 = vlaneseq
        %v2242 = vshrl.u32 %v2241, 7
        %v2243 = vsub.s32 0, %v2242
        %v2244 = vrot.slane %v2206, %v2243
        %v2245 = vlaneseq
        %v2246 = vshrl.u32 %v2245, 7
        %v2247 = vsub.s32 0, %v2246
        %v2248 = vrot.slane %v2220, %v2247
        %v2249 = vlaneseq
        %v2250 = vshrl.u32 %v2249, 7
        %v2251 = vsub.s32 0, %v2250
        %v2252 = vrot.slane %v2222, %v2251
        %v2253 = vlaneseq
        %v2254 = vshrl.u32 %v2253, 7
        %v2255 = vsub.s32 0, %v2254
        %v2256 = vrot.slane %v2224, %v2255
        %v2265 = vmul.f32 %v2228, %v1507
        %v2266 = vmul.f32 %v2228, %v1509
        %v2267 = vmul.f32 %v2232, %v1507
        %v2268 = vmul.f32 %v2232, %v1509
        %v2269 = vmul.f32 %v2236, %v1507
        %v2270 = vmul.f32 %v2236, %v1509
        %v2271 = vmul.f32 %v2240, %v1507
        %v2272 = vmul.f32 %v2240, %v1509
        %v2273 = vmul.f32 %v2244, %v1507
        %v2274 = vmul.f32 %v2244, %v1509
        %v2275 = vmul.f32 %v2248, %v1507
        %v2276 = vmul.f32 %v2248, %v1509
        %v2277 = vmul.f32 %v2252, %v1507
        %v2278 = vmul.f32 %v2252, %v1509
        %v2279 = vmul.f32 %v2256, %v1507
        %v2280 = vmul.f32 %v2256, %v1509
        %2297 = vrot.lane.b32.xlu0 %v2265, 126
        %v2298 = vpop.permute.xlu0 %2297
        %2299 = vrot.lane.b32.xlu0 %v2266, 126
        %v2300 = vpop.permute.xlu0 %2299
        %2301 = vrot.lane.b32.xlu0 %v2267, 126
        %v2302 = vpop.permute.xlu0 %2301
        %2303 = vrot.lane.b32.xlu0 %v2268, 126
        %v2304 = vpop.permute.xlu0 %2303
        %2305 = vrot.lane.b32.xlu0 %v2269, 126
        %v2306 = vpop.permute.xlu0 %2305
        %2307 = vrot.lane.b32.xlu0 %v2270, 126
        %v2308 = vpop.permute.xlu0 %2307
        %2309 = vrot.lane.b32.xlu0 %v2271, 126
        %v2310 = vpop.permute.xlu0 %2309
        %2311 = vrot.lane.b32.xlu0 %v2272, 126
        %v2312 = vpop.permute.xlu0 %2311
        %2313 = vrot.lane.b32.xlu0 %v2273, 126
        %v2314 = vpop.permute.xlu0 %2313
        %2315 = vrot.lane.b32.xlu0 %v2274, 126
        %v2316 = vpop.permute.xlu0 %2315
        %2317 = vrot.lane.b32.xlu0 %v2275, 126
        %v2318 = vpop.permute.xlu0 %2317
        %2319 = vrot.lane.b32.xlu0 %v2276, 126
        %v2320 = vpop.permute.xlu0 %2319
        %2321 = vrot.lane.b32.xlu0 %v2277, 126
        %v2322 = vpop.permute.xlu0 %2321
        %2323 = vrot.lane.b32.xlu0 %v2278, 126
        %v2324 = vpop.permute.xlu0 %2323
        %2325 = vrot.lane.b32.xlu0 %v2279, 126
        %v2326 = vpop.permute.xlu0 %2325
        %2327 = vrot.lane.b32.xlu0 %v2280, 126
        %v2328 = vpop.permute.xlu0 %2327
        %v2345 = vsel %vm1592, %v2298, 0.0
        %2346 = vadd.xlane.f32.xlu0 %v2345
        %v2347 = vpop.xlane.xlu0 %2346
        %v2348 = vsel %vm1592, %v2300, 0.0
        %2349 = vadd.xlane.f32.xlu0 %v2348
        %v2350 = vpop.xlane.xlu0 %2349
        %v2351 = vsel %vm1592, %v2302, 0.0
        %2352 = vadd.xlane.f32.xlu0 %v2351
        %v2353 = vpop.xlane.xlu0 %2352
        %v2354 = vsel %vm1592, %v2304, 0.0
        %2355 = vadd.xlane.f32.xlu0 %v2354
        %v2356 = vpop.xlane.xlu0 %2355
        %v2357 = vsel %vm1592, %v2306, 0.0
        %2358 = vadd.xlane.f32.xlu0 %v2357
        %v2359 = vpop.xlane.xlu0 %2358
        %v2360 = vsel %vm1592, %v2308, 0.0
        %2361 = vadd.xlane.f32.xlu0 %v2360
        %v2362 = vpop.xlane.xlu0 %2361
        %v2363 = vsel %vm1592, %v2310, 0.0
        %2364 = vadd.xlane.f32.xlu0 %v2363
        %v2365 = vpop.xlane.xlu0 %2364
        %v2366 = vsel %vm1592, %v2312, 0.0
        %2367 = vadd.xlane.f32.xlu0 %v2366
        %v2368 = vpop.xlane.xlu0 %2367
        %v2369 = vsel %vm1592, %v2314, 0.0
        %2370 = vadd.xlane.f32.xlu0 %v2369
        %v2371 = vpop.xlane.xlu0 %2370
        %v2372 = vsel %vm1592, %v2316, 0.0
        %2373 = vadd.xlane.f32.xlu0 %v2372
        %v2374 = vpop.xlane.xlu0 %2373
        %v2375 = vsel %vm1592, %v2318, 0.0
        %2376 = vadd.xlane.f32.xlu0 %v2375
        %v2377 = vpop.xlane.xlu0 %2376
        %v2378 = vsel %vm1592, %v2320, 0.0
        %2379 = vadd.xlane.f32.xlu0 %v2378
        %v2380 = vpop.xlane.xlu0 %2379
        %v2381 = vsel %vm1592, %v2322, 0.0
        %2382 = vadd.xlane.f32.xlu0 %v2381
        %v2383 = vpop.xlane.xlu0 %2382
        %v2384 = vsel %vm1592, %v2324, 0.0
        %2385 = vadd.xlane.f32.xlu0 %v2384
        %v2386 = vpop.xlane.xlu0 %2385
        %v2387 = vsel %vm1592, %v2326, 0.0
        %2388 = vadd.xlane.f32.xlu0 %v2387
        %v2389 = vpop.xlane.xlu0 %2388
        %v2390 = vsel %vm1592, %v2328, 0.0
        %2391 = vadd.xlane.f32.xlu0 %v2390
        %v2392 = vpop.xlane.xlu0 %2391
        %v2393 = vlaneseq
        %v2394 = vshrl.u32 %v2393, 7
        %v2395 = vsub.s32 0, %v2394
        %v2396 = vrot.slane %v2149, %v2395
        %v2397 = vlaneseq
        %v2398 = vshrl.u32 %v2397, 7
        %v2399 = vsub.s32 0, %v2398
        %v2400 = vrot.slane %v2163, %v2399
        %v2401 = vlaneseq
        %v2402 = vshrl.u32 %v2401, 7
        %v2403 = vsub.s32 0, %v2402
        %v2404 = vrot.slane %v2171, %v2403
        %v2405 = vlaneseq
        %v2406 = vshrl.u32 %v2405, 7
        %v2407 = vsub.s32 0, %v2406
        %v2408 = vrot.slane %v2173, %v2407
        %v2409 = vlaneseq
        %v2410 = vshrl.u32 %v2409, 7
        %v2411 = vsub.s32 0, %v2410
        %v2412 = vrot.slane %v2156, %v2411
        %v2413 = vlaneseq
        %v2414 = vshrl.u32 %v2413, 7
        %v2415 = vsub.s32 0, %v2414
        %v2416 = vrot.slane %v2170, %v2415
        %v2417 = vlaneseq
        %v2418 = vshrl.u32 %v2417, 7
        %v2419 = vsub.s32 0, %v2418
        %v2420 = vrot.slane %v2172, %v2419
        %v2421 = vlaneseq
        %v2422 = vshrl.u32 %v2421, 7
        %v2423 = vsub.s32 0, %v2422
        %v2424 = vrot.slane %v2174, %v2423
        %v2433 = vmul.f32 %v2347, %v2396
        %v2434 = vmul.f32 %v2350, %v2396
        %v2435 = vmul.f32 %v2353, %v2400
        %v2436 = vmul.f32 %v2356, %v2400
        %v2437 = vmul.f32 %v2359, %v2404
        %v2438 = vmul.f32 %v2362, %v2404
        %v2439 = vmul.f32 %v2365, %v2408
        %v2440 = vmul.f32 %v2368, %v2408
        %v2441 = vmul.f32 %v2371, %v2412
        %v2442 = vmul.f32 %v2374, %v2412
        %v2443 = vmul.f32 %v2377, %v2416
        %v2444 = vmul.f32 %v2380, %v2416
        %v2445 = vmul.f32 %v2383, %v2420
        %v2446 = vmul.f32 %v2386, %v2420
        %v2447 = vmul.f32 %v2389, %v2424
        %v2448 = vmul.f32 %v2392, %v2424
        %2449 = vst.msk [vmem:[#allocation5] sm:$0xff] %vm1093, %v2433
        %2450 = vst.msk [vmem:[#allocation5 + $0x8] sm:$0xff] %vm1093, %v2434
        %2451 = vst.msk [vmem:[#allocation5 + $0x10] sm:$0xff] %vm1093, %v2435
        %2452 = vst.msk [vmem:[#allocation5 + $0x18] sm:$0xff] %vm1093, %v2436
        %2453 = vst.msk [vmem:[#allocation5 + $0x20] sm:$0xff] %vm1093, %v2437
        %2454 = vst.msk [vmem:[#allocation5 + $0x28] sm:$0xff] %vm1093, %v2438
        %2455 = vst.msk [vmem:[#allocation5 + $0x30] sm:$0xff] %vm1093, %v2439
        %2456 = vst.msk [vmem:[#allocation5 + $0x38] sm:$0xff] %vm1093, %v2440
        %2457 = vst.msk [vmem:[#allocation5 + $0x40] sm:$0xff] %vm1093, %v2441
        %2458 = vst.msk [vmem:[#allocation5 + $0x48] sm:$0xff] %vm1093, %v2442
        %2459 = vst.msk [vmem:[#allocation5 + $0x50] sm:$0xff] %vm1093, %v2443
        %2460 = vst.msk [vmem:[#allocation5 + $0x58] sm:$0xff] %vm1093, %v2444
        %2461 = vst.msk [vmem:[#allocation5 + $0x60] sm:$0xff] %vm1093, %v2445
        %2462 = vst.msk [vmem:[#allocation5 + $0x68] sm:$0xff] %vm1093, %v2446
        %2463 = vst.msk [vmem:[#allocation5 + $0x70] sm:$0xff] %vm1093, %v2447
        %2464 = vst.msk [vmem:[#allocation5 + $0x78] sm:$0xff] %vm1093, %v2448
        %v2465 = vld [vmem:[#allocation2] sm:$0xff]
        %v2466 = vld [vmem:[#allocation2 + $0x8] sm:$0xff]
        %v2467 = vmul.f32 %v2465, 0.0
        %v2468 = vmul.f32 %v2466, 0.0
        %v2469 = vld [vmem:[#allocation4] sm:$0xff]
        %v2470 = vld [vmem:[#allocation4 + $0x8] sm:$0xff]
        %v2471 = vadd.f32 %v2467, %v2469
        %v2472 = vadd.f32 %v2468, %v2470
        %2473 = vst.msk [vmem:[#allocation6] sm:$0xff] %vm1093, %v2471
        %2474 = vst.msk [vmem:[#allocation6 + $0x8] sm:$0xff] %vm1093, %v2472
        %v2475 = vld [vmem:[#allocation3] sm:$0xff]
        %v2476 = vld [vmem:[#allocation3 + $0x8] sm:$0xff]
        %v2477 = vmul.f32 %v2475, 0.0
        %v2478 = vmul.f32 %v2476, 0.0
        %v2479 = vld [vmem:[#allocation5] sm:$0xff]
        %v2480 = vld [vmem:[#allocation5 + $0x8] sm:$0xff]
        %v2481 = vadd.f32 %v2477, %v2479
        %v2482 = vadd.f32 %v2478, %v2480
        %2483 = vst.msk [vmem:[#allocation7] sm:$0xff] %vm1093, %v2481
        %2484 = vst.msk [vmem:[#allocation7 + $0x8] sm:$0xff] %vm1093, %v2482
        %s2485 = scalar_lea.vmem [#allocation2], 16
        %v2486 = vld [vmem:[%s2485] sm:$0xff]
        %v2487 = vld [vmem:[%s2485 + $0x8] sm:$0xff]
        %v2488 = vmul.f32 %v2486, %v2471
        %v2489 = vmul.f32 %v2487, %v2472
        %s2490 = scalar_lea.vmem [#allocation4], 16
        %v2491 = vld [vmem:[%s2490] sm:$0xff]
        %v2492 = vld [vmem:[%s2490 + $0x8] sm:$0xff]
        %v2493 = vadd.f32 %v2488, %v2491
        %v2494 = vadd.f32 %v2489, %v2492
        %s2495 = scalar_lea.vmem [#allocation6], 16
        %2496 = vst.msk [vmem:[%s2495] sm:$0xff] %vm1093, %v2493
        %2497 = vst.msk [vmem:[%s2495 + $0x8] sm:$0xff] %vm1093, %v2494
        %s2498 = scalar_lea.vmem [#allocation3], 16
        %v2499 = vld [vmem:[%s2498] sm:$0xff]
        %v2500 = vld [vmem:[%s2498 + $0x8] sm:$0xff]
        %v2501 = vmul.f32 %v2499, %v2481
        %v2502 = vmul.f32 %v2500, %v2482
        %s2503 = scalar_lea.vmem [#allocation5], 16
        %v2504 = vld [vmem:[%s2503] sm:$0xff]
        %v2505 = vld [vmem:[%s2503 + $0x8] sm:$0xff]
        %v2506 = vadd.f32 %v2501, %v2504
        %v2507 = vadd.f32 %v2502, %v2505
        %s2508 = scalar_lea.vmem [#allocation7], 16
        %2509 = vst.msk [vmem:[%s2508] sm:$0xff] %vm1093, %v2506
        %2510 = vst.msk [vmem:[%s2508 + $0x8] sm:$0xff] %vm1093, %v2507
        %s2511 = scalar_lea.vmem [#allocation2], 32
        %v2512 = vld [vmem:[%s2511] sm:$0xff]
        %v2513 = vld [vmem:[%s2511 + $0x8] sm:$0xff]
        %v2514 = vmul.f32 %v2512, %v2493
        %v2515 = vmul.f32 %v2513, %v2494
        %s2516 = scalar_lea.vmem [#allocation4], 32
        %v2517 = vld [vmem:[%s2516] sm:$0xff]
        %v2518 = vld [vmem:[%s2516 + $0x8] sm:$0xff]
        %v2519 = vadd.f32 %v2514, %v2517
        %v2520 = vadd.f32 %v2515, %v2518
        %s2521 = scalar_lea.vmem [#allocation6], 32
        %2522 = vst.msk [vmem:[%s2521] sm:$0xff] %vm1093, %v2519
        %2523 = vst.msk [vmem:[%s2521 + $0x8] sm:$0xff] %vm1093, %v2520
        %s2524 = scalar_lea.vmem [#allocation3], 32
        %v2525 = vld [vmem:[%s2524] sm:$0xff]
        %v2526 = vld [vmem:[%s2524 + $0x8] sm:$0xff]
        %v2527 = vmul.f32 %v2525, %v2506
        %v2528 = vmul.f32 %v2526, %v2507
        %s2529 = scalar_lea.vmem [#allocation5], 32
        %v2530 = vld [vmem:[%s2529] sm:$0xff]
        %v2531 = vld [vmem:[%s2529 + $0x8] sm:$0xff]
        %v2532 = vadd.f32 %v2527, %v2530
        %v2533 = vadd.f32 %v2528, %v2531
        %s2534 = scalar_lea.vmem [#allocation7], 32
        %2535 = vst.msk [vmem:[%s2534] sm:$0xff] %vm1093, %v2532
        %2536 = vst.msk [vmem:[%s2534 + $0x8] sm:$0xff] %vm1093, %v2533
        %s2537 = scalar_lea.vmem [#allocation2], 48
        %v2538 = vld [vmem:[%s2537] sm:$0xff]
        %v2539 = vld [vmem:[%s2537 + $0x8] sm:$0xff]
        %v2540 = vmul.f32 %v2538, %v2519
        %v2541 = vmul.f32 %v2539, %v2520
        %s2542 = scalar_lea.vmem [#allocation4], 48
        %v2543 = vld [vmem:[%s2542] sm:$0xff]
        %v2544 = vld [vmem:[%s2542 + $0x8] sm:$0xff]
        %v2545 = vadd.f32 %v2540, %v2543
        %v2546 = vadd.f32 %v2541, %v2544
        %s2547 = scalar_lea.vmem [#allocation6], 48
        %2548 = vst.msk [vmem:[%s2547] sm:$0xff] %vm1093, %v2545
        %2549 = vst.msk [vmem:[%s2547 + $0x8] sm:$0xff] %vm1093, %v2546
        %s2550 = scalar_lea.vmem [#allocation3], 48
        %v2551 = vld [vmem:[%s2550] sm:$0xff]
        %v2552 = vld [vmem:[%s2550 + $0x8] sm:$0xff]
        %v2553 = vmul.f32 %v2551, %v2532
        %v2554 = vmul.f32 %v2552, %v2533
        %s2555 = scalar_lea.vmem [#allocation5], 48
        %v2556 = vld [vmem:[%s2555] sm:$0xff]
        %v2557 = vld [vmem:[%s2555 + $0x8] sm:$0xff]
        %v2558 = vadd.f32 %v2553, %v2556
        %v2559 = vadd.f32 %v2554, %v2557
        %s2560 = scalar_lea.vmem [#allocation7], 48
        %2561 = vst.msk [vmem:[%s2560] sm:$0xff] %vm1093, %v2558
        %2562 = vst.msk [vmem:[%s2560 + $0x8] sm:$0xff] %vm1093, %v2559
        %s2563 = scalar_lea.vmem [#allocation2], 64
        %v2564 = vld [vmem:[%s2563] sm:$0xff]
        %v2565 = vld [vmem:[%s2563 + $0x8] sm:$0xff]
        %v2566 = vmul.f32 %v2564, %v2545
        %v2567 = vmul.f32 %v2565, %v2546
        %s2568 = scalar_lea.vmem [#allocation4], 64
        %v2569 = vld [vmem:[%s2568] sm:$0xff]
        %v2570 = vld [vmem:[%s2568 + $0x8] sm:$0xff]
        %v2571 = vadd.f32 %v2566, %v2569
        %v2572 = vadd.f32 %v2567, %v2570
        %s2573 = scalar_lea.vmem [#allocation6], 64
        %2574 = vst.msk [vmem:[%s2573] sm:$0xff] %vm1093, %v2571
        %2575 = vst.msk [vmem:[%s2573 + $0x8] sm:$0xff] %vm1093, %v2572
        %s2576 = scalar_lea.vmem [#allocation3], 64
        %v2577 = vld [vmem:[%s2576] sm:$0xff]
        %v2578 = vld [vmem:[%s2576 + $0x8] sm:$0xff]
        %v2579 = vmul.f32 %v2577, %v2558
        %v2580 = vmul.f32 %v2578, %v2559
        %s2581 = scalar_lea.vmem [#allocation5], 64
        %v2582 = vld [vmem:[%s2581] sm:$0xff]
        %v2583 = vld [vmem:[%s2581 + $0x8] sm:$0xff]
        %v2584 = vadd.f32 %v2579, %v2582
        %v2585 = vadd.f32 %v2580, %v2583
        %s2586 = scalar_lea.vmem [#allocation7], 64
        %2587 = vst.msk [vmem:[%s2586] sm:$0xff] %vm1093, %v2584
        %2588 = vst.msk [vmem:[%s2586 + $0x8] sm:$0xff] %vm1093, %v2585
        %s2589 = scalar_lea.vmem [#allocation2], 80
        %v2590 = vld [vmem:[%s2589] sm:$0xff]
        %v2591 = vld [vmem:[%s2589 + $0x8] sm:$0xff]
        %v2592 = vmul.f32 %v2590, %v2571
        %v2593 = vmul.f32 %v2591, %v2572
        %s2594 = scalar_lea.vmem [#allocation4], 80
        %v2595 = vld [vmem:[%s2594] sm:$0xff]
        %v2596 = vld [vmem:[%s2594 + $0x8] sm:$0xff]
        %v2597 = vadd.f32 %v2592, %v2595
        %v2598 = vadd.f32 %v2593, %v2596
        %s2599 = scalar_lea.vmem [#allocation6], 80
        %2600 = vst.msk [vmem:[%s2599] sm:$0xff] %vm1093, %v2597
        %2601 = vst.msk [vmem:[%s2599 + $0x8] sm:$0xff] %vm1093, %v2598
        %s2602 = scalar_lea.vmem [#allocation3], 80
        %v2603 = vld [vmem:[%s2602] sm:$0xff]
        %v2604 = vld [vmem:[%s2602 + $0x8] sm:$0xff]
        %v2605 = vmul.f32 %v2603, %v2584
        %v2606 = vmul.f32 %v2604, %v2585
        %s2607 = scalar_lea.vmem [#allocation5], 80
        %v2608 = vld [vmem:[%s2607] sm:$0xff]
        %v2609 = vld [vmem:[%s2607 + $0x8] sm:$0xff]
        %v2610 = vadd.f32 %v2605, %v2608
        %v2611 = vadd.f32 %v2606, %v2609
        %s2612 = scalar_lea.vmem [#allocation7], 80
        %2613 = vst.msk [vmem:[%s2612] sm:$0xff] %vm1093, %v2610
        %2614 = vst.msk [vmem:[%s2612 + $0x8] sm:$0xff] %vm1093, %v2611
        %s2615 = scalar_lea.vmem [#allocation2], 96
        %v2616 = vld [vmem:[%s2615] sm:$0xff]
        %v2617 = vld [vmem:[%s2615 + $0x8] sm:$0xff]
        %v2618 = vmul.f32 %v2616, %v2597
        %v2619 = vmul.f32 %v2617, %v2598
        %s2620 = scalar_lea.vmem [#allocation4], 96
        %v2621 = vld [vmem:[%s2620] sm:$0xff]
        %v2622 = vld [vmem:[%s2620 + $0x8] sm:$0xff]
        %v2623 = vadd.f32 %v2618, %v2621
        %v2624 = vadd.f32 %v2619, %v2622
        %s2625 = scalar_lea.vmem [#allocation6], 96
        %2626 = vst.msk [vmem:[%s2625] sm:$0xff] %vm1093, %v2623
        %2627 = vst.msk [vmem:[%s2625 + $0x8] sm:$0xff] %vm1093, %v2624
        %s2628 = scalar_lea.vmem [#allocation3], 96
        %v2629 = vld [vmem:[%s2628] sm:$0xff]
        %v2630 = vld [vmem:[%s2628 + $0x8] sm:$0xff]
        %v2631 = vmul.f32 %v2629, %v2610
        %v2632 = vmul.f32 %v2630, %v2611
        %s2633 = scalar_lea.vmem [#allocation5], 96
        %v2634 = vld [vmem:[%s2633] sm:$0xff]
        %v2635 = vld [vmem:[%s2633 + $0x8] sm:$0xff]
        %v2636 = vadd.f32 %v2631, %v2634
        %v2637 = vadd.f32 %v2632, %v2635
        %s2638 = scalar_lea.vmem [#allocation7], 96
        %2639 = vst.msk [vmem:[%s2638] sm:$0xff] %vm1093, %v2636
        %2640 = vst.msk [vmem:[%s2638 + $0x8] sm:$0xff] %vm1093, %v2637
        %s2641 = scalar_lea.vmem [#allocation2], 112
        %v2642 = vld [vmem:[%s2641] sm:$0xff]
        %v2643 = vld [vmem:[%s2641 + $0x8] sm:$0xff]
        %v2644 = vmul.f32 %v2642, %v2623
        %v2645 = vmul.f32 %v2643, %v2624
        %s2646 = scalar_lea.vmem [#allocation4], 112
        %v2647 = vld [vmem:[%s2646] sm:$0xff]
        %v2648 = vld [vmem:[%s2646 + $0x8] sm:$0xff]
        %v2649 = vadd.f32 %v2644, %v2647
        %v2650 = vadd.f32 %v2645, %v2648
        %s2651 = scalar_lea.vmem [#allocation6], 112
        %2652 = vst.msk [vmem:[%s2651] sm:$0xff] %vm1093, %v2649
        %2653 = vst.msk [vmem:[%s2651 + $0x8] sm:$0xff] %vm1093, %v2650
        %s2654 = scalar_lea.vmem [#allocation3], 112
        %v2655 = vld [vmem:[%s2654] sm:$0xff]
        %v2656 = vld [vmem:[%s2654 + $0x8] sm:$0xff]
        %v2657 = vmul.f32 %v2655, %v2636
        %v2658 = vmul.f32 %v2656, %v2637
        %s2659 = scalar_lea.vmem [#allocation5], 112
        %v2660 = vld [vmem:[%s2659] sm:$0xff]
        %v2661 = vld [vmem:[%s2659 + $0x8] sm:$0xff]
        %v2662 = vadd.f32 %v2657, %v2660
        %v2663 = vadd.f32 %v2658, %v2661
        %s2664 = scalar_lea.vmem [#allocation7], 112
        %2665 = vst.msk [vmem:[%s2664] sm:$0xff] %vm1093, %v2662
        %2666 = vst.msk [vmem:[%s2664 + $0x8] sm:$0xff] %vm1093, %v2663
        %v2667 = vld [vmem:[#allocation6] sm:$0xff]
        %v2668 = vld [vmem:[#allocation6 + $0x8] sm:$0xff]
        %v2669 = vld [vmem:[#allocation6 + $0x10] sm:$0xff]
        %v2670 = vld [vmem:[#allocation6 + $0x18] sm:$0xff]
        %v2671 = vld [vmem:[#allocation6 + $0x20] sm:$0xff]
        %v2672 = vld [vmem:[#allocation6 + $0x28] sm:$0xff]
        %v2673 = vld [vmem:[#allocation6 + $0x30] sm:$0xff]
        %v2674 = vld [vmem:[#allocation6 + $0x38] sm:$0xff]
        %v2675 = vld [vmem:[#allocation6 + $0x40] sm:$0xff]
        %v2676 = vld [vmem:[#allocation6 + $0x48] sm:$0xff]
        %v2677 = vld [vmem:[#allocation6 + $0x50] sm:$0xff]
        %v2678 = vld [vmem:[#allocation6 + $0x58] sm:$0xff]
        %v2679 = vld [vmem:[#allocation6 + $0x60] sm:$0xff]
        %v2680 = vld [vmem:[#allocation6 + $0x68] sm:$0xff]
        %v2681 = vld [vmem:[#allocation6 + $0x70] sm:$0xff]
        %v2682 = vld [vmem:[#allocation6 + $0x78] sm:$0xff]
        %2683 = vrot.lane.b32.xlu0 %v770, 18
        %v2684 = vpop.permute.xlu0 %2683
        %2685 = vrot.lane.b32.xlu0 %v771, 18
        %v2686 = vpop.permute.xlu0 %2685
        %v2689 = vmul.f32 %v1467, %v2684
        %v2690 = vmul.f32 %v1467, %v2686
        %v2691 = vmul.f32 %v1471, %v2684
        %v2692 = vmul.f32 %v1471, %v2686
        %v2693 = vmul.f32 %v1475, %v2684
        %v2694 = vmul.f32 %v1475, %v2686
        %v2695 = vmul.f32 %v1479, %v2684
        %v2696 = vmul.f32 %v1479, %v2686
        %v2697 = vmul.f32 %v1483, %v2684
        %v2698 = vmul.f32 %v1483, %v2686
        %v2699 = vmul.f32 %v1487, %v2684
        %v2700 = vmul.f32 %v1487, %v2686
        %v2701 = vmul.f32 %v1491, %v2684
        %v2702 = vmul.f32 %v1491, %v2686
        %v2703 = vmul.f32 %v1495, %v2684
        %v2704 = vmul.f32 %v1495, %v2686
        %2721 = vrot.lane.b32.xlu0 %v2689, 110
        %v2722 = vpop.permute.xlu0 %2721
        %2723 = vrot.lane.b32.xlu0 %v2690, 110
        %v2724 = vpop.permute.xlu0 %2723
        %2725 = vrot.lane.b32.xlu0 %v2691, 110
        %v2726 = vpop.permute.xlu0 %2725
        %2727 = vrot.lane.b32.xlu0 %v2692, 110
        %v2728 = vpop.permute.xlu0 %2727
        %2729 = vrot.lane.b32.xlu0 %v2693, 110
        %v2730 = vpop.permute.xlu0 %2729
        %2731 = vrot.lane.b32.xlu0 %v2694, 110
        %v2732 = vpop.permute.xlu0 %2731
        %2733 = vrot.lane.b32.xlu0 %v2695, 110
        %v2734 = vpop.permute.xlu0 %2733
        %2735 = vrot.lane.b32.xlu0 %v2696, 110
        %v2736 = vpop.permute.xlu0 %2735
        %2737 = vrot.lane.b32.xlu0 %v2697, 110
        %v2738 = vpop.permute.xlu0 %2737
        %2739 = vrot.lane.b32.xlu0 %v2698, 110
        %v2740 = vpop.permute.xlu0 %2739
        %2741 = vrot.lane.b32.xlu0 %v2699, 110
        %v2742 = vpop.permute.xlu0 %2741
        %2743 = vrot.lane.b32.xlu0 %v2700, 110
        %v2744 = vpop.permute.xlu0 %2743
        %2745 = vrot.lane.b32.xlu0 %v2701, 110
        %v2746 = vpop.permute.xlu0 %2745
        %2747 = vrot.lane.b32.xlu0 %v2702, 110
        %v2748 = vpop.permute.xlu0 %2747
        %2749 = vrot.lane.b32.xlu0 %v2703, 110
        %v2750 = vpop.permute.xlu0 %2749
        %2751 = vrot.lane.b32.xlu0 %v2704, 110
        %v2752 = vpop.permute.xlu0 %2751
        %v2769 = vsel %vm1592, %v2722, 0.0
        %2770 = vadd.xlane.f32.xlu0 %v2769
        %v2771 = vpop.xlane.xlu0 %2770
        %v2772 = vsel %vm1592, %v2724, 0.0
        %2773 = vadd.xlane.f32.xlu0 %v2772
        %v2774 = vpop.xlane.xlu0 %2773
        %v2775 = vsel %vm1592, %v2726, 0.0
        %2776 = vadd.xlane.f32.xlu0 %v2775
        %v2777 = vpop.xlane.xlu0 %2776
        %v2778 = vsel %vm1592, %v2728, 0.0
        %2779 = vadd.xlane.f32.xlu0 %v2778
        %v2780 = vpop.xlane.xlu0 %2779
        %v2781 = vsel %vm1592, %v2730, 0.0
        %2782 = vadd.xlane.f32.xlu0 %v2781
        %v2783 = vpop.xlane.xlu0 %2782
        %v2784 = vsel %vm1592, %v2732, 0.0
        %2785 = vadd.xlane.f32.xlu0 %v2784
        %v2786 = vpop.xlane.xlu0 %2785
        %v2787 = vsel %vm1592, %v2734, 0.0
        %2788 = vadd.xlane.f32.xlu0 %v2787
        %v2789 = vpop.xlane.xlu0 %2788
        %v2790 = vsel %vm1592, %v2736, 0.0
        %2791 = vadd.xlane.f32.xlu0 %v2790
        %v2792 = vpop.xlane.xlu0 %2791
        %v2793 = vsel %vm1592, %v2738, 0.0
        %2794 = vadd.xlane.f32.xlu0 %v2793
        %v2795 = vpop.xlane.xlu0 %2794
        %v2796 = vsel %vm1592, %v2740, 0.0
        %2797 = vadd.xlane.f32.xlu0 %v2796
        %v2798 = vpop.xlane.xlu0 %2797
        %v2799 = vsel %vm1592, %v2742, 0.0
        %2800 = vadd.xlane.f32.xlu0 %v2799
        %v2801 = vpop.xlane.xlu0 %2800
        %v2802 = vsel %vm1592, %v2744, 0.0
        %2803 = vadd.xlane.f32.xlu0 %v2802
        %v2804 = vpop.xlane.xlu0 %2803
        %v2805 = vsel %vm1592, %v2746, 0.0
        %2806 = vadd.xlane.f32.xlu0 %v2805
        %v2807 = vpop.xlane.xlu0 %2806
        %v2808 = vsel %vm1592, %v2748, 0.0
        %2809 = vadd.xlane.f32.xlu0 %v2808
        %v2810 = vpop.xlane.xlu0 %2809
        %v2811 = vsel %vm1592, %v2750, 0.0
        %2812 = vadd.xlane.f32.xlu0 %v2811
        %v2813 = vpop.xlane.xlu0 %2812
        %v2814 = vsel %vm1592, %v2752, 0.0
        %2815 = vadd.xlane.f32.xlu0 %v2814
        %v2816 = vpop.xlane.xlu0 %2815
        %v2817 = vmul.f32 %v2771, %v2667
        %v2818 = vmul.f32 %v2774, %v2668
        %v2819 = vmul.f32 %v2777, %v2669
        %v2820 = vmul.f32 %v2780, %v2670
        %v2821 = vmul.f32 %v2783, %v2671
        %v2822 = vmul.f32 %v2786, %v2672
        %v2823 = vmul.f32 %v2789, %v2673
        %v2824 = vmul.f32 %v2792, %v2674
        %v2825 = vmul.f32 %v2795, %v2675
        %v2826 = vmul.f32 %v2798, %v2676
        %v2827 = vmul.f32 %v2801, %v2677
        %v2828 = vmul.f32 %v2804, %v2678
        %v2829 = vmul.f32 %v2807, %v2679
        %v2830 = vmul.f32 %v2810, %v2680
        %v2831 = vmul.f32 %v2813, %v2681
        %v2832 = vmul.f32 %v2816, %v2682
        %v2833 = vsel %vm1093, %v2817, 0.0
        %v2834 = vsel %vm1093, %v2818, 0.0
        %v2835 = vadd.f32 %v2833, %v2834
        %v2836 = vrot.slane %v2835, 4
        %v2837 = vadd.f32 %v2835, %v2836
        %v2838 = vrot.slane %v2837, 2
        %v2839 = vadd.f32 %v2837, %v2838
        %v2840 = vrot.slane %v2839, 1
        %v2841 = vadd.f32 %v2839, %v2840
        %v2842 = vsel %vm1093, %v2819, 0.0
        %v2843 = vsel %vm1093, %v2820, 0.0
        %v2844 = vadd.f32 %v2842, %v2843
        %v2845 = vrot.slane %v2844, 4
        %v2846 = vadd.f32 %v2844, %v2845
        %v2847 = vrot.slane %v2846, 2
        %v2848 = vadd.f32 %v2846, %v2847
        %v2849 = vrot.slane %v2848, 1
        %v2850 = vadd.f32 %v2848, %v2849
        %v2851 = vsel %vm1093, %v2821, 0.0
        %v2852 = vsel %vm1093, %v2822, 0.0
        %v2853 = vadd.f32 %v2851, %v2852
        %v2854 = vrot.slane %v2853, 4
        %v2855 = vadd.f32 %v2853, %v2854
        %v2856 = vrot.slane %v2855, 2
        %v2857 = vadd.f32 %v2855, %v2856
        %v2858 = vrot.slane %v2857, 1
        %v2859 = vadd.f32 %v2857, %v2858
        %v2860 = vsel %vm1093, %v2823, 0.0
        %v2861 = vsel %vm1093, %v2824, 0.0
        %v2862 = vadd.f32 %v2860, %v2861
        %v2863 = vrot.slane %v2862, 4
        %v2864 = vadd.f32 %v2862, %v2863
        %v2865 = vrot.slane %v2864, 2
        %v2866 = vadd.f32 %v2864, %v2865
        %v2867 = vrot.slane %v2866, 1
        %v2868 = vadd.f32 %v2866, %v2867
        %v2869 = vsel %vm1093, %v2825, 0.0
        %v2870 = vsel %vm1093, %v2826, 0.0
        %v2871 = vadd.f32 %v2869, %v2870
        %v2872 = vrot.slane %v2871, 4
        %v2873 = vadd.f32 %v2871, %v2872
        %v2874 = vrot.slane %v2873, 2
        %v2875 = vadd.f32 %v2873, %v2874
        %v2876 = vrot.slane %v2875, 1
        %v2877 = vadd.f32 %v2875, %v2876
        %v2878 = vsel %vm1093, %v2827, 0.0
        %v2879 = vsel %vm1093, %v2828, 0.0
        %v2880 = vadd.f32 %v2878, %v2879
        %v2881 = vrot.slane %v2880, 4
        %v2882 = vadd.f32 %v2880, %v2881
        %v2883 = vrot.slane %v2882, 2
        %v2884 = vadd.f32 %v2882, %v2883
        %v2885 = vrot.slane %v2884, 1
        %v2886 = vadd.f32 %v2884, %v2885
        %v2887 = vsel %vm1093, %v2829, 0.0
        %v2888 = vsel %vm1093, %v2830, 0.0
        %v2889 = vadd.f32 %v2887, %v2888
        %v2890 = vrot.slane %v2889, 4
        %v2891 = vadd.f32 %v2889, %v2890
        %v2892 = vrot.slane %v2891, 2
        %v2893 = vadd.f32 %v2891, %v2892
        %v2894 = vrot.slane %v2893, 1
        %v2895 = vadd.f32 %v2893, %v2894
        %v2896 = vsel %vm1093, %v2831, 0.0
        %v2897 = vsel %vm1093, %v2832, 0.0
        %v2898 = vadd.f32 %v2896, %v2897
        %v2899 = vrot.slane %v2898, 4
        %v2900 = vadd.f32 %v2898, %v2899
        %v2901 = vrot.slane %v2900, 2
        %v2902 = vadd.f32 %v2900, %v2901
        %v2903 = vrot.slane %v2902, 1
        %v2904 = vadd.f32 %v2902, %v2903
        %v2905 = vld [vmem:[%s14] sm:$0x1]
        %v2907 = vlaneseq
        %v2908 = vshrl.u32 %v2907, 7
        %v2909 = vsub.s32 0, %v2908
        %v2910 = vrot.slane %v2905, %v2909
        %v2912 = vmul.f32 %v2910, %v1059
        %v2914 = vrot.slane %v2912, 1
        %v2915 = vrot.slane %v2912, 2
        %v2916 = vrot.slane %v2912, 3
        %v2917 = vrot.slane %v2912, 4
        %v2918 = vrot.slane %v2912, 5
        %v2919 = vrot.slane %v2912, 6
        %v2920 = vrot.slane %v2912, 7
        %v2929 = vadd.f32 %v2841, %v2912
        %v2930 = vadd.f32 %v2850, %v2914
        %v2931 = vadd.f32 %v2859, %v2915
        %v2932 = vadd.f32 %v2868, %v2916
        %v2933 = vadd.f32 %v2877, %v2917
        %v2934 = vadd.f32 %v2886, %v2918
        %v2935 = vadd.f32 %v2895, %v2919
        %v2936 = vadd.f32 %v2904, %v2920
        %v2937 = vxor.u32 %v1003, 2147483648
        %v2938 = vmul.f32 %v2937, 1.442695
        %v2939 = vpow.pop %v2938
        %v2940 = vadd.f32 %v2939, 1.0
        %v2941 = vrcp.pop %v2940
        %v2942 = vmul.f32 1.0, %v2941
        %v2943 = vmul.f32 %v1003, %v2942
        %v2945 = vrot.slane %v2943, 1
        %v2946 = vrot.slane %v2943, 2
        %v2947 = vrot.slane %v2943, 3
        %v2948 = vrot.slane %v2943, 4
        %v2949 = vrot.slane %v2943, 5
        %v2950 = vrot.slane %v2943, 6
        %v2951 = vrot.slane %v2943, 7
        %2952 = vrot.lane.b32.xlu0 %v2943, 64
        %v2953 = vpop.permute.xlu0 %2952
        %2954 = vrot.lane.b32.xlu0 %v2945, 64
        %v2955 = vpop.permute.xlu0 %2954
        %2956 = vrot.lane.b32.xlu0 %v2946, 64
        %v2957 = vpop.permute.xlu0 %2956
        %2958 = vrot.lane.b32.xlu0 %v2947, 64
        %v2959 = vpop.permute.xlu0 %2958
        %2960 = vrot.lane.b32.xlu0 %v2948, 64
        %v2961 = vpop.permute.xlu0 %2960
        %2962 = vrot.lane.b32.xlu0 %v2949, 64
        %v2963 = vpop.permute.xlu0 %2962
        %2964 = vrot.lane.b32.xlu0 %v2950, 64
        %v2965 = vpop.permute.xlu0 %2964
        %2966 = vrot.lane.b32.xlu0 %v2951, 64
        %v2967 = vpop.permute.xlu0 %2966
        %v2976 = vmul.f32 %v2929, %v2953
        %v2977 = vmul.f32 %v2930, %v2955
        %v2978 = vmul.f32 %v2931, %v2957
        %v2979 = vmul.f32 %v2932, %v2959
        %v2980 = vmul.f32 %v2933, %v2961
        %v2981 = vmul.f32 %v2934, %v2963
        %v2982 = vmul.f32 %v2935, %v2965
        %v2983 = vmul.f32 %v2936, %v2967
        %v2984 = vld [vmem:[%s15] sm:$0xf]
        %v2985 = vld [vmem:[%s15 + $0x4] sm:$0xf]
        %v2986 = vld [vmem:[%s15 + $0x8] sm:$0xf]
        %v2987 = vld [vmem:[%s15 + $0xc] sm:$0xf]
        %v2988 = vld [vmem:[%s15 + $0x10] sm:$0xf]
        %v2989 = vld [vmem:[%s15 + $0x14] sm:$0xf]
        %v2990 = vld [vmem:[%s15 + $0x18] sm:$0xf]
        %v2991 = vld [vmem:[%s15 + $0x1c] sm:$0xf]
        %v2992 = vpack.c.bf16 %v2976, %v2976
        %v2993 = vpack.c.bf16 %v2977, %v2977
        %v2994 = vpack.c.bf16 %v2978, %v2978
        %v2995 = vpack.c.bf16 %v2979, %v2979
        %v2996 = vpack.c.bf16 %v2980, %v2980
        %v2997 = vpack.c.bf16 %v2981, %v2981
        %v2998 = vpack.c.bf16 %v2982, %v2982
        %v2999 = vpack.c.bf16 %v2983, %v2983
        %v3000 = vld [vmem:[#allocation7] sm:$0xff]
        %v3001 = vld [vmem:[#allocation7 + $0x8] sm:$0xff]
        %v3002 = vld [vmem:[#allocation7 + $0x10] sm:$0xff]
        %v3003 = vld [vmem:[#allocation7 + $0x18] sm:$0xff]
        %v3004 = vld [vmem:[#allocation7 + $0x20] sm:$0xff]
        %v3005 = vld [vmem:[#allocation7 + $0x28] sm:$0xff]
        %v3006 = vld [vmem:[#allocation7 + $0x30] sm:$0xff]
        %v3007 = vld [vmem:[#allocation7 + $0x38] sm:$0xff]
        %v3008 = vld [vmem:[#allocation7 + $0x40] sm:$0xff]
        %v3009 = vld [vmem:[#allocation7 + $0x48] sm:$0xff]
        %v3010 = vld [vmem:[#allocation7 + $0x50] sm:$0xff]
        %v3011 = vld [vmem:[#allocation7 + $0x58] sm:$0xff]
        %v3012 = vld [vmem:[#allocation7 + $0x60] sm:$0xff]
        %v3013 = vld [vmem:[#allocation7 + $0x68] sm:$0xff]
        %v3014 = vld [vmem:[#allocation7 + $0x70] sm:$0xff]
        %v3015 = vld [vmem:[#allocation7 + $0x78] sm:$0xff]
        %v3016 = vmul.f32 %v2228, %v2684
        %v3017 = vmul.f32 %v2228, %v2686
        %v3018 = vmul.f32 %v2232, %v2684
        %v3019 = vmul.f32 %v2232, %v2686
        %v3020 = vmul.f32 %v2236, %v2684
        %v3021 = vmul.f32 %v2236, %v2686
        %v3022 = vmul.f32 %v2240, %v2684
        %v3023 = vmul.f32 %v2240, %v2686
        %v3024 = vmul.f32 %v2244, %v2684
        %v3025 = vmul.f32 %v2244, %v2686
        %v3026 = vmul.f32 %v2248, %v2684
        %v3027 = vmul.f32 %v2248, %v2686
        %v3028 = vmul.f32 %v2252, %v2684
        %v3029 = vmul.f32 %v2252, %v2686
        %v3030 = vmul.f32 %v2256, %v2684
        %v3031 = vmul.f32 %v2256, %v2686
        %3048 = vrot.lane.b32.xlu0 %v3016, 110
        %v3049 = vpop.permute.xlu0 %3048
        %3050 = vrot.lane.b32.xlu0 %v3017, 110
        %v3051 = vpop.permute.xlu0 %3050
        %3052 = vrot.lane.b32.xlu0 %v3018, 110
        %v3053 = vpop.permute.xlu0 %3052
        %3054 = vrot.lane.b32.xlu0 %v3019, 110
        %v3055 = vpop.permute.xlu0 %3054
        %3056 = vrot.lane.b32.xlu0 %v3020, 110
        %v3057 = vpop.permute.xlu0 %3056
        %3058 = vrot.lane.b32.xlu0 %v3021, 110
        %v3059 = vpop.permute.xlu0 %3058
        %3060 = vrot.lane.b32.xlu0 %v3022, 110
        %v3061 = vpop.permute.xlu0 %3060
        %3062 = vrot.lane.b32.xlu0 %v3023, 110
        %v3063 = vpop.permute.xlu0 %3062
        %3064 = vrot.lane.b32.xlu0 %v3024, 110
        %v3065 = vpop.permute.xlu0 %3064
        %3066 = vrot.lane.b32.xlu0 %v3025, 110
        %v3067 = vpop.permute.xlu0 %3066
        %3068 = vrot.lane.b32.xlu0 %v3026, 110
        %v3069 = vpop.permute.xlu0 %3068
        %3070 = vrot.lane.b32.xlu0 %v3027, 110
        %v3071 = vpop.permute.xlu0 %3070
        %3072 = vrot.lane.b32.xlu0 %v3028, 110
        %v3073 = vpop.permute.xlu0 %3072
        %3074 = vrot.lane.b32.xlu0 %v3029, 110
        %v3075 = vpop.permute.xlu0 %3074
        %3076 = vrot.lane.b32.xlu0 %v3030, 110
        %v3077 = vpop.permute.xlu0 %3076
        %3078 = vrot.lane.b32.xlu0 %v3031, 110
        %v3079 = vpop.permute.xlu0 %3078
        %v3096 = vsel %vm1592, %v3049, 0.0
        %3097 = vadd.xlane.f32.xlu0 %v3096
        %v3098 = vpop.xlane.xlu0 %3097
        %v3099 = vsel %vm1592, %v3051, 0.0
        %3100 = vadd.xlane.f32.xlu0 %v3099
        %v3101 = vpop.xlane.xlu0 %3100
        %v3102 = vsel %vm1592, %v3053, 0.0
        %3103 = vadd.xlane.f32.xlu0 %v3102
        %v3104 = vpop.xlane.xlu0 %3103
        %v3105 = vsel %vm1592, %v3055, 0.0
        %3106 = vadd.xlane.f32.xlu0 %v3105
        %v3107 = vpop.xlane.xlu0 %3106
        %v3108 = vsel %vm1592, %v3057, 0.0
        %3109 = vadd.xlane.f32.xlu0 %v3108
        %v3110 = vpop.xlane.xlu0 %3109
        %v3111 = vsel %vm1592, %v3059, 0.0
        %3112 = vadd.xlane.f32.xlu0 %v3111
        %v3113 = vpop.xlane.xlu0 %3112
        %v3114 = vsel %vm1592, %v3061, 0.0
        %3115 = vadd.xlane.f32.xlu0 %v3114
        %v3116 = vpop.xlane.xlu0 %3115
        %v3117 = vsel %vm1592, %v3063, 0.0
        %3118 = vadd.xlane.f32.xlu0 %v3117
        %v3119 = vpop.xlane.xlu0 %3118
        %v3120 = vsel %vm1592, %v3065, 0.0
        %3121 = vadd.xlane.f32.xlu0 %v3120
        %v3122 = vpop.xlane.xlu0 %3121
        %v3123 = vsel %vm1592, %v3067, 0.0
        %3124 = vadd.xlane.f32.xlu0 %v3123
        %v3125 = vpop.xlane.xlu0 %3124
        %v3126 = vsel %vm1592, %v3069, 0.0
        %3127 = vadd.xlane.f32.xlu0 %v3126
        %v3128 = vpop.xlane.xlu0 %3127
        %v3129 = vsel %vm1592, %v3071, 0.0
        %3130 = vadd.xlane.f32.xlu0 %v3129
        %v3131 = vpop.xlane.xlu0 %3130
        %v3132 = vsel %vm1592, %v3073, 0.0
        %3133 = vadd.xlane.f32.xlu0 %v3132
        %v3134 = vpop.xlane.xlu0 %3133
        %v3135 = vsel %vm1592, %v3075, 0.0
        %3136 = vadd.xlane.f32.xlu0 %v3135
        %v3137 = vpop.xlane.xlu0 %3136
        %v3138 = vsel %vm1592, %v3077, 0.0
        %3139 = vadd.xlane.f32.xlu0 %v3138
        %v3140 = vpop.xlane.xlu0 %3139
        %v3141 = vsel %vm1592, %v3079, 0.0
        %3142 = vadd.xlane.f32.xlu0 %v3141
        %v3143 = vpop.xlane.xlu0 %3142
        %v3144 = vmul.f32 %v3098, %v3000
        %v3145 = vmul.f32 %v3101, %v3001
        %v3146 = vmul.f32 %v3104, %v3002
        %v3147 = vmul.f32 %v3107, %v3003
        %v3148 = vmul.f32 %v3110, %v3004
        %v3149 = vmul.f32 %v3113, %v3005
        %v3150 = vmul.f32 %v3116, %v3006
        %v3151 = vmul.f32 %v3119, %v3007
        %v3152 = vmul.f32 %v3122, %v3008
        %v3153 = vmul.f32 %v3125, %v3009
        %v3154 = vmul.f32 %v3128, %v3010
        %v3155 = vmul.f32 %v3131, %v3011
        %v3156 = vmul.f32 %v3134, %v3012
        %v3157 = vmul.f32 %v3137, %v3013
        %v3158 = vmul.f32 %v3140, %v3014
        %v3159 = vmul.f32 %v3143, %v3015
        %v3160 = vsel %vm1093, %v3144, 0.0
        %v3161 = vsel %vm1093, %v3145, 0.0
        %v3162 = vadd.f32 %v3160, %v3161
        %v3163 = vrot.slane %v3162, 4
        %v3164 = vadd.f32 %v3162, %v3163
        %v3165 = vrot.slane %v3164, 2
        %v3166 = vadd.f32 %v3164, %v3165
        %v3167 = vrot.slane %v3166, 1
        %v3168 = vadd.f32 %v3166, %v3167
        %v3169 = vsel %vm1093, %v3146, 0.0
        %v3170 = vsel %vm1093, %v3147, 0.0
        %v3171 = vadd.f32 %v3169, %v3170
        %v3172 = vrot.slane %v3171, 4
        %v3173 = vadd.f32 %v3171, %v3172
        %v3174 = vrot.slane %v3173, 2
        %v3175 = vadd.f32 %v3173, %v3174
        %v3176 = vrot.slane %v3175, 1
        %v3177 = vadd.f32 %v3175, %v3176
        %v3178 = vsel %vm1093, %v3148, 0.0
        %v3179 = vsel %vm1093, %v3149, 0.0
        %v3180 = vadd.f32 %v3178, %v3179
        %v3181 = vrot.slane %v3180, 4
        %v3182 = vadd.f32 %v3180, %v3181
        %v3183 = vrot.slane %v3182, 2
        %v3184 = vadd.f32 %v3182, %v3183
        %v3185 = vrot.slane %v3184, 1
        %v3186 = vadd.f32 %v3184, %v3185
        %v3187 = vsel %vm1093, %v3150, 0.0
        %v3188 = vsel %vm1093, %v3151, 0.0
        %v3189 = vadd.f32 %v3187, %v3188
        %v3190 = vrot.slane %v3189, 4
        %v3191 = vadd.f32 %v3189, %v3190
        %v3192 = vrot.slane %v3191, 2
        %v3193 = vadd.f32 %v3191, %v3192
        %v3194 = vrot.slane %v3193, 1
        %v3195 = vadd.f32 %v3193, %v3194
        %v3196 = vsel %vm1093, %v3152, 0.0
        %v3197 = vsel %vm1093, %v3153, 0.0
        %v3198 = vadd.f32 %v3196, %v3197
        %v3199 = vrot.slane %v3198, 4
        %v3200 = vadd.f32 %v3198, %v3199
        %v3201 = vrot.slane %v3200, 2
        %v3202 = vadd.f32 %v3200, %v3201
        %v3203 = vrot.slane %v3202, 1
        %v3204 = vadd.f32 %v3202, %v3203
        %v3205 = vsel %vm1093, %v3154, 0.0
        %v3206 = vsel %vm1093, %v3155, 0.0
        %v3207 = vadd.f32 %v3205, %v3206
        %v3208 = vrot.slane %v3207, 4
        %v3209 = vadd.f32 %v3207, %v3208
        %v3210 = vrot.slane %v3209, 2
        %v3211 = vadd.f32 %v3209, %v3210
        %v3212 = vrot.slane %v3211, 1
        %v3213 = vadd.f32 %v3211, %v3212
        %v3214 = vsel %vm1093, %v3156, 0.0
        %v3215 = vsel %vm1093, %v3157, 0.0
        %v3216 = vadd.f32 %v3214, %v3215
        %v3217 = vrot.slane %v3216, 4
        %v3218 = vadd.f32 %v3216, %v3217
        %v3219 = vrot.slane %v3218, 2
        %v3220 = vadd.f32 %v3218, %v3219
        %v3221 = vrot.slane %v3220, 1
        %v3222 = vadd.f32 %v3220, %v3221
        %v3223 = vsel %vm1093, %v3158, 0.0
        %v3224 = vsel %vm1093, %v3159, 0.0
        %v3225 = vadd.f32 %v3223, %v3224
        %v3226 = vrot.slane %v3225, 4
        %v3227 = vadd.f32 %v3225, %v3226
        %v3228 = vrot.slane %v3227, 2
        %v3229 = vadd.f32 %v3227, %v3228
        %v3230 = vrot.slane %v3229, 1
        %v3231 = vadd.f32 %v3229, %v3230
        %v3232 = vld [vmem:[%s23] sm:$0x1]
        %v3234 = vlaneseq
        %v3235 = vshrl.u32 %v3234, 7
        %v3236 = vsub.s32 0, %v3235
        %v3237 = vrot.slane %v3232, %v3236
        %v3239 = vmul.f32 %v3237, %v1822
        %v3241 = vrot.slane %v3239, 1
        %v3242 = vrot.slane %v3239, 2
        %v3243 = vrot.slane %v3239, 3
        %v3244 = vrot.slane %v3239, 4
        %v3245 = vrot.slane %v3239, 5
        %v3246 = vrot.slane %v3239, 6
        %v3247 = vrot.slane %v3239, 7
        %v3256 = vadd.f32 %v3168, %v3239
        %v3257 = vadd.f32 %v3177, %v3241
        %v3258 = vadd.f32 %v3186, %v3242
        %v3259 = vadd.f32 %v3195, %v3243
        %v3260 = vadd.f32 %v3204, %v3244
        %v3261 = vadd.f32 %v3213, %v3245
        %v3262 = vadd.f32 %v3222, %v3246
        %v3263 = vadd.f32 %v3231, %v3247
        %v3264 = vxor.u32 %v1769, 2147483648
        %v3265 = vmul.f32 %v3264, 1.442695
        %v3266 = vpow.pop %v3265
        %v3267 = vadd.f32 %v3266, 1.0
        %v3268 = vrcp.pop %v3267
        %v3269 = vmul.f32 1.0, %v3268
        %v3270 = vmul.f32 %v1769, %v3269
        %v3272 = vrot.slane %v3270, 1
        %v3273 = vrot.slane %v3270, 2
        %v3274 = vrot.slane %v3270, 3
        %v3275 = vrot.slane %v3270, 4
        %v3276 = vrot.slane %v3270, 5
        %v3277 = vrot.slane %v3270, 6
        %v3278 = vrot.slane %v3270, 7
        %3279 = vrot.lane.b32.xlu0 %v3270, 64
        %v3280 = vpop.permute.xlu0 %3279
        %3281 = vrot.lane.b32.xlu0 %v3272, 64
        %v3282 = vpop.permute.xlu0 %3281
        %3283 = vrot.lane.b32.xlu0 %v3273, 64
        %v3284 = vpop.permute.xlu0 %3283
        %3285 = vrot.lane.b32.xlu0 %v3274, 64
        %v3286 = vpop.permute.xlu0 %3285
        %3287 = vrot.lane.b32.xlu0 %v3275, 64
        %v3288 = vpop.permute.xlu0 %3287
        %3289 = vrot.lane.b32.xlu0 %v3276, 64
        %v3290 = vpop.permute.xlu0 %3289
        %3291 = vrot.lane.b32.xlu0 %v3277, 64
        %v3292 = vpop.permute.xlu0 %3291
        %3293 = vrot.lane.b32.xlu0 %v3278, 64
        %v3294 = vpop.permute.xlu0 %3293
        %v3303 = vmul.f32 %v3256, %v3280
        %v3304 = vmul.f32 %v3257, %v3282
        %v3305 = vmul.f32 %v3258, %v3284
        %v3306 = vmul.f32 %v3259, %v3286
        %v3307 = vmul.f32 %v3260, %v3288
        %v3308 = vmul.f32 %v3261, %v3290
        %v3309 = vmul.f32 %v3262, %v3292
        %v3310 = vmul.f32 %v3263, %v3294
        %v3311 = vld [vmem:[%s24] sm:$0xf]
        %v3312 = vld [vmem:[%s24 + $0x4] sm:$0xf]
        %v3313 = vld [vmem:[%s24 + $0x8] sm:$0xf]
        %v3314 = vld [vmem:[%s24 + $0xc] sm:$0xf]
        %v3315 = vld [vmem:[%s24 + $0x10] sm:$0xf]
        %v3316 = vld [vmem:[%s24 + $0x14] sm:$0xf]
        %v3317 = vld [vmem:[%s24 + $0x18] sm:$0xf]
        %v3318 = vld [vmem:[%s24 + $0x1c] sm:$0xf]
        %v3319 = vpack.c.bf16 %v3303, %v3303
        %v3320 = vpack.c.bf16 %v3304, %v3304
        %v3321 = vpack.c.bf16 %v3305, %v3305
        %v3322 = vpack.c.bf16 %v3306, %v3306
        %v3323 = vpack.c.bf16 %v3307, %v3307
        %v3324 = vpack.c.bf16 %v3308, %v3308
        %v3325 = vpack.c.bf16 %v3309, %v3309
        %v3326 = vpack.c.bf16 %v3310, %v3310
        %v3335 = vunpack.c.l.b16 %v3319
        %v3336 = vunpack.c.l.b16 %v3320
        %v3337 = vunpack.c.l.b16 %v3321
        %v3338 = vunpack.c.l.b16 %v3322
        %v3339 = vunpack.c.l.b16 %v3323
        %v3340 = vunpack.c.l.b16 %v3324
        %v3341 = vunpack.c.l.b16 %v3325
        %v3342 = vunpack.c.l.b16 %v3326
        %v3343 = vrot.slane %v3336, 7
        %vm3344 = vcmask 1041409
        %v3345 = vsel %vm3344, %v3343, %v3335
        %v3346 = vrot.slane %v3337, 6
        %vm3347 = vcmask 1042434
        %v3348 = vsel %vm3347, %v3346, %v3345
        %v3349 = vrot.slane %v3338, 5
        %vm3350 = vcmask 1043459
        %v3351 = vsel %vm3350, %v3349, %v3348
        %v3352 = vrot.slane %v3339, 4
        %vm3353 = vcmask 1044484
        %v3354 = vsel %vm3353, %v3352, %v3351
        %v3355 = vrot.slane %v3340, 3
        %vm3356 = vcmask 1045509
        %v3357 = vsel %vm3356, %v3355, %v3354
        %v3358 = vrot.slane %v3341, 2
        %vm3359 = vcmask 1046534
        %v3360 = vsel %vm3359, %v3358, %v3357
        %v3361 = vrot.slane %v3342, 1
        %vm3362 = vcmask 1047559
        %v3363 = vsel %vm3362, %v3361, %v3360
        %v3364 = vpack.c.b16 %v3363, %v3363
        %v3373 = vunpack.c.l.b16 %v3311
        %v3374 = vunpack.c.l.b16 %v3312
        %v3375 = vunpack.c.l.b16 %v3313
        %v3376 = vunpack.c.l.b16 %v3314
        %v3377 = vunpack.c.l.b16 %v3315
        %v3378 = vunpack.c.l.b16 %v3316
        %v3379 = vunpack.c.l.b16 %v3317
        %v3380 = vunpack.c.l.b16 %v3318
        %v3381 = vpack.c.b16 %v3374, %v3373
        %v3382 = vpack.c.b16 %v3376, %v3375
        %v3383 = vpack.c.b16 %v3378, %v3377
        %v3384 = vpack.c.b16 %v3380, %v3379
        %v3390 = vsel %vm1093, %v3364, 0
        %3392 = vmatprep.subr.bf16.mxu0 0
        %3393 = vmatpush1.bf16.msra.mxu0 0
        %3394 = vmatprep.subr.bf16.mxu0 0
        %3395 = vmatpush1.bf16.msra.mxu0 0
        %3396 = vmatprep.subr.bf16.mxu0 0
        %3397 = vmatpush1.bf16.msra.mxu0 0
        %3398 = vmatprep.subr.bf16.mxu0 0
        %3399 = vmatpush1.bf16.msra.mxu0 0
        %3400 = vmatprep.subr.bf16.mxu0 0
        %3401 = vmatpush1.bf16.msra.mxu0 %v3384
        %3402 = vmatprep.subr.bf16.mxu0 0
        %3403 = vmatpush1.bf16.msra.mxu0 %v3383
        %3404 = vmatprep.subr.bf16.mxu0 0
        %3405 = vmatpush1.bf16.msra.mxu0 %v3382
        %3406 = vmatprep.subr.bf16.mxu0 0
        %3407 = vmatpush1.bf16.msra.mxu0 %v3381
        %3408 = vmatprep.subr.bf16.mxu0 0
        %3409 = vmatpush2.bf16.msra.mxu0 0
        %3410 = vmatprep.subr.bf16.mxu0 0
        %3411 = vmatpush2.bf16.msra.mxu0 0
        %3412 = vmatprep.subr.bf16.mxu0 0
        %3413 = vmatpush2.bf16.msra.mxu0 0
        %3414 = vmatprep.subr.bf16.mxu0 0
        %3415 = vmatpush2.bf16.msra.mxu0 0
        %3416 = vmatprep.subr.bf16.mxu0 0
        %3417 = vmatpush2.bf16.msra.mxu0 0
        %3418 = vmatprep.subr.bf16.mxu0 0
        %3419 = vmatpush2.bf16.msra.mxu0 0
        %3420 = vmatprep.subr.bf16.mxu0 0
        %3421 = vmatpush2.bf16.msra.mxu0 0
        %3422 = vmatprep.subr.bf16.mxu0 0
        %3423 = vmatpush2.bf16.msra.mxu0 0
        %3424 = vmatprep.mubr.bf16.mxu0 0
        %3425 = vmatmul.mubr.bf16.gmra.mxu0 %v3390
        %v3426 = vpop.f32.mrf.mxu0
        %v3427 = vadd.f32 0.0, %v3426
        %v3428 = vpop.f32.mrf.mxu0
        %v3429 = vpop.f32.mrf.mxu0
        %v3430 = vpop.f32.mrf.mxu0
        %3431 = vdwg.mxu0
        %v3440 = vunpack.c.l.b16 %v2992
        %v3441 = vunpack.c.l.b16 %v2993
        %v3442 = vunpack.c.l.b16 %v2994
        %v3443 = vunpack.c.l.b16 %v2995
        %v3444 = vunpack.c.l.b16 %v2996
        %v3445 = vunpack.c.l.b16 %v2997
        %v3446 = vunpack.c.l.b16 %v2998
        %v3447 = vunpack.c.l.b16 %v2999
        %v3448 = vrot.slane %v3441, 7
        %v3449 = vsel %vm3344, %v3448, %v3440
        %v3450 = vrot.slane %v3442, 6
        %v3451 = vsel %vm3347, %v3450, %v3449
        %v3452 = vrot.slane %v3443, 5
        %v3453 = vsel %vm3350, %v3452, %v3451
        %v3454 = vrot.slane %v3444, 4
        %v3455 = vsel %vm3353, %v3454, %v3453
        %v3456 = vrot.slane %v3445, 3
        %v3457 = vsel %vm3356, %v3456, %v3455
        %v3458 = vrot.slane %v3446, 2
        %v3459 = vsel %vm3359, %v3458, %v3457
        %v3460 = vrot.slane %v3447, 1
        %v3461 = vsel %vm3362, %v3460, %v3459
        %v3462 = vpack.c.b16 %v3461, %v3461
        %v3471 = vunpack.c.l.b16 %v2984
        %v3472 = vunpack.c.l.b16 %v2985
        %v3473 = vunpack.c.l.b16 %v2986
        %v3474 = vunpack.c.l.b16 %v2987
        %v3475 = vunpack.c.l.b16 %v2988
        %v3476 = vunpack.c.l.b16 %v2989
        %v3477 = vunpack.c.l.b16 %v2990
        %v3478 = vunpack.c.l.b16 %v2991
        %v3479 = vpack.c.b16 %v3472, %v3471
        %v3480 = vpack.c.b16 %v3474, %v3473
        %v3481 = vpack.c.b16 %v3476, %v3475
        %v3482 = vpack.c.b16 %v3478, %v3477
        %v3488 = vsel %vm1093, %v3462, 0
        %3490 = vmatprep.subr.bf16.mxu0 0
        %3491 = vmatpush1.bf16.msra.mxu0 0
        %3492 = vmatprep.subr.bf16.mxu0 0
        %3493 = vmatpush1.bf16.msra.mxu0 0
        %3494 = vmatprep.subr.bf16.mxu0 0
        %3495 = vmatpush1.bf16.msra.mxu0 0
        %3496 = vmatprep.subr.bf16.mxu0 0
        %3497 = vmatpush1.bf16.msra.mxu0 0
        %3498 = vmatprep.subr.bf16.mxu0 0
        %3499 = vmatpush1.bf16.msra.mxu0 %v3482
        %3500 = vmatprep.subr.bf16.mxu0 0
        %3501 = vmatpush1.bf16.msra.mxu0 %v3481
        %3502 = vmatprep.subr.bf16.mxu0 0
        %3503 = vmatpush1.bf16.msra.mxu0 %v3480
        %3504 = vmatprep.subr.bf16.mxu0 0
        %3505 = vmatpush1.bf16.msra.mxu0 %v3479
        %3506 = vmatprep.subr.bf16.mxu0 0
        %3507 = vmatpush2.bf16.msra.mxu0 0
        %3508 = vmatprep.subr.bf16.mxu0 0
        %3509 = vmatpush2.bf16.msra.mxu0 0
        %3510 = vmatprep.subr.bf16.mxu0 0
        %3511 = vmatpush2.bf16.msra.mxu0 0
        %3512 = vmatprep.subr.bf16.mxu0 0
        %3513 = vmatpush2.bf16.msra.mxu0 0
        %3514 = vmatprep.subr.bf16.mxu0 0
        %3515 = vmatpush2.bf16.msra.mxu0 0
        %3516 = vmatprep.subr.bf16.mxu0 0
        %3517 = vmatpush2.bf16.msra.mxu0 0
        %3518 = vmatprep.subr.bf16.mxu0 0
        %3519 = vmatpush2.bf16.msra.mxu0 0
        %3520 = vmatprep.subr.bf16.mxu0 0
        %3521 = vmatpush2.bf16.msra.mxu0 0
        %3522 = vmatprep.mubr.bf16.mxu0 0
        %3523 = vmatmul.mubr.bf16.gmra.mxu0 %v3488
        %v3524 = vpop.f32.mrf.mxu0
        %v3525 = vadd.f32 %v3427, %v3524
        %v3526 = vpop.f32.mrf.mxu0
        %v3527 = vpop.f32.mrf.mxu0
        %v3528 = vpop.f32.mrf.mxu0
        %3529 = vdwg.mxu0
        %v3530 = vmul.f32 %v3525, %v944
        %v3531 = vadd.f32 %v3530, %v772
        %3532 = vst.msk [vmem:[%s755] sm:$0xff] %vm773, %v3531
        %s3533 = sand.u32 %s577, 1
        %s3534 = scalar_lea.sflag [#allocation9], %s3533
        %s3535 = sand.u32 %s577, 1
        %s3536 = smul.addr %s3535, 8
        %s3537 = scalar_lea.vmem [#allocation8], %s3536
        // Predicated region
        $region121: #{tpu_custom_call.1} parent=119 // pred_check
          %p3538 = pneg %p587
        $region122: #{tpu_custom_call.1} parent=119 // pred_check_branch
          %3540 = sbr.rel (%p3538) target = $region124
        $region123: #{tpu_custom_call.1} parent=119 // pred_region
          %s3542 = ssub.s32 128, 128
          %3543 = vsyncadd %s3534, %s3542
          %s3544 = smul.addr %s39, 128
          %s3545 = scalar_lea.hbm %s25, %s3544
          %s3547 = sshll.u32 %s3537, 4
          %s3548 = int_to_ptr.vmem [resolvable:$true] %s3547
          %3550 = dma.vmem_to_hbm [thread:$0]  %s3548, 128, %s3545, %s3534
        $region124: #{tpu_custom_call.1} parent=119 // pred_fallthru
          _
      $region120: #{tpu_custom_call.1} parent=5 // pred_fallthru
        _
      %p3551 = scmp.le.s32.totalorder 2, %s34
      // Predicated region
      $region125: #{tpu_custom_call.1} parent=5 // pred_check
        %p3552 = pneg %p3551
      $region126: #{tpu_custom_call.1} parent=5 // pred_check_branch
        %3554 = sbr.rel (%p3552) target = $region128
      $region127: #{tpu_custom_call.1} parent=5 // pred_region
        %s3555 = ssub.s32 %s34, 2
        // Predicated region
        $region129: #{tpu_custom_call.1} parent=127 // pred_check
          %p3556 = pneg %p593
        $region130: #{tpu_custom_call.1} parent=127 // pred_check_branch
          %3558 = sbr.rel (%p3556) target = $region132
        $region131: #{tpu_custom_call.1} parent=127 // pred_region
          %s3559 = sand.u32 %s578, 1
          %s3560 = scalar_lea.sflag [#allocation9], %s3559
          %s3561 = sand.u32 %s578, 1
          %s3562 = smul.addr %s3561, 8
          %s3563 = scalar_lea.vmem [#allocation8], %s3562
          %3564 = dma.done %s3560, 128
        $region132: #{tpu_custom_call.1} parent=127 // pred_fallthru
          _
      $region128: #{tpu_custom_call.1} parent=5 // pred_fallthru
        _
    $region6: #{tpu_custom_call.1} parent=1 // loop_footer
      %s38 = sadd.s32 1, %s34
    $region7: #{tpu_custom_call.1} parent=1 // loop_footer_branch
      %33 = sbr.rel target = $region3
    $region8: #{tpu_custom_call.1} parent=1 // loop_exit
      _
    %3565 = vsyncpa [#allocation9], 1
    %s3566 = scalar_lea.sflag [#allocation9], 1
    %3567 = vsyncpa %s3566, 1

</llo_original>
